<compile_context>
chip_gen: v6e
topology: v6e:2x2x1
jax: 0.10.0
libtpu: 0.0.40
codegen_flags: <defaults>
</compile_context>

<pallas_src>
import functools

import jax
import jax.numpy as jnp
from jax.experimental import pallas as pl
from jax.experimental.pallas import tpu as pltpu


# ----------------------------- small BERT config -----------------------------
VOCAB_SIZE = 100
MAX_POS = 16
TYPE_VOCAB = 2
HIDDEN = 64
NUM_HEADS = 4
INTERMEDIATE = 128
NUM_LAYERS = 2
LN_EPS = 1e-12
PAD_ID = 0

SMALL_ROWS = 8                 # bqkv | bo | ln1_g | ln1_b | b1 | b2 | ln2_g | ln2_b
SMALL_WIDTH = 3 * HIDDEN       # 192 >= max(3H, INTERMEDIATE)


# --------------------------------- helpers -----------------------------------
def _layer_norm(x, gamma, beta, eps=LN_EPS):
    mean = jnp.mean(x, axis=-1, keepdims=True)
    var = jnp.mean((x - mean) ** 2, axis=-1, keepdims=True)
    return (x - mean) * jax.lax.rsqrt(var + eps) * gamma + beta


def _gelu(x):
    # TODO(synk): HF BERT uses erf-based GELU; tanh approximation differs ~1e-3.
    return 0.5 * x * (1.0 + jnp.tanh(0.7978845608028654 * (x + 0.044715 * x * x * x)))


# --------------------------------- fused kernel ------------------------------
def bert_encoder_kernel(emb_ref, mask_ref, embln_ref,
                        wqkv_ref, wo_ref, w1_ref, w2_ref, sp_ref,
                        out_ref, *, num_heads):
    S, H = out_ref.shape                 # one batch element's rows
    I = w1_ref.shape[-1]
    L = wqkv_ref.shape[0]
    dh = H // num_heads
    bf16 = jnp.bfloat16

    m = mask_ref[0]                                            # [1, S] additive key mask
    # embedding LayerNorm prologue (runs once per row block)
    x = _layer_norm(emb_ref[...], embln_ref[0:1, :], embln_ref[1:2, :])   # [S, H] f32

    for l in range(L):                                         # statically unrolled layers
        sp = sp_ref[l]                                         # [8, 192] coalesced params
        bqkv = sp[0:1, :3 * H]
        bo   = sp[1:2, :H]
        ln1g = sp[2:3, :H]
        ln1b = sp[3:4, :H]
        b1   = sp[4:5, :I]
        b2   = sp[5:6, :H]
        ln2g = sp[6:7, :H]
        ln2b = sp[7:8, :H]

        # fused QKV projection (bf16 MXU inputs / f32 acc); 1/sqrt(dh) is
        # pre-folded into the Q columns + q-bias at parameter-init time.
        qkv = jnp.dot(x.astype(bf16), wqkv_ref[l],
                      preferred_element_type=jnp.float32) + bqkv          # [S, 3H]

        # attention: per-head dots; Wo decomposed per head -> no concats,
        # no [S, H] ctx materialization, straight MXU accumulation in f32.
        attn = jnp.zeros((S, H), jnp.float32)
        for h in range(num_heads):
            c0 = h * dh
            q_h = qkv[:, c0:c0 + dh].astype(bf16)                         # [S, dh]
            k_h = qkv[:, H + c0:H + c0 + dh].astype(bf16)                 # [S, dh]
            v_h = qkv[:, 2 * H + c0:2 * H + c0 + dh].astype(bf16)         # [S, dh]

            s = jax.lax.dot_general(q_h, k_h, (((1,), (1,)), ((), ())),
                                    preferred_element_type=jnp.float32)   # [S, S]
            s = s + m
            s = s - jnp.max(s, axis=-1, keepdims=True)
            p = jnp.exp(s)
            p = p * pl.reciprocal(jnp.sum(p, axis=-1, keepdims=True), approx=False)

            ctx_h = jnp.dot(p.astype(bf16), v_h,
                            preferred_element_type=jnp.float32)           # [S, dh]
            attn = attn + jnp.dot(ctx_h.astype(bf16),
                                  wo_ref[l, c0:c0 + dh, :],
                                  preferred_element_type=jnp.float32)     # [S, H]

        x1 = _layer_norm(x + attn + bo, ln1g, ln1b)

        hid = _gelu(jnp.dot(x1.astype(bf16), w1_ref[l],
                            preferred_element_type=jnp.float32) + b1)     # [S, I]
        ffn = jnp.dot(hid.astype(bf16), w2_ref[l],
                      preferred_element_type=jnp.float32) + b2            # [S, H]
        x = _layer_norm(x1 + ffn, ln2g, ln2b)

    out_ref[...] = x


# --------------------------------- wrapper ------------------------------------
def bert_encoder_forward(params, token_ids, attn_mask):
    """Equivalent of BertEncoder.forward after tokenization.

    Returns (cont_reps [B, S, H], token_ids [B, S]).
    """
    B, S = token_ids.shape
    H, I, L = HIDDEN, INTERMEDIATE, NUM_LAYERS

    # embeddings (gather is glue; everything downstream is in-kernel)
    word = jnp.take(params['word_emb'], token_ids, axis=0)                 # [B,S,H]
    pos = params['pos_emb'][:S][None, :, :]                                # [1,S,H]
    typ = params['type_emb'][0][None, None, :]                             # segment 0 only
    emb = (word + pos + typ).reshape(B * S, H).astype(jnp.float32)         # [B*S,H]

    # additive attention mask, HF-style: (1 - mask) * -10000, masks keys only
    add_mask = ((1.0 - attn_mask.astype(jnp.float32)) * -10000.0)[:, None, :]   # [B,1,S]

    out = pl.pallas_call(
        functools.partial(bert_encoder_kernel, num_heads=NUM_HEADS),
        out_shape=jax.ShapeDtypeStruct((B * S, H), jnp.float32),
        grid=(B,),                                   # parallel over batch (2 TCs on v7x)
        in_specs=[
            pl.BlockSpec((S, H), lambda b: (b, 0)),                        # emb rows of batch b
            pl.BlockSpec((1, 1, S), lambda b: (b, 0, 0)),                  # additive mask
            pl.BlockSpec((8, H), lambda b: (0, 0)),                        # emb LN gamma/beta
            pl.BlockSpec((L, H, 3 * H), lambda b: (0, 0, 0)),              # Wqkv (bf16)
            pl.BlockSpec((L, H, H), lambda b: (0, 0, 0)),                  # Wo   (bf16)
            pl.BlockSpec((L, H, I), lambda b: (0, 0, 0)),                  # W1   (bf16)
            pl.BlockSpec((L, I, H), lambda b: (0, 0, 0)),                  # W2   (bf16)
            pl.BlockSpec((L, SMALL_ROWS, SMALL_WIDTH), lambda b: (0, 0, 0)),  # small f32 params
        ],
        out_specs=pl.BlockSpec((S, H), lambda b: (b, 0)),
        compiler_params=pltpu.CompilerParams(
            dimension_semantics=("parallel",)),
    )(emb, add_mask, params['embln'],
      params['wqkv'], params['wo'], params['w1'], params['w2'], params['smallp'])

    return out.reshape(B, S, H), token_ids


# --------------------------- pure-JAX reference (same dtype policy) -----------
def bert_encoder_reference(params, token_ids, attn_mask):
    B, S = token_ids.shape
    H, I, L, NH = HIDDEN, INTERMEDIATE, NUM_LAYERS, NUM_HEADS
    dh = H // NH
    bf16 = jnp.bfloat16

    word = jnp.take(params['word_emb'], token_ids, axis=0)
    pos = params['pos_emb'][:S][None, :, :]
    typ = params['type_emb'][0][None, None, :]
    emb = (word + pos + typ).astype(jnp.float32)                           # [B,S,H]
    x = _layer_norm(emb, params['embln'][0], params['embln'][1])

    add_mask = ((1.0 - attn_mask.astype(jnp.float32)) * -10000.0)[:, None, None, :]

    for l in range(L):
        sp = params['smallp'][l]
        bqkv = sp[0, :3 * H]; bo = sp[1, :H]
        ln1g = sp[2, :H]; ln1b = sp[3, :H]
        b1 = sp[4, :I]; b2 = sp[5, :H]
        ln2g = sp[6, :H]; ln2b = sp[7, :H]

        qkv = jnp.einsum('bsh,hk->bsk', x.astype(bf16), params['wqkv'][l],
                         preferred_element_type=jnp.float32) + bqkv
        q = qkv[..., :H].reshape(B, S, NH, dh).transpose(0, 2, 1, 3)
        k = qkv[..., H:2 * H].reshape(B, S, NH, dh).transpose(0, 2, 1, 3)
        v = qkv[..., 2 * H:].reshape(B, S, NH, dh).transpose(0, 2, 1, 3)
        s = jnp.einsum('bhqd,bhkd->bhqk', q.astype(bf16), k.astype(bf16),
                       preferred_element_type=jnp.float32) + add_mask
        p = jax.nn.softmax(s, axis=-1)
        ctx = jnp.einsum('bhqk,bhkd->bhqd', p.astype(bf16), v.astype(bf16),
                         preferred_element_type=jnp.float32)
        ctx = ctx.transpose(0, 2, 1, 3).reshape(B, S, H)
        attn = jnp.einsum('bsh,hk->bsk', ctx.astype(bf16), params['wo'][l],
                          preferred_element_type=jnp.float32) + bo
        x1 = _layer_norm(x + attn, ln1g, ln1b)
        hid = _gelu(jnp.einsum('bsh,hi->bsi', x1.astype(bf16), params['w1'][l],
                               preferred_element_type=jnp.float32) + b1)
        ffn = jnp.einsum('bsi,ih->bsh', hid.astype(bf16), params['w2'][l],
                         preferred_element_type=jnp.float32) + b2
        x = _layer_norm(x1 + ffn, ln2g, ln2b)
    return x


# --------------------------- deterministic parameter init --------------------
def init_params(key):
    L, H, I, NH = NUM_LAYERS, HIDDEN, INTERMEDIATE, NUM_HEADS
    dh = H // NH
    inv_sqrt_dh = 1.0 / (dh ** 0.5)

    def nrm(k, shape, scale=0.02):
        return scale * jax.random.normal(k, shape, dtype=jnp.float32)

    keys = iter(jax.random.split(key, 16))
    params = {
        'word_emb': nrm(next(keys), (VOCAB_SIZE, H)),
        'pos_emb':  nrm(next(keys), (MAX_POS, H)),
        'type_emb': nrm(next(keys), (TYPE_VOCAB, H)),
    }
    embln = jnp.zeros((8, H), jnp.float32)
    embln = embln.at[0].set(1.0)                       # row 0 = gamma, row 1 = beta
    params['embln'] = embln

    # 1/sqrt(dh) folded into the Q columns (and q-bias) at init time.
    wq = nrm(next(keys), (L, H, H)) * inv_sqrt_dh
    wk = nrm(next(keys), (L, H, H))
    wv = nrm(next(keys), (L, H, H))
    params['wqkv'] = jnp.concatenate([wq, wk, wv], axis=-1).astype(jnp.bfloat16)
    params['wo'] = nrm(next(keys), (L, H, H)).astype(jnp.bfloat16)
    params['w1'] = nrm(next(keys), (L, H, I)).astype(jnp.bfloat16)
    params['w2'] = nrm(next(keys), (L, I, H)).astype(jnp.bfloat16)

    # Coalesced tiny f32 per-layer operands: one [L, 8, 192] block.
    # rows: bqkv | bo | ln1_g | ln1_b | b1 | b2 | ln2_g | ln2_b
    bq = nrm(next(keys), (L, H)) * inv_sqrt_dh
    bk = nrm(next(keys), (L, H))
    bv = nrm(next(keys), (L, H))
    smallp = jnp.zeros((L, SMALL_ROWS, SMALL_WIDTH), jnp.float32)
    smallp = smallp.at[:, 0, :3 * H].set(jnp.concatenate([bq, bk, bv], axis=-1))
    smallp = smallp.at[:, 1, :H].set(nrm(next(keys), (L, H)))      # bo
    smallp = smallp.at[:, 2, :H].set(1.0)                          # ln1 gamma
    # row 3: ln1 beta = 0
    smallp = smallp.at[:, 4, :I].set(nrm(next(keys), (L, I)))      # b1
    smallp = smallp.at[:, 5, :H].set(nrm(next(keys), (L, H)))      # b2
    smallp = smallp.at[:, 6, :H].set(1.0)                          # ln2 gamma
    # row 7: ln2 beta = 0
    params['smallp'] = smallp
    return params


# ------------------------------------ main ------------------------------------
if __name__ == "__main__":
    # TODO(synk): BertTokenizer (string -> ids) has no Pallas equivalent; we
    # construct deterministic token ids directly (CLS=1, SEP=2, PAD=0).
    B, S = 2, 8
    key = jax.random.PRNGKey(0)
    pkey, tkey = jax.random.split(key)
    params = init_params(pkey)

    body = jax.random.randint(tkey, (B, S), 3, VOCAB_SIZE, dtype=jnp.int32)
    token_ids = body.at[:, 0].set(1)                 # [CLS]
    token_ids = token_ids.at[0, S - 1].set(2)        # [SEP] for sentence 0 (full length)
    token_ids = token_ids.at[1, 5].set(2)            # [SEP] for sentence 1 (shorter)
    token_ids = token_ids.at[1, 6:].set(PAD_ID)      # [PAD] padding
    attn_mask = (token_ids != PAD_ID).astype(jnp.int32)

    cont_reps, out_ids = bert_encoder_forward(params, token_ids, attn_mask)
    cont_reps = jax.block_until_ready(cont_reps)
    out_ids = jax.block_until_ready(out_ids)

    assert cont_reps.shape == (B, S, HIDDEN)
    assert out_ids.shape == (B, S)
    assert bool(jnp.all(jnp.isfinite(cont_reps)))

    ref = bert_encoder_reference(params, token_ids, attn_mask)
    max_err = float(jnp.max(jnp.abs(cont_reps - ref)))
    assert max_err < 2e-2, f"kernel/reference mismatch: max abs err = {max_err}"

    print("KERNEL_OK")
</pallas_src>

<mosaic_0001>
module attributes {stable_mosaic.version = 11 : i64} {
  func.func @bert_encoder_kernel(%arg0: i32, %arg1: memref<8x64xf32, #tpu.memory_space<vmem>>, %arg2: memref<1x1x8xf32, #tpu.memory_space<vmem>>, %arg3: memref<8x64xf32, #tpu.memory_space<vmem>>, %arg4: memref<2x64x192xbf16, #tpu.memory_space<vmem>>, %arg5: memref<2x64x64xbf16, #tpu.memory_space<vmem>>, %arg6: memref<2x64x128xbf16, #tpu.memory_space<vmem>>, %arg7: memref<2x128x64xbf16, #tpu.memory_space<vmem>>, %arg8: memref<2x8x192xf32, #tpu.memory_space<vmem>>, %arg9: memref<8x64xf32, #tpu.memory_space<vmem>>) attributes {dimension_semantics = [#tpu.dimension_semantics<parallel>], iteration_bounds = array<i64: 2>, scalar_prefetch = 0 : i64, scratch_operands = 0 : i64, tpu.core_type = #tpu.core_type<tc>, window_params = [{transform_indices = @transform_0, window_bounds = array<i64: 8, 64>}, {transform_indices = @transform_1, window_bounds = array<i64: 1, 1, 8>}, {pipeline_mode = #tpu.pipeline_mode<synchronous>, transform_indices = @transform_2, window_bounds = array<i64: 8, 64>}, {pipeline_mode = #tpu.pipeline_mode<synchronous>, transform_indices = @transform_3, window_bounds = array<i64: 2, 64, 192>}, {pipeline_mode = #tpu.pipeline_mode<synchronous>, transform_indices = @transform_4, window_bounds = array<i64: 2, 64, 64>}, {pipeline_mode = #tpu.pipeline_mode<synchronous>, transform_indices = @transform_5, window_bounds = array<i64: 2, 64, 128>}, {pipeline_mode = #tpu.pipeline_mode<synchronous>, transform_indices = @transform_6, window_bounds = array<i64: 2, 128, 64>}, {pipeline_mode = #tpu.pipeline_mode<synchronous>, transform_indices = @transform_7, window_bounds = array<i64: 2, 8, 192>}, {transform_indices = @transform_8, window_bounds = array<i64: 8, 64>}]} {
    %c0 = arith.constant 0 : index
    %c0_0 = arith.constant 0 : index
    %c0_1 = arith.constant 0 : index
    %0 = vector.load %arg2[%c0, %c0_0, %c0_1] : memref<1x1x8xf32, #tpu.memory_space<vmem>>, vector<1x1x8xf32>
    %1 = vector.shape_cast %0 : vector<1x1x8xf32> to vector<1x8xf32>
    %c0_2 = arith.constant 0 : index
    %c0_3 = arith.constant 0 : index
    %2 = vector.load %arg1[%c0_2, %c0_3] : memref<8x64xf32, #tpu.memory_space<vmem>>, vector<8x64xf32>
    %c0_4 = arith.constant 0 : index
    %c0_5 = arith.constant 0 : index
    %3 = vector.load %arg3[%c0_4, %c0_5] : memref<8x64xf32, #tpu.memory_space<vmem>>, vector<1x64xf32>
    %c1 = arith.constant 1 : index
    %c0_6 = arith.constant 0 : index
    %4 = vector.load %arg3[%c1, %c0_6] : memref<8x64xf32, #tpu.memory_space<vmem>>, vector<1x64xf32>
    %cst = arith.constant dense<0.000000e+00> : vector<8xf32>
    %5 = vector.multi_reduction <add>, %2, %cst [1] : vector<8x64xf32> to vector<8xf32>
    %6 = vector.shape_cast %5 : vector<8xf32> to vector<8x1xf32>
    %cst_7 = arith.constant 6.400000e+01 : f32
    %7 = vector.broadcast %cst_7 : f32 to vector<8x1xf32>
    %8 = arith.divf %6, %7 : vector<8x1xf32>
    %9 = vector.broadcast %8 : vector<8x1xf32> to vector<8x64xf32>
    %10 = arith.subf %2, %9 : vector<8x64xf32>
    %11 = arith.mulf %10, %10 : vector<8x64xf32>
    %cst_8 = arith.constant dense<0.000000e+00> : vector<8xf32>
    %12 = vector.multi_reduction <add>, %11, %cst_8 [1] : vector<8x64xf32> to vector<8xf32>
    %13 = vector.shape_cast %12 : vector<8xf32> to vector<8x1xf32>
    %cst_9 = arith.constant 6.400000e+01 : f32
    %14 = vector.broadcast %cst_9 : f32 to vector<8x1xf32>
    %15 = arith.divf %13, %14 : vector<8x1xf32>
    %16 = vector.broadcast %8 : vector<8x1xf32> to vector<8x64xf32>
    %17 = arith.subf %2, %16 : vector<8x64xf32>
    %cst_10 = arith.constant 9.99999996E-13 : f32
    %18 = vector.broadcast %cst_10 : f32 to vector<8x1xf32>
    %19 = arith.addf %15, %18 : vector<8x1xf32>
    %20 = math.rsqrt %19 : vector<8x1xf32>
    %21 = vector.broadcast %20 : vector<8x1xf32> to vector<8x64xf32>
    %22 = arith.mulf %17, %21 : vector<8x64xf32>
    %23 = vector.broadcast %3 : vector<1x64xf32> to vector<8x64xf32>
    %24 = arith.mulf %22, %23 : vector<8x64xf32>
    %25 = vector.broadcast %4 : vector<1x64xf32> to vector<8x64xf32>
    %26 = arith.addf %24, %25 : vector<8x64xf32>
    %c0_11 = arith.constant 0 : index
    %c0_12 = arith.constant 0 : index
    %c0_13 = arith.constant 0 : index
    %27 = vector.load %arg8[%c0_11, %c0_12, %c0_13] : memref<2x8x192xf32, #tpu.memory_space<vmem>>, vector<1x8x192xf32>
    %28 = vector.shape_cast %27 : vector<1x8x192xf32> to vector<8x192xf32>
    %29 = vector.extract_strided_slice %28 {offsets = [0, 0], sizes = [1, 192], strides = [1, 1]} : vector<8x192xf32> to vector<1x192xf32>
    %30 = vector.extract_strided_slice %28 {offsets = [1, 0], sizes = [1, 64], strides = [1, 1]} : vector<8x192xf32> to vector<1x64xf32>
    %31 = vector.extract_strided_slice %28 {offsets = [2, 0], sizes = [1, 64], strides = [1, 1]} : vector<8x192xf32> to vector<1x64xf32>
    %32 = vector.extract_strided_slice %28 {offsets = [3, 0], sizes = [1, 64], strides = [1, 1]} : vector<8x192xf32> to vector<1x64xf32>
    %33 = vector.extract_strided_slice %28 {offsets = [4, 0], sizes = [1, 128], strides = [1, 1]} : vector<8x192xf32> to vector<1x128xf32>
    %34 = vector.extract_strided_slice %28 {offsets = [5, 0], sizes = [1, 64], strides = [1, 1]} : vector<8x192xf32> to vector<1x64xf32>
    %35 = vector.extract_strided_slice %28 {offsets = [6, 0], sizes = [1, 64], strides = [1, 1]} : vector<8x192xf32> to vector<1x64xf32>
    %36 = vector.extract_strided_slice %28 {offsets = [7, 0], sizes = [1, 64], strides = [1, 1]} : vector<8x192xf32> to vector<1x64xf32>
    %37 = arith.truncf %26 : vector<8x64xf32> to vector<8x64xbf16>
    %c0_14 = arith.constant 0 : index
    %c0_15 = arith.constant 0 : index
    %c0_16 = arith.constant 0 : index
    %38 = vector.load %arg4[%c0_14, %c0_15, %c0_16] : memref<2x64x192xbf16, #tpu.memory_space<vmem>>, vector<1x64x192xbf16>
    %39 = vector.shape_cast %38 : vector<1x64x192xbf16> to vector<64x192xbf16>
    %cst_17 = arith.constant dense<0.000000e+00> : vector<8x192xf32>
    %40 = tpu.matmul %37, %39, %cst_17 {dimension_numbers = #tpu.dot_dimension_numbers<[1], [0], [0], [1], [0, 0, 1, 1], [], []>} : vector<8x64xbf16>, vector<64x192xbf16>, vector<8x192xf32> -> vector<8x192xf32>
    %41 = vector.broadcast %29 : vector<1x192xf32> to vector<8x192xf32>
    %42 = arith.addf %40, %41 : vector<8x192xf32>
    %cst_18 = arith.constant 0.000000e+00 : f32
    %43 = vector.broadcast %cst_18 : f32 to vector<8x64xf32>
    %44 = vector.extract_strided_slice %42 {offsets = [0, 0], sizes = [8, 16], strides = [1, 1]} : vector<8x192xf32> to vector<8x16xf32>
    %45 = arith.truncf %44 : vector<8x16xf32> to vector<8x16xbf16>
    %46 = vector.extract_strided_slice %42 {offsets = [0, 64], sizes = [8, 16], strides = [1, 1]} : vector<8x192xf32> to vector<8x16xf32>
    %47 = arith.truncf %46 : vector<8x16xf32> to vector<8x16xbf16>
    %48 = vector.extract_strided_slice %42 {offsets = [0, 128], sizes = [8, 16], strides = [1, 1]} : vector<8x192xf32> to vector<8x16xf32>
    %49 = arith.truncf %48 : vector<8x16xf32> to vector<8x16xbf16>
    %cst_19 = arith.constant dense<0.000000e+00> : vector<8x8xf32>
    %50 = tpu.matmul %45, %47, %cst_19 {dimension_numbers = #tpu.dot_dimension_numbers<[1], [1], [0], [0], [0, 0, 1, 0], [], []>} : vector<8x16xbf16>, vector<8x16xbf16>, vector<8x8xf32> -> vector<8x8xf32>
    %51 = vector.broadcast %1 : vector<1x8xf32> to vector<8x8xf32>
    %52 = arith.addf %50, %51 : vector<8x8xf32>
    %cst_20 = arith.constant dense<0xFF800000> : vector<8xf32>
    %53 = vector.multi_reduction <maximumf>, %52, %cst_20 [1] : vector<8x8xf32> to vector<8xf32>
    %54 = vector.shape_cast %53 : vector<8xf32> to vector<8x1xf32>
    %55 = vector.broadcast %54 : vector<8x1xf32> to vector<8x8xf32>
    %56 = arith.subf %52, %55 : vector<8x8xf32>
    %57 = math.exp %56 : vector<8x8xf32>
    %cst_21 = arith.constant dense<0.000000e+00> : vector<8xf32>
    %58 = vector.multi_reduction <add>, %57, %cst_21 [1] : vector<8x8xf32> to vector<8xf32>
    %59 = vector.shape_cast %58 : vector<8xf32> to vector<8x1xf32>
    %60 = tpu.reciprocal %59 : vector<8x1xf32> -> vector<8x1xf32>
    %61 = vector.broadcast %60 : vector<8x1xf32> to vector<8x8xf32>
    %62 = arith.mulf %57, %61 : vector<8x8xf32>
    %63 = arith.truncf %62 : vector<8x8xf32> to vector<8x8xbf16>
    %cst_22 = arith.constant dense<0.000000e+00> : vector<8x16xf32>
    %64 = tpu.matmul %63, %49, %cst_22 {dimension_numbers = #tpu.dot_dimension_numbers<[1], [0], [0], [1], [0, 0, 1, 1], [], []>} : vector<8x8xbf16>, vector<8x16xbf16>, vector<8x16xf32> -> vector<8x16xf32>
    %65 = arith.truncf %64 : vector<8x16xf32> to vector<8x16xbf16>
    %c0_23 = arith.constant 0 : index
    %c0_24 = arith.constant 0 : index
    %c0_25 = arith.constant 0 : index
    %66 = vector.load %arg5[%c0_23, %c0_24, %c0_25] : memref<2x64x64xbf16, #tpu.memory_space<vmem>>, vector<1x16x64xbf16>
    %67 = vector.shape_cast %66 : vector<1x16x64xbf16> to vector<16x64xbf16>
    %cst_26 = arith.constant dense<0.000000e+00> : vector<8x64xf32>
    %68 = tpu.matmul %65, %67, %cst_26 {dimension_numbers = #tpu.dot_dimension_numbers<[1], [0], [0], [1], [0, 0, 1, 1], [], []>} : vector<8x16xbf16>, vector<16x64xbf16>, vector<8x64xf32> -> vector<8x64xf32>
    %69 = arith.addf %43, %68 : vector<8x64xf32>
    %70 = vector.extract_strided_slice %42 {offsets = [0, 16], sizes = [8, 16], strides = [1, 1]} : vector<8x192xf32> to vector<8x16xf32>
    %71 = arith.truncf %70 : vector<8x16xf32> to vector<8x16xbf16>
    %72 = vector.extract_strided_slice %42 {offsets = [0, 80], sizes = [8, 16], strides = [1, 1]} : vector<8x192xf32> to vector<8x16xf32>
    %73 = arith.truncf %72 : vector<8x16xf32> to vector<8x16xbf16>
    %74 = vector.extract_strided_slice %42 {offsets = [0, 144], sizes = [8, 16], strides = [1, 1]} : vector<8x192xf32> to vector<8x16xf32>
    %75 = arith.truncf %74 : vector<8x16xf32> to vector<8x16xbf16>
    %cst_27 = arith.constant dense<0.000000e+00> : vector<8x8xf32>
    %76 = tpu.matmul %71, %73, %cst_27 {dimension_numbers = #tpu.dot_dimension_numbers<[1], [1], [0], [0], [0, 0, 1, 0], [], []>} : vector<8x16xbf16>, vector<8x16xbf16>, vector<8x8xf32> -> vector<8x8xf32>
    %77 = vector.broadcast %1 : vector<1x8xf32> to vector<8x8xf32>
    %78 = arith.addf %76, %77 : vector<8x8xf32>
    %cst_28 = arith.constant dense<0xFF800000> : vector<8xf32>
    %79 = vector.multi_reduction <maximumf>, %78, %cst_28 [1] : vector<8x8xf32> to vector<8xf32>
    %80 = vector.shape_cast %79 : vector<8xf32> to vector<8x1xf32>
    %81 = vector.broadcast %80 : vector<8x1xf32> to vector<8x8xf32>
    %82 = arith.subf %78, %81 : vector<8x8xf32>
    %83 = math.exp %82 : vector<8x8xf32>
    %cst_29 = arith.constant dense<0.000000e+00> : vector<8xf32>
    %84 = vector.multi_reduction <add>, %83, %cst_29 [1] : vector<8x8xf32> to vector<8xf32>
    %85 = vector.shape_cast %84 : vector<8xf32> to vector<8x1xf32>
    %86 = tpu.reciprocal %85 : vector<8x1xf32> -> vector<8x1xf32>
    %87 = vector.broadcast %86 : vector<8x1xf32> to vector<8x8xf32>
    %88 = arith.mulf %83, %87 : vector<8x8xf32>
    %89 = arith.truncf %88 : vector<8x8xf32> to vector<8x8xbf16>
    %cst_30 = arith.constant dense<0.000000e+00> : vector<8x16xf32>
    %90 = tpu.matmul %89, %75, %cst_30 {dimension_numbers = #tpu.dot_dimension_numbers<[1], [0], [0], [1], [0, 0, 1, 1], [], []>} : vector<8x8xbf16>, vector<8x16xbf16>, vector<8x16xf32> -> vector<8x16xf32>
    %91 = arith.truncf %90 : vector<8x16xf32> to vector<8x16xbf16>
    %c0_31 = arith.constant 0 : index
    %c16 = arith.constant 16 : index
    %c0_32 = arith.constant 0 : index
    %92 = vector.load %arg5[%c0_31, %c16, %c0_32] : memref<2x64x64xbf16, #tpu.memory_space<vmem>>, vector<1x16x64xbf16>
    %93 = vector.shape_cast %92 : vector<1x16x64xbf16> to vector<16x64xbf16>
    %cst_33 = arith.constant dense<0.000000e+00> : vector<8x64xf32>
    %94 = tpu.matmul %91, %93, %cst_33 {dimension_numbers = #tpu.dot_dimension_numbers<[1], [0], [0], [1], [0, 0, 1, 1], [], []>} : vector<8x16xbf16>, vector<16x64xbf16>, vector<8x64xf32> -> vector<8x64xf32>
    %95 = arith.addf %69, %94 : vector<8x64xf32>
    %96 = vector.extract_strided_slice %42 {offsets = [0, 32], sizes = [8, 16], strides = [1, 1]} : vector<8x192xf32> to vector<8x16xf32>
    %97 = arith.truncf %96 : vector<8x16xf32> to vector<8x16xbf16>
    %98 = vector.extract_strided_slice %42 {offsets = [0, 96], sizes = [8, 16], strides = [1, 1]} : vector<8x192xf32> to vector<8x16xf32>
    %99 = arith.truncf %98 : vector<8x16xf32> to vector<8x16xbf16>
    %100 = vector.extract_strided_slice %42 {offsets = [0, 160], sizes = [8, 16], strides = [1, 1]} : vector<8x192xf32> to vector<8x16xf32>
    %101 = arith.truncf %100 : vector<8x16xf32> to vector<8x16xbf16>
    %cst_34 = arith.constant dense<0.000000e+00> : vector<8x8xf32>
    %102 = tpu.matmul %97, %99, %cst_34 {dimension_numbers = #tpu.dot_dimension_numbers<[1], [1], [0], [0], [0, 0, 1, 0], [], []>} : vector<8x16xbf16>, vector<8x16xbf16>, vector<8x8xf32> -> vector<8x8xf32>
    %103 = vector.broadcast %1 : vector<1x8xf32> to vector<8x8xf32>
    %104 = arith.addf %102, %103 : vector<8x8xf32>
    %cst_35 = arith.constant dense<0xFF800000> : vector<8xf32>
    %105 = vector.multi_reduction <maximumf>, %104, %cst_35 [1] : vector<8x8xf32> to vector<8xf32>
    %106 = vector.shape_cast %105 : vector<8xf32> to vector<8x1xf32>
    %107 = vector.broadcast %106 : vector<8x1xf32> to vector<8x8xf32>
    %108 = arith.subf %104, %107 : vector<8x8xf32>
    %109 = math.exp %108 : vector<8x8xf32>
    %cst_36 = arith.constant dense<0.000000e+00> : vector<8xf32>
    %110 = vector.multi_reduction <add>, %109, %cst_36 [1] : vector<8x8xf32> to vector<8xf32>
    %111 = vector.shape_cast %110 : vector<8xf32> to vector<8x1xf32>
    %112 = tpu.reciprocal %111 : vector<8x1xf32> -> vector<8x1xf32>
    %113 = vector.broadcast %112 : vector<8x1xf32> to vector<8x8xf32>
    %114 = arith.mulf %109, %113 : vector<8x8xf32>
    %115 = arith.truncf %114 : vector<8x8xf32> to vector<8x8xbf16>
    %cst_37 = arith.constant dense<0.000000e+00> : vector<8x16xf32>
    %116 = tpu.matmul %115, %101, %cst_37 {dimension_numbers = #tpu.dot_dimension_numbers<[1], [0], [0], [1], [0, 0, 1, 1], [], []>} : vector<8x8xbf16>, vector<8x16xbf16>, vector<8x16xf32> -> vector<8x16xf32>
    %117 = arith.truncf %116 : vector<8x16xf32> to vector<8x16xbf16>
    %c0_38 = arith.constant 0 : index
    %c32 = arith.constant 32 : index
    %c0_39 = arith.constant 0 : index
    %118 = vector.load %arg5[%c0_38, %c32, %c0_39] : memref<2x64x64xbf16, #tpu.memory_space<vmem>>, vector<1x16x64xbf16>
    %119 = vector.shape_cast %118 : vector<1x16x64xbf16> to vector<16x64xbf16>
    %cst_40 = arith.constant dense<0.000000e+00> : vector<8x64xf32>
    %120 = tpu.matmul %117, %119, %cst_40 {dimension_numbers = #tpu.dot_dimension_numbers<[1], [0], [0], [1], [0, 0, 1, 1], [], []>} : vector<8x16xbf16>, vector<16x64xbf16>, vector<8x64xf32> -> vector<8x64xf32>
    %121 = arith.addf %95, %120 : vector<8x64xf32>
    %122 = vector.extract_strided_slice %42 {offsets = [0, 48], sizes = [8, 16], strides = [1, 1]} : vector<8x192xf32> to vector<8x16xf32>
    %123 = arith.truncf %122 : vector<8x16xf32> to vector<8x16xbf16>
    %124 = vector.extract_strided_slice %42 {offsets = [0, 112], sizes = [8, 16], strides = [1, 1]} : vector<8x192xf32> to vector<8x16xf32>
    %125 = arith.truncf %124 : vector<8x16xf32> to vector<8x16xbf16>
    %126 = vector.extract_strided_slice %42 {offsets = [0, 176], sizes = [8, 16], strides = [1, 1]} : vector<8x192xf32> to vector<8x16xf32>
    %127 = arith.truncf %126 : vector<8x16xf32> to vector<8x16xbf16>
    %cst_41 = arith.constant dense<0.000000e+00> : vector<8x8xf32>
    %128 = tpu.matmul %123, %125, %cst_41 {dimension_numbers = #tpu.dot_dimension_numbers<[1], [1], [0], [0], [0, 0, 1, 0], [], []>} : vector<8x16xbf16>, vector<8x16xbf16>, vector<8x8xf32> -> vector<8x8xf32>
    %129 = vector.broadcast %1 : vector<1x8xf32> to vector<8x8xf32>
    %130 = arith.addf %128, %129 : vector<8x8xf32>
    %cst_42 = arith.constant dense<0xFF800000> : vector<8xf32>
    %131 = vector.multi_reduction <maximumf>, %130, %cst_42 [1] : vector<8x8xf32> to vector<8xf32>
    %132 = vector.shape_cast %131 : vector<8xf32> to vector<8x1xf32>
    %133 = vector.broadcast %132 : vector<8x1xf32> to vector<8x8xf32>
    %134 = arith.subf %130, %133 : vector<8x8xf32>
    %135 = math.exp %134 : vector<8x8xf32>
    %cst_43 = arith.constant dense<0.000000e+00> : vector<8xf32>
    %136 = vector.multi_reduction <add>, %135, %cst_43 [1] : vector<8x8xf32> to vector<8xf32>
    %137 = vector.shape_cast %136 : vector<8xf32> to vector<8x1xf32>
    %138 = tpu.reciprocal %137 : vector<8x1xf32> -> vector<8x1xf32>
    %139 = vector.broadcast %138 : vector<8x1xf32> to vector<8x8xf32>
    %140 = arith.mulf %135, %139 : vector<8x8xf32>
    %141 = arith.truncf %140 : vector<8x8xf32> to vector<8x8xbf16>
    %cst_44 = arith.constant dense<0.000000e+00> : vector<8x16xf32>
    %142 = tpu.matmul %141, %127, %cst_44 {dimension_numbers = #tpu.dot_dimension_numbers<[1], [0], [0], [1], [0, 0, 1, 1], [], []>} : vector<8x8xbf16>, vector<8x16xbf16>, vector<8x16xf32> -> vector<8x16xf32>
    %143 = arith.truncf %142 : vector<8x16xf32> to vector<8x16xbf16>
    %c0_45 = arith.constant 0 : index
    %c48 = arith.constant 48 : index
    %c0_46 = arith.constant 0 : index
    %144 = vector.load %arg5[%c0_45, %c48, %c0_46] : memref<2x64x64xbf16, #tpu.memory_space<vmem>>, vector<1x16x64xbf16>
    %145 = vector.shape_cast %144 : vector<1x16x64xbf16> to vector<16x64xbf16>
    %cst_47 = arith.constant dense<0.000000e+00> : vector<8x64xf32>
    %146 = tpu.matmul %143, %145, %cst_47 {dimension_numbers = #tpu.dot_dimension_numbers<[1], [0], [0], [1], [0, 0, 1, 1], [], []>} : vector<8x16xbf16>, vector<16x64xbf16>, vector<8x64xf32> -> vector<8x64xf32>
    %147 = arith.addf %121, %146 : vector<8x64xf32>
    %148 = arith.addf %26, %147 : vector<8x64xf32>
    %149 = vector.broadcast %30 : vector<1x64xf32> to vector<8x64xf32>
    %150 = arith.addf %148, %149 : vector<8x64xf32>
    %cst_48 = arith.constant dense<0.000000e+00> : vector<8xf32>
    %151 = vector.multi_reduction <add>, %150, %cst_48 [1] : vector<8x64xf32> to vector<8xf32>
    %152 = vector.shape_cast %151 : vector<8xf32> to vector<8x1xf32>
    %cst_49 = arith.constant 6.400000e+01 : f32
    %153 = vector.broadcast %cst_49 : f32 to vector<8x1xf32>
    %154 = arith.divf %152, %153 : vector<8x1xf32>
    %155 = vector.broadcast %154 : vector<8x1xf32> to vector<8x64xf32>
    %156 = arith.subf %150, %155 : vector<8x64xf32>
    %157 = arith.mulf %156, %156 : vector<8x64xf32>
    %cst_50 = arith.constant dense<0.000000e+00> : vector<8xf32>
    %158 = vector.multi_reduction <add>, %157, %cst_50 [1] : vector<8x64xf32> to vector<8xf32>
    %159 = vector.shape_cast %158 : vector<8xf32> to vector<8x1xf32>
    %cst_51 = arith.constant 6.400000e+01 : f32
    %160 = vector.broadcast %cst_51 : f32 to vector<8x1xf32>
    %161 = arith.divf %159, %160 : vector<8x1xf32>
    %162 = vector.broadcast %154 : vector<8x1xf32> to vector<8x64xf32>
    %163 = arith.subf %150, %162 : vector<8x64xf32>
    %cst_52 = arith.constant 9.99999996E-13 : f32
    %164 = vector.broadcast %cst_52 : f32 to vector<8x1xf32>
    %165 = arith.addf %161, %164 : vector<8x1xf32>
    %166 = math.rsqrt %165 : vector<8x1xf32>
    %167 = vector.broadcast %166 : vector<8x1xf32> to vector<8x64xf32>
    %168 = arith.mulf %163, %167 : vector<8x64xf32>
    %169 = vector.broadcast %31 : vector<1x64xf32> to vector<8x64xf32>
    %170 = arith.mulf %168, %169 : vector<8x64xf32>
    %171 = vector.broadcast %32 : vector<1x64xf32> to vector<8x64xf32>
    %172 = arith.addf %170, %171 : vector<8x64xf32>
    %173 = arith.truncf %172 : vector<8x64xf32> to vector<8x64xbf16>
    %c0_53 = arith.constant 0 : index
    %c0_54 = arith.constant 0 : index
    %c0_55 = arith.constant 0 : index
    %174 = vector.load %arg6[%c0_53, %c0_54, %c0_55] : memref<2x64x128xbf16, #tpu.memory_space<vmem>>, vector<1x64x128xbf16>
    %175 = vector.shape_cast %174 : vector<1x64x128xbf16> to vector<64x128xbf16>
    %cst_56 = arith.constant dense<0.000000e+00> : vector<8x128xf32>
    %176 = tpu.matmul %173, %175, %cst_56 {dimension_numbers = #tpu.dot_dimension_numbers<[1], [0], [0], [1], [0, 0, 1, 1], [], []>} : vector<8x64xbf16>, vector<64x128xbf16>, vector<8x128xf32> -> vector<8x128xf32>
    %177 = vector.broadcast %33 : vector<1x128xf32> to vector<8x128xf32>
    %178 = arith.addf %176, %177 : vector<8x128xf32>
    %cst_57 = arith.constant 5.000000e-01 : f32
    %179 = vector.broadcast %cst_57 : f32 to vector<8x128xf32>
    %180 = arith.mulf %179, %178 : vector<8x128xf32>
    %cst_58 = arith.constant 4.471500e-02 : f32
    %181 = vector.broadcast %cst_58 : f32 to vector<8x128xf32>
    %182 = arith.mulf %181, %178 : vector<8x128xf32>
    %183 = arith.mulf %182, %178 : vector<8x128xf32>
    %184 = arith.mulf %183, %178 : vector<8x128xf32>
    %185 = arith.addf %178, %184 : vector<8x128xf32>
    %cst_59 = arith.constant 0.797884583 : f32
    %186 = vector.broadcast %cst_59 : f32 to vector<8x128xf32>
    %187 = arith.mulf %186, %185 : vector<8x128xf32>
    %188 = math.tanh %187 : vector<8x128xf32>
    %cst_60 = arith.constant 1.000000e+00 : f32
    %189 = vector.broadcast %cst_60 : f32 to vector<8x128xf32>
    %190 = arith.addf %189, %188 : vector<8x128xf32>
    %191 = arith.mulf %180, %190 : vector<8x128xf32>
    %192 = arith.truncf %191 : vector<8x128xf32> to vector<8x128xbf16>
    %c0_61 = arith.constant 0 : index
    %c0_62 = arith.constant 0 : index
    %c0_63 = arith.constant 0 : index
    %193 = vector.load %arg7[%c0_61, %c0_62, %c0_63] : memref<2x128x64xbf16, #tpu.memory_space<vmem>>, vector<1x128x64xbf16>
    %194 = vector.shape_cast %193 : vector<1x128x64xbf16> to vector<128x64xbf16>
    %cst_64 = arith.constant dense<0.000000e+00> : vector<8x64xf32>
    %195 = tpu.matmul %192, %194, %cst_64 {dimension_numbers = #tpu.dot_dimension_numbers<[1], [0], [0], [1], [0, 0, 1, 1], [], []>} : vector<8x128xbf16>, vector<128x64xbf16>, vector<8x64xf32> -> vector<8x64xf32>
    %196 = vector.broadcast %34 : vector<1x64xf32> to vector<8x64xf32>
    %197 = arith.addf %195, %196 : vector<8x64xf32>
    %198 = arith.addf %172, %197 : vector<8x64xf32>
    %cst_65 = arith.constant dense<0.000000e+00> : vector<8xf32>
    %199 = vector.multi_reduction <add>, %198, %cst_65 [1] : vector<8x64xf32> to vector<8xf32>
    %200 = vector.shape_cast %199 : vector<8xf32> to vector<8x1xf32>
    %cst_66 = arith.constant 6.400000e+01 : f32
    %201 = vector.broadcast %cst_66 : f32 to vector<8x1xf32>
    %202 = arith.divf %200, %201 : vector<8x1xf32>
    %203 = vector.broadcast %202 : vector<8x1xf32> to vector<8x64xf32>
    %204 = arith.subf %198, %203 : vector<8x64xf32>
    %205 = arith.mulf %204, %204 : vector<8x64xf32>
    %cst_67 = arith.constant dense<0.000000e+00> : vector<8xf32>
    %206 = vector.multi_reduction <add>, %205, %cst_67 [1] : vector<8x64xf32> to vector<8xf32>
    %207 = vector.shape_cast %206 : vector<8xf32> to vector<8x1xf32>
    %cst_68 = arith.constant 6.400000e+01 : f32
    %208 = vector.broadcast %cst_68 : f32 to vector<8x1xf32>
    %209 = arith.divf %207, %208 : vector<8x1xf32>
    %210 = vector.broadcast %202 : vector<8x1xf32> to vector<8x64xf32>
    %211 = arith.subf %198, %210 : vector<8x64xf32>
    %cst_69 = arith.constant 9.99999996E-13 : f32
    %212 = vector.broadcast %cst_69 : f32 to vector<8x1xf32>
    %213 = arith.addf %209, %212 : vector<8x1xf32>
    %214 = math.rsqrt %213 : vector<8x1xf32>
    %215 = vector.broadcast %214 : vector<8x1xf32> to vector<8x64xf32>
    %216 = arith.mulf %211, %215 : vector<8x64xf32>
    %217 = vector.broadcast %35 : vector<1x64xf32> to vector<8x64xf32>
    %218 = arith.mulf %216, %217 : vector<8x64xf32>
    %219 = vector.broadcast %36 : vector<1x64xf32> to vector<8x64xf32>
    %220 = arith.addf %218, %219 : vector<8x64xf32>
    %c1_70 = arith.constant 1 : index
    %c0_71 = arith.constant 0 : index
    %c0_72 = arith.constant 0 : index
    %221 = vector.load %arg8[%c1_70, %c0_71, %c0_72] : memref<2x8x192xf32, #tpu.memory_space<vmem>>, vector<1x8x192xf32>
    %222 = vector.shape_cast %221 : vector<1x8x192xf32> to vector<8x192xf32>
    %223 = vector.extract_strided_slice %222 {offsets = [0, 0], sizes = [1, 192], strides = [1, 1]} : vector<8x192xf32> to vector<1x192xf32>
    %224 = vector.extract_strided_slice %222 {offsets = [1, 0], sizes = [1, 64], strides = [1, 1]} : vector<8x192xf32> to vector<1x64xf32>
    %225 = vector.extract_strided_slice %222 {offsets = [2, 0], sizes = [1, 64], strides = [1, 1]} : vector<8x192xf32> to vector<1x64xf32>
    %226 = vector.extract_strided_slice %222 {offsets = [3, 0], sizes = [1, 64], strides = [1, 1]} : vector<8x192xf32> to vector<1x64xf32>
    %227 = vector.extract_strided_slice %222 {offsets = [4, 0], sizes = [1, 128], strides = [1, 1]} : vector<8x192xf32> to vector<1x128xf32>
    %228 = vector.extract_strided_slice %222 {offsets = [5, 0], sizes = [1, 64], strides = [1, 1]} : vector<8x192xf32> to vector<1x64xf32>
    %229 = vector.extract_strided_slice %222 {offsets = [6, 0], sizes = [1, 64], strides = [1, 1]} : vector<8x192xf32> to vector<1x64xf32>
    %230 = vector.extract_strided_slice %222 {offsets = [7, 0], sizes = [1, 64], strides = [1, 1]} : vector<8x192xf32> to vector<1x64xf32>
    %231 = arith.truncf %220 : vector<8x64xf32> to vector<8x64xbf16>
    %c1_73 = arith.constant 1 : index
    %c0_74 = arith.constant 0 : index
    %c0_75 = arith.constant 0 : index
    %232 = vector.load %arg4[%c1_73, %c0_74, %c0_75] : memref<2x64x192xbf16, #tpu.memory_space<vmem>>, vector<1x64x192xbf16>
    %233 = vector.shape_cast %232 : vector<1x64x192xbf16> to vector<64x192xbf16>
    %cst_76 = arith.constant dense<0.000000e+00> : vector<8x192xf32>
    %234 = tpu.matmul %231, %233, %cst_76 {dimension_numbers = #tpu.dot_dimension_numbers<[1], [0], [0], [1], [0, 0, 1, 1], [], []>} : vector<8x64xbf16>, vector<64x192xbf16>, vector<8x192xf32> -> vector<8x192xf32>
    %235 = vector.broadcast %223 : vector<1x192xf32> to vector<8x192xf32>
    %236 = arith.addf %234, %235 : vector<8x192xf32>
    %cst_77 = arith.constant 0.000000e+00 : f32
    %237 = vector.broadcast %cst_77 : f32 to vector<8x64xf32>
    %238 = vector.extract_strided_slice %236 {offsets = [0, 0], sizes = [8, 16], strides = [1, 1]} : vector<8x192xf32> to vector<8x16xf32>
    %239 = arith.truncf %238 : vector<8x16xf32> to vector<8x16xbf16>
    %240 = vector.extract_strided_slice %236 {offsets = [0, 64], sizes = [8, 16], strides = [1, 1]} : vector<8x192xf32> to vector<8x16xf32>
    %241 = arith.truncf %240 : vector<8x16xf32> to vector<8x16xbf16>
    %242 = vector.extract_strided_slice %236 {offsets = [0, 128], sizes = [8, 16], strides = [1, 1]} : vector<8x192xf32> to vector<8x16xf32>
    %243 = arith.truncf %242 : vector<8x16xf32> to vector<8x16xbf16>
    %cst_78 = arith.constant dense<0.000000e+00> : vector<8x8xf32>
    %244 = tpu.matmul %239, %241, %cst_78 {dimension_numbers = #tpu.dot_dimension_numbers<[1], [1], [0], [0], [0, 0, 1, 0], [], []>} : vector<8x16xbf16>, vector<8x16xbf16>, vector<8x8xf32> -> vector<8x8xf32>
    %245 = vector.broadcast %1 : vector<1x8xf32> to vector<8x8xf32>
    %246 = arith.addf %244, %245 : vector<8x8xf32>
    %cst_79 = arith.constant dense<0xFF800000> : vector<8xf32>
    %247 = vector.multi_reduction <maximumf>, %246, %cst_79 [1] : vector<8x8xf32> to vector<8xf32>
    %248 = vector.shape_cast %247 : vector<8xf32> to vector<8x1xf32>
    %249 = vector.broadcast %248 : vector<8x1xf32> to vector<8x8xf32>
    %250 = arith.subf %246, %249 : vector<8x8xf32>
    %251 = math.exp %250 : vector<8x8xf32>
    %cst_80 = arith.constant dense<0.000000e+00> : vector<8xf32>
    %252 = vector.multi_reduction <add>, %251, %cst_80 [1] : vector<8x8xf32> to vector<8xf32>
    %253 = vector.shape_cast %252 : vector<8xf32> to vector<8x1xf32>
    %254 = tpu.reciprocal %253 : vector<8x1xf32> -> vector<8x1xf32>
    %255 = vector.broadcast %254 : vector<8x1xf32> to vector<8x8xf32>
    %256 = arith.mulf %251, %255 : vector<8x8xf32>
    %257 = arith.truncf %256 : vector<8x8xf32> to vector<8x8xbf16>
    %cst_81 = arith.constant dense<0.000000e+00> : vector<8x16xf32>
    %258 = tpu.matmul %257, %243, %cst_81 {dimension_numbers = #tpu.dot_dimension_numbers<[1], [0], [0], [1], [0, 0, 1, 1], [], []>} : vector<8x8xbf16>, vector<8x16xbf16>, vector<8x16xf32> -> vector<8x16xf32>
    %259 = arith.truncf %258 : vector<8x16xf32> to vector<8x16xbf16>
    %c1_82 = arith.constant 1 : index
    %c0_83 = arith.constant 0 : index
    %c0_84 = arith.constant 0 : index
    %260 = vector.load %arg5[%c1_82, %c0_83, %c0_84] : memref<2x64x64xbf16, #tpu.memory_space<vmem>>, vector<1x16x64xbf16>
    %261 = vector.shape_cast %260 : vector<1x16x64xbf16> to vector<16x64xbf16>
    %cst_85 = arith.constant dense<0.000000e+00> : vector<8x64xf32>
    %262 = tpu.matmul %259, %261, %cst_85 {dimension_numbers = #tpu.dot_dimension_numbers<[1], [0], [0], [1], [0, 0, 1, 1], [], []>} : vector<8x16xbf16>, vector<16x64xbf16>, vector<8x64xf32> -> vector<8x64xf32>
    %263 = arith.addf %237, %262 : vector<8x64xf32>
    %264 = vector.extract_strided_slice %236 {offsets = [0, 16], sizes = [8, 16], strides = [1, 1]} : vector<8x192xf32> to vector<8x16xf32>
    %265 = arith.truncf %264 : vector<8x16xf32> to vector<8x16xbf16>
    %266 = vector.extract_strided_slice %236 {offsets = [0, 80], sizes = [8, 16], strides = [1, 1]} : vector<8x192xf32> to vector<8x16xf32>
    %267 = arith.truncf %266 : vector<8x16xf32> to vector<8x16xbf16>
    %268 = vector.extract_strided_slice %236 {offsets = [0, 144], sizes = [8, 16], strides = [1, 1]} : vector<8x192xf32> to vector<8x16xf32>
    %269 = arith.truncf %268 : vector<8x16xf32> to vector<8x16xbf16>
    %cst_86 = arith.constant dense<0.000000e+00> : vector<8x8xf32>
    %270 = tpu.matmul %265, %267, %cst_86 {dimension_numbers = #tpu.dot_dimension_numbers<[1], [1], [0], [0], [0, 0, 1, 0], [], []>} : vector<8x16xbf16>, vector<8x16xbf16>, vector<8x8xf32> -> vector<8x8xf32>
    %271 = vector.broadcast %1 : vector<1x8xf32> to vector<8x8xf32>
    %272 = arith.addf %270, %271 : vector<8x8xf32>
    %cst_87 = arith.constant dense<0xFF800000> : vector<8xf32>
    %273 = vector.multi_reduction <maximumf>, %272, %cst_87 [1] : vector<8x8xf32> to vector<8xf32>
    %274 = vector.shape_cast %273 : vector<8xf32> to vector<8x1xf32>
    %275 = vector.broadcast %274 : vector<8x1xf32> to vector<8x8xf32>
    %276 = arith.subf %272, %275 : vector<8x8xf32>
    %277 = math.exp %276 : vector<8x8xf32>
    %cst_88 = arith.constant dense<0.000000e+00> : vector<8xf32>
    %278 = vector.multi_reduction <add>, %277, %cst_88 [1] : vector<8x8xf32> to vector<8xf32>
    %279 = vector.shape_cast %278 : vector<8xf32> to vector<8x1xf32>
    %280 = tpu.reciprocal %279 : vector<8x1xf32> -> vector<8x1xf32>
    %281 = vector.broadcast %280 : vector<8x1xf32> to vector<8x8xf32>
    %282 = arith.mulf %277, %281 : vector<8x8xf32>
    %283 = arith.truncf %282 : vector<8x8xf32> to vector<8x8xbf16>
    %cst_89 = arith.constant dense<0.000000e+00> : vector<8x16xf32>
    %284 = tpu.matmul %283, %269, %cst_89 {dimension_numbers = #tpu.dot_dimension_numbers<[1], [0], [0], [1], [0, 0, 1, 1], [], []>} : vector<8x8xbf16>, vector<8x16xbf16>, vector<8x16xf32> -> vector<8x16xf32>
    %285 = arith.truncf %284 : vector<8x16xf32> to vector<8x16xbf16>
    %c1_90 = arith.constant 1 : index
    %c16_91 = arith.constant 16 : index
    %c0_92 = arith.constant 0 : index
    %286 = vector.load %arg5[%c1_90, %c16_91, %c0_92] : memref<2x64x64xbf16, #tpu.memory_space<vmem>>, vector<1x16x64xbf16>
    %287 = vector.shape_cast %286 : vector<1x16x64xbf16> to vector<16x64xbf16>
    %cst_93 = arith.constant dense<0.000000e+00> : vector<8x64xf32>
    %288 = tpu.matmul %285, %287, %cst_93 {dimension_numbers = #tpu.dot_dimension_numbers<[1], [0], [0], [1], [0, 0, 1, 1], [], []>} : vector<8x16xbf16>, vector<16x64xbf16>, vector<8x64xf32> -> vector<8x64xf32>
    %289 = arith.addf %263, %288 : vector<8x64xf32>
    %290 = vector.extract_strided_slice %236 {offsets = [0, 32], sizes = [8, 16], strides = [1, 1]} : vector<8x192xf32> to vector<8x16xf32>
    %291 = arith.truncf %290 : vector<8x16xf32> to vector<8x16xbf16>
    %292 = vector.extract_strided_slice %236 {offsets = [0, 96], sizes = [8, 16], strides = [1, 1]} : vector<8x192xf32> to vector<8x16xf32>
    %293 = arith.truncf %292 : vector<8x16xf32> to vector<8x16xbf16>
    %294 = vector.extract_strided_slice %236 {offsets = [0, 160], sizes = [8, 16], strides = [1, 1]} : vector<8x192xf32> to vector<8x16xf32>
    %295 = arith.truncf %294 : vector<8x16xf32> to vector<8x16xbf16>
    %cst_94 = arith.constant dense<0.000000e+00> : vector<8x8xf32>
    %296 = tpu.matmul %291, %293, %cst_94 {dimension_numbers = #tpu.dot_dimension_numbers<[1], [1], [0], [0], [0, 0, 1, 0], [], []>} : vector<8x16xbf16>, vector<8x16xbf16>, vector<8x8xf32> -> vector<8x8xf32>
    %297 = vector.broadcast %1 : vector<1x8xf32> to vector<8x8xf32>
    %298 = arith.addf %296, %297 : vector<8x8xf32>
    %cst_95 = arith.constant dense<0xFF800000> : vector<8xf32>
    %299 = vector.multi_reduction <maximumf>, %298, %cst_95 [1] : vector<8x8xf32> to vector<8xf32>
    %300 = vector.shape_cast %299 : vector<8xf32> to vector<8x1xf32>
    %301 = vector.broadcast %300 : vector<8x1xf32> to vector<8x8xf32>
    %302 = arith.subf %298, %301 : vector<8x8xf32>
    %303 = math.exp %302 : vector<8x8xf32>
    %cst_96 = arith.constant dense<0.000000e+00> : vector<8xf32>
    %304 = vector.multi_reduction <add>, %303, %cst_96 [1] : vector<8x8xf32> to vector<8xf32>
    %305 = vector.shape_cast %304 : vector<8xf32> to vector<8x1xf32>
    %306 = tpu.reciprocal %305 : vector<8x1xf32> -> vector<8x1xf32>
    %307 = vector.broadcast %306 : vector<8x1xf32> to vector<8x8xf32>
    %308 = arith.mulf %303, %307 : vector<8x8xf32>
    %309 = arith.truncf %308 : vector<8x8xf32> to vector<8x8xbf16>
    %cst_97 = arith.constant dense<0.000000e+00> : vector<8x16xf32>
    %310 = tpu.matmul %309, %295, %cst_97 {dimension_numbers = #tpu.dot_dimension_numbers<[1], [0], [0], [1], [0, 0, 1, 1], [], []>} : vector<8x8xbf16>, vector<8x16xbf16>, vector<8x16xf32> -> vector<8x16xf32>
    %311 = arith.truncf %310 : vector<8x16xf32> to vector<8x16xbf16>
    %c1_98 = arith.constant 1 : index
    %c32_99 = arith.constant 32 : index
    %c0_100 = arith.constant 0 : index
    %312 = vector.load %arg5[%c1_98, %c32_99, %c0_100] : memref<2x64x64xbf16, #tpu.memory_space<vmem>>, vector<1x16x64xbf16>
    %313 = vector.shape_cast %312 : vector<1x16x64xbf16> to vector<16x64xbf16>
    %cst_101 = arith.constant dense<0.000000e+00> : vector<8x64xf32>
    %314 = tpu.matmul %311, %313, %cst_101 {dimension_numbers = #tpu.dot_dimension_numbers<[1], [0], [0], [1], [0, 0, 1, 1], [], []>} : vector<8x16xbf16>, vector<16x64xbf16>, vector<8x64xf32> -> vector<8x64xf32>
    %315 = arith.addf %289, %314 : vector<8x64xf32>
    %316 = vector.extract_strided_slice %236 {offsets = [0, 48], sizes = [8, 16], strides = [1, 1]} : vector<8x192xf32> to vector<8x16xf32>
    %317 = arith.truncf %316 : vector<8x16xf32> to vector<8x16xbf16>
    %318 = vector.extract_strided_slice %236 {offsets = [0, 112], sizes = [8, 16], strides = [1, 1]} : vector<8x192xf32> to vector<8x16xf32>
    %319 = arith.truncf %318 : vector<8x16xf32> to vector<8x16xbf16>
    %320 = vector.extract_strided_slice %236 {offsets = [0, 176], sizes = [8, 16], strides = [1, 1]} : vector<8x192xf32> to vector<8x16xf32>
    %321 = arith.truncf %320 : vector<8x16xf32> to vector<8x16xbf16>
    %cst_102 = arith.constant dense<0.000000e+00> : vector<8x8xf32>
    %322 = tpu.matmul %317, %319, %cst_102 {dimension_numbers = #tpu.dot_dimension_numbers<[1], [1], [0], [0], [0, 0, 1, 0], [], []>} : vector<8x16xbf16>, vector<8x16xbf16>, vector<8x8xf32> -> vector<8x8xf32>
    %323 = vector.broadcast %1 : vector<1x8xf32> to vector<8x8xf32>
    %324 = arith.addf %322, %323 : vector<8x8xf32>
    %cst_103 = arith.constant dense<0xFF800000> : vector<8xf32>
    %325 = vector.multi_reduction <maximumf>, %324, %cst_103 [1] : vector<8x8xf32> to vector<8xf32>
    %326 = vector.shape_cast %325 : vector<8xf32> to vector<8x1xf32>
    %327 = vector.broadcast %326 : vector<8x1xf32> to vector<8x8xf32>
    %328 = arith.subf %324, %327 : vector<8x8xf32>
    %329 = math.exp %328 : vector<8x8xf32>
    %cst_104 = arith.constant dense<0.000000e+00> : vector<8xf32>
    %330 = vector.multi_reduction <add>, %329, %cst_104 [1] : vector<8x8xf32> to vector<8xf32>
    %331 = vector.shape_cast %330 : vector<8xf32> to vector<8x1xf32>
    %332 = tpu.reciprocal %331 : vector<8x1xf32> -> vector<8x1xf32>
    %333 = vector.broadcast %332 : vector<8x1xf32> to vector<8x8xf32>
    %334 = arith.mulf %329, %333 : vector<8x8xf32>
    %335 = arith.truncf %334 : vector<8x8xf32> to vector<8x8xbf16>
    %cst_105 = arith.constant dense<0.000000e+00> : vector<8x16xf32>
    %336 = tpu.matmul %335, %321, %cst_105 {dimension_numbers = #tpu.dot_dimension_numbers<[1], [0], [0], [1], [0, 0, 1, 1], [], []>} : vector<8x8xbf16>, vector<8x16xbf16>, vector<8x16xf32> -> vector<8x16xf32>
    %337 = arith.truncf %336 : vector<8x16xf32> to vector<8x16xbf16>
    %c1_106 = arith.constant 1 : index
    %c48_107 = arith.constant 48 : index
    %c0_108 = arith.constant 0 : index
    %338 = vector.load %arg5[%c1_106, %c48_107, %c0_108] : memref<2x64x64xbf16, #tpu.memory_space<vmem>>, vector<1x16x64xbf16>
    %339 = vector.shape_cast %338 : vector<1x16x64xbf16> to vector<16x64xbf16>
    %cst_109 = arith.constant dense<0.000000e+00> : vector<8x64xf32>
    %340 = tpu.matmul %337, %339, %cst_109 {dimension_numbers = #tpu.dot_dimension_numbers<[1], [0], [0], [1], [0, 0, 1, 1], [], []>} : vector<8x16xbf16>, vector<16x64xbf16>, vector<8x64xf32> -> vector<8x64xf32>
    %341 = arith.addf %315, %340 : vector<8x64xf32>
    %342 = arith.addf %220, %341 : vector<8x64xf32>
    %343 = vector.broadcast %224 : vector<1x64xf32> to vector<8x64xf32>
    %344 = arith.addf %342, %343 : vector<8x64xf32>
    %cst_110 = arith.constant dense<0.000000e+00> : vector<8xf32>
    %345 = vector.multi_reduction <add>, %344, %cst_110 [1] : vector<8x64xf32> to vector<8xf32>
    %346 = vector.shape_cast %345 : vector<8xf32> to vector<8x1xf32>
    %cst_111 = arith.constant 6.400000e+01 : f32
    %347 = vector.broadcast %cst_111 : f32 to vector<8x1xf32>
    %348 = arith.divf %346, %347 : vector<8x1xf32>
    %349 = vector.broadcast %348 : vector<8x1xf32> to vector<8x64xf32>
    %350 = arith.subf %344, %349 : vector<8x64xf32>
    %351 = arith.mulf %350, %350 : vector<8x64xf32>
    %cst_112 = arith.constant dense<0.000000e+00> : vector<8xf32>
    %352 = vector.multi_reduction <add>, %351, %cst_112 [1] : vector<8x64xf32> to vector<8xf32>
    %353 = vector.shape_cast %352 : vector<8xf32> to vector<8x1xf32>
    %cst_113 = arith.constant 6.400000e+01 : f32
    %354 = vector.broadcast %cst_113 : f32 to vector<8x1xf32>
    %355 = arith.divf %353, %354 : vector<8x1xf32>
    %356 = vector.broadcast %348 : vector<8x1xf32> to vector<8x64xf32>
    %357 = arith.subf %344, %356 : vector<8x64xf32>
    %cst_114 = arith.constant 9.99999996E-13 : f32
    %358 = vector.broadcast %cst_114 : f32 to vector<8x1xf32>
    %359 = arith.addf %355, %358 : vector<8x1xf32>
    %360 = math.rsqrt %359 : vector<8x1xf32>
    %361 = vector.broadcast %360 : vector<8x1xf32> to vector<8x64xf32>
    %362 = arith.mulf %357, %361 : vector<8x64xf32>
    %363 = vector.broadcast %225 : vector<1x64xf32> to vector<8x64xf32>
    %364 = arith.mulf %362, %363 : vector<8x64xf32>
    %365 = vector.broadcast %226 : vector<1x64xf32> to vector<8x64xf32>
    %366 = arith.addf %364, %365 : vector<8x64xf32>
    %367 = arith.truncf %366 : vector<8x64xf32> to vector<8x64xbf16>
    %c1_115 = arith.constant 1 : index
    %c0_116 = arith.constant 0 : index
    %c0_117 = arith.constant 0 : index
    %368 = vector.load %arg6[%c1_115, %c0_116, %c0_117] : memref<2x64x128xbf16, #tpu.memory_space<vmem>>, vector<1x64x128xbf16>
    %369 = vector.shape_cast %368 : vector<1x64x128xbf16> to vector<64x128xbf16>
    %cst_118 = arith.constant dense<0.000000e+00> : vector<8x128xf32>
    %370 = tpu.matmul %367, %369, %cst_118 {dimension_numbers = #tpu.dot_dimension_numbers<[1], [0], [0], [1], [0, 0, 1, 1], [], []>} : vector<8x64xbf16>, vector<64x128xbf16>, vector<8x128xf32> -> vector<8x128xf32>
    %371 = vector.broadcast %227 : vector<1x128xf32> to vector<8x128xf32>
    %372 = arith.addf %370, %371 : vector<8x128xf32>
    %cst_119 = arith.constant 5.000000e-01 : f32
    %373 = vector.broadcast %cst_119 : f32 to vector<8x128xf32>
    %374 = arith.mulf %373, %372 : vector<8x128xf32>
    %cst_120 = arith.constant 4.471500e-02 : f32
    %375 = vector.broadcast %cst_120 : f32 to vector<8x128xf32>
    %376 = arith.mulf %375, %372 : vector<8x128xf32>
    %377 = arith.mulf %376, %372 : vector<8x128xf32>
    %378 = arith.mulf %377, %372 : vector<8x128xf32>
    %379 = arith.addf %372, %378 : vector<8x128xf32>
    %cst_121 = arith.constant 0.797884583 : f32
    %380 = vector.broadcast %cst_121 : f32 to vector<8x128xf32>
    %381 = arith.mulf %380, %379 : vector<8x128xf32>
    %382 = math.tanh %381 : vector<8x128xf32>
    %cst_122 = arith.constant 1.000000e+00 : f32
    %383 = vector.broadcast %cst_122 : f32 to vector<8x128xf32>
    %384 = arith.addf %383, %382 : vector<8x128xf32>
    %385 = arith.mulf %374, %384 : vector<8x128xf32>
    %386 = arith.truncf %385 : vector<8x128xf32> to vector<8x128xbf16>
    %c1_123 = arith.constant 1 : index
    %c0_124 = arith.constant 0 : index
    %c0_125 = arith.constant 0 : index
    %387 = vector.load %arg7[%c1_123, %c0_124, %c0_125] : memref<2x128x64xbf16, #tpu.memory_space<vmem>>, vector<1x128x64xbf16>
    %388 = vector.shape_cast %387 : vector<1x128x64xbf16> to vector<128x64xbf16>
    %cst_126 = arith.constant dense<0.000000e+00> : vector<8x64xf32>
    %389 = tpu.matmul %386, %388, %cst_126 {dimension_numbers = #tpu.dot_dimension_numbers<[1], [0], [0], [1], [0, 0, 1, 1], [], []>} : vector<8x128xbf16>, vector<128x64xbf16>, vector<8x64xf32> -> vector<8x64xf32>
    %390 = vector.broadcast %228 : vector<1x64xf32> to vector<8x64xf32>
    %391 = arith.addf %389, %390 : vector<8x64xf32>
    %392 = arith.addf %366, %391 : vector<8x64xf32>
    %cst_127 = arith.constant dense<0.000000e+00> : vector<8xf32>
    %393 = vector.multi_reduction <add>, %392, %cst_127 [1] : vector<8x64xf32> to vector<8xf32>
    %394 = vector.shape_cast %393 : vector<8xf32> to vector<8x1xf32>
    %cst_128 = arith.constant 6.400000e+01 : f32
    %395 = vector.broadcast %cst_128 : f32 to vector<8x1xf32>
    %396 = arith.divf %394, %395 : vector<8x1xf32>
    %397 = vector.broadcast %396 : vector<8x1xf32> to vector<8x64xf32>
    %398 = arith.subf %392, %397 : vector<8x64xf32>
    %399 = arith.mulf %398, %398 : vector<8x64xf32>
    %cst_129 = arith.constant dense<0.000000e+00> : vector<8xf32>
    %400 = vector.multi_reduction <add>, %399, %cst_129 [1] : vector<8x64xf32> to vector<8xf32>
    %401 = vector.shape_cast %400 : vector<8xf32> to vector<8x1xf32>
    %cst_130 = arith.constant 6.400000e+01 : f32
    %402 = vector.broadcast %cst_130 : f32 to vector<8x1xf32>
    %403 = arith.divf %401, %402 : vector<8x1xf32>
    %404 = vector.broadcast %396 : vector<8x1xf32> to vector<8x64xf32>
    %405 = arith.subf %392, %404 : vector<8x64xf32>
    %cst_131 = arith.constant 9.99999996E-13 : f32
    %406 = vector.broadcast %cst_131 : f32 to vector<8x1xf32>
    %407 = arith.addf %403, %406 : vector<8x1xf32>
    %408 = math.rsqrt %407 : vector<8x1xf32>
    %409 = vector.broadcast %408 : vector<8x1xf32> to vector<8x64xf32>
    %410 = arith.mulf %405, %409 : vector<8x64xf32>
    %411 = vector.broadcast %229 : vector<1x64xf32> to vector<8x64xf32>
    %412 = arith.mulf %410, %411 : vector<8x64xf32>
    %413 = vector.broadcast %230 : vector<1x64xf32> to vector<8x64xf32>
    %414 = arith.addf %412, %413 : vector<8x64xf32>
    %c0_132 = arith.constant 0 : index
    %c0_133 = arith.constant 0 : index
    %415 = vector.load %arg9[%c0_132, %c0_133] : memref<8x64xf32, #tpu.memory_space<vmem>>, vector<8x64xf32>
    tpu.vector_store %arg9[%c0_132, %c0_133], %414 {strides = array<i32>} : memref<8x64xf32, #tpu.memory_space<vmem>>, vector<8x64xf32>,
    return
  }
  func.func @transform_0(%arg0: i32) -> (i32, i32) {
    %c0_i32 = arith.constant 0 : i32
    %c0_i32_0 = arith.constant 0 : i32
    return %arg0, %c0_i32 : i32, i32
  }
  func.func @transform_1(%arg0: i32) -> (i32, i32, i32) {
    %c0_i32 = arith.constant 0 : i32
    %c0_i32_0 = arith.constant 0 : i32
    %c0_i32_1 = arith.constant 0 : i32
    return %arg0, %c0_i32, %c0_i32_0 : i32, i32, i32
  }
  func.func @transform_2(%arg0: i32) -> (i32, i32) {
    %c0_i32 = arith.constant 0 : i32
    %c0_i32_0 = arith.constant 0 : i32
    %c0_i32_1 = arith.constant 0 : i32
    return %c0_i32, %c0_i32_0 : i32, i32
  }
  func.func @transform_3(%arg0: i32) -> (i32, i32, i32) {
    %c0_i32 = arith.constant 0 : i32
    %c0_i32_0 = arith.constant 0 : i32
    %c0_i32_1 = arith.constant 0 : i32
    %c0_i32_2 = arith.constant 0 : i32
    return %c0_i32, %c0_i32_0, %c0_i32_1 : i32, i32, i32
  }
  func.func @transform_4(%arg0: i32) -> (i32, i32, i32) {
    %c0_i32 = arith.constant 0 : i32
    %c0_i32_0 = arith.constant 0 : i32
    %c0_i32_1 = arith.constant 0 : i32
    %c0_i32_2 = arith.constant 0 : i32
    return %c0_i32, %c0_i32_0, %c0_i32_1 : i32, i32, i32
  }
  func.func @transform_5(%arg0: i32) -> (i32, i32, i32) {
    %c0_i32 = arith.constant 0 : i32
    %c0_i32_0 = arith.constant 0 : i32
    %c0_i32_1 = arith.constant 0 : i32
    %c0_i32_2 = arith.constant 0 : i32
    return %c0_i32, %c0_i32_0, %c0_i32_1 : i32, i32, i32
  }
  func.func @transform_6(%arg0: i32) -> (i32, i32, i32) {
    %c0_i32 = arith.constant 0 : i32
    %c0_i32_0 = arith.constant 0 : i32
    %c0_i32_1 = arith.constant 0 : i32
    %c0_i32_2 = arith.constant 0 : i32
    return %c0_i32, %c0_i32_0, %c0_i32_1 : i32, i32, i32
  }
  func.func @transform_7(%arg0: i32) -> (i32, i32, i32) {
    %c0_i32 = arith.constant 0 : i32
    %c0_i32_0 = arith.constant 0 : i32
    %c0_i32_1 = arith.constant 0 : i32
    %c0_i32_2 = arith.constant 0 : i32
    return %c0_i32, %c0_i32_0, %c0_i32_1 : i32, i32, i32
  }
  func.func @transform_8(%arg0: i32) -> (i32, i32) {
    %c0_i32 = arith.constant 0 : i32
    %c0_i32_0 = arith.constant 0 : i32
    return %arg0, %c0_i32 : i32, i32
  }
}

</mosaic_0001>

<llo_original>
// kernel: tpu_custom_call.1
$region0: #{tpu_custom_call.1}
  #allocation0 [shape = 'u32[]', space=smem, size = 0x4, offset = 0x4, fixed_abs, tag = 'smem constant byte address 0x4 - core index']
  #allocation1 [shape = 'u32[144,128]{1,0:T(1,128)}', space=vmem, size = 0x12000, scoped, tag = 'internal scratch']
  %s0 = inlined_call_operand.hbm [shape: f32[16,64], index: 0, kind: input, shape index: {}]
  %s1 = inlined_call_operand.vmem [shape: f32[2,1,8], index: 1, kind: input, shape index: {}]
  %s2 = inlined_call_operand.hbm [shape: f32[8,64], index: 2, kind: input, shape index: {}]
  %s3 = inlined_call_operand.vmem [shape: bf16[2,64,192], index: 3, kind: input, shape index: {}]
  %s4 = inlined_call_operand.vmem [shape: bf16[2,64,64], index: 4, kind: input, shape index: {}]
  %s5 = inlined_call_operand.hbm [shape: bf16[2,64,128], index: 5, kind: input, shape index: {}]
  %s6 = inlined_call_operand.vmem [shape: bf16[2,128,64], index: 6, kind: input, shape index: {}]
  %s7 = inlined_call_operand.hbm [shape: f32[2,8,192], index: 7, kind: input, shape index: {}]
  %s8 = inlined_call_operand.hbm [shape: f32[16,64], index: 8, kind: output, shape index: {}]
  %s9 = sld [smem:[#allocation0]]
  $region81: #{tpu_custom_call.1} parent=0
    _
  %s11 = ssub.s32 1, %s9
  %s12 = scalar_select 0, %s11, %s9
  $region1: #{tpu_custom_call.1} parent=0
    #allocation2 [shape = 'u8[8192]{0}', space=vmem, size = 0x2000, scoped, tag = 'input window, operand 0']
    #allocation3 [shape = 's32[2]{0}', space=sflag, size = 0x8, scoped, tag = 'scoped memory for tpu_custom_call.1']
    #allocation4 [shape = 's32[2]{0}', space=sflag, size = 0x8, scoped, tag = 'scoped memory for tpu_custom_call.1']
    #allocation5 [shape = 'u8[4096]{0}', space=vmem, size = 0x1000, scoped, tag = 'input window, operand 2, single buffered']
    #allocation6 [shape = 's32[1]{0}', space=sflag, size = 0x4, scoped, tag = 'scoped memory for tpu_custom_call.1']
    #allocation7 [shape = 'u8[32768]{0}', space=vmem, size = 0x8000, scoped, tag = 'input window, operand 5, single buffered']
    #allocation8 [shape = 'u8[16384]{0}', space=vmem, size = 0x4000, scoped, tag = 'input window, operand 7, single buffered']
    #allocation9 [shape = 's32[1]{0}', space=sflag, size = 0x4, scoped, tag = 'scoped memory for tpu_custom_call.1']
    #allocation10 [shape = 'u8[8192]{0}', space=vmem, size = 0x2000, scoped, tag = 'output window, operand 0']
    %13 = vsyncpa [#allocation3], 0
    %s14 = scalar_lea.sflag [#allocation3], 1
    %15 = vsyncpa %s14, 0
    %16 = vsyncpa [#allocation6], 0
    %17 = vsyncpa [#allocation9], 0
    %18 = vsyncpa [#allocation4], 0
    %s19 = scalar_lea.sflag [#allocation4], 1
    %20 = vsyncpa %s19, 0
    loop: start=0, step=1, limit=4
    $region2: #{tpu_custom_call.1} parent=1 // loop_pre_header
      _
    $region3: #{tpu_custom_call.1} parent=1 // loop_header
      %s22 = sphi 0, %s26
      %p23 = scmp.ge.s32.totalorder %s22, 4
      %s32 = sphi 0, %s34
      %s35 = sphi 0, %s32
      %s36 = sphi 0, %s35
      %s52 = sphi 0, %s36
      %s58 = sphi 0, %s60
      %s61 = sphi 0, %s58
      %s62 = sphi 0, %s61
      %s78 = sphi 0, %s62
      %s82 = sphi 0, %s82
      %s84 = sphi 0, %s82
      %s85 = sphi 0, %s84
      %s99 = sphi 0, %s85
      %s103 = sphi 0, %s103
      %s105 = sphi 0, %s103
      %s106 = sphi 0, %s105
      %s120 = sphi 0, %s106
      %s124 = sphi 0, %s124
      %s126 = sphi 0, %s124
      %s127 = sphi 0, %s126
      %s141 = sphi 0, %s127
      %s145 = sphi 0, %s145
      %s147 = sphi 0, %s145
      %s148 = sphi 0, %s147
      %s162 = sphi 0, %s148
      %s166 = sphi 0, %s166
      %s168 = sphi 0, %s166
      %s169 = sphi 0, %s168
      %s183 = sphi 0, %s169
      %s187 = sphi 0, %s187
      %s189 = sphi 0, %s187
      %s190 = sphi 0, %s189
      %s204 = sphi 0, %s190
      %s210 = sphi 0, %s212
      %s213 = sphi 0, %s210
      %s214 = sphi 0, %s213
      %s230 = sphi 0, %s214
    $region4: #{tpu_custom_call.1} parent=1 // loop_header_branch
      %25 = sbr.rel (%p23) target = $region8
    $region5: #{tpu_custom_call.1} parent=1 // loop_body
      %s27 = ssub.s32 %s22, 1
      %s28 = ssub.s32 %s22, 2
      %s29 = sadd.s32 %s22, 1
      %s30 = ssub.s32 %s22, %s29
      %p31 = scmp.eq.s32.totalorder %s30, 0
      %s33 = sadd.s32 %s32, 1
      %s34 = scalar_select %p31, %s32, %s33
      %p37 = pneg %p31
      %p38 = scmp.eq.s32.totalorder %s22, 1
      %p39 = por %p37, %p38
      %p40 = scmp.ne.s32.totalorder %s32, %s35
      %p41 = scmp.eq.s32.totalorder %s22, 0
      %p42 = por %p40, %p41
      %p43 = scmp.ne.s32.totalorder %s32, %s35
      %p44 = scmp.eq.s32.totalorder %s27, 1
      %p45 = por %p43, %p44
      %p46 = scmp.ne.s32.totalorder %s35, %s36
      %p47 = scmp.eq.s32.totalorder %s27, 0
      %p48 = por %p46, %p47
      %p49 = scmp.ne.s32.totalorder %s35, %s36
      %p50 = scmp.eq.s32.totalorder %s28, 1
      %p51 = por %p49, %p50
      %p53 = scmp.ne.s32.totalorder %s36, %s52
      %p54 = scmp.eq.s32.totalorder %s28, 0
      %p55 = por %p53, %p54
      %s56 = ssub.s32 %s22, %s29
      %p57 = scmp.eq.s32.totalorder %s56, 0
      %s59 = sadd.s32 %s58, 1
      %s60 = scalar_select %p57, %s58, %s59
      %p63 = pneg %p57
      %p64 = scmp.eq.s32.totalorder %s22, 1
      %p65 = por %p63, %p64
      %p66 = scmp.ne.s32.totalorder %s58, %s61
      %p67 = scmp.eq.s32.totalorder %s22, 0
      %p68 = por %p66, %p67
      %p69 = scmp.ne.s32.totalorder %s58, %s61
      %p70 = scmp.eq.s32.totalorder %s27, 1
      %p71 = por %p69, %p70
      %p72 = scmp.ne.s32.totalorder %s61, %s62
      %p73 = scmp.eq.s32.totalorder %s27, 0
      %p74 = por %p72, %p73
      %p75 = scmp.ne.s32.totalorder %s61, %s62
      %p76 = scmp.eq.s32.totalorder %s28, 1
      %p77 = por %p75, %p76
      %p79 = scmp.ne.s32.totalorder %s62, %s78
      %p80 = scmp.eq.s32.totalorder %s28, 0
      %p81 = por %p79, %p80
      %s83 = sadd.s32 %s82, 1
      %p86 = scmp.eq.s32.totalorder %s22, 1
      %p87 = scmp.ne.s32.totalorder %s82, %s84
      %p88 = scmp.eq.s32.totalorder %s22, 0
      %p89 = por %p87, %p88
      %p90 = scmp.ne.s32.totalorder %s82, %s84
      %p91 = scmp.eq.s32.totalorder %s27, 1
      %p92 = por %p90, %p91
      %p93 = scmp.ne.s32.totalorder %s84, %s85
      %p94 = scmp.eq.s32.totalorder %s27, 0
      %p95 = por %p93, %p94
      %p96 = scmp.ne.s32.totalorder %s84, %s85
      %p97 = scmp.eq.s32.totalorder %s28, 1
      %p98 = por %p96, %p97
      %p100 = scmp.ne.s32.totalorder %s85, %s99
      %p101 = scmp.eq.s32.totalorder %s28, 0
      %p102 = por %p100, %p101
      %s104 = sadd.s32 %s103, 1
      %p107 = scmp.eq.s32.totalorder %s22, 1
      %p108 = scmp.ne.s32.totalorder %s103, %s105
      %p109 = scmp.eq.s32.totalorder %s22, 0
      %p110 = por %p108, %p109
      %p111 = scmp.ne.s32.totalorder %s103, %s105
      %p112 = scmp.eq.s32.totalorder %s27, 1
      %p113 = por %p111, %p112
      %p114 = scmp.ne.s32.totalorder %s105, %s106
      %p115 = scmp.eq.s32.totalorder %s27, 0
      %p116 = por %p114, %p115
      %p117 = scmp.ne.s32.totalorder %s105, %s106
      %p118 = scmp.eq.s32.totalorder %s28, 1
      %p119 = por %p117, %p118
      %p121 = scmp.ne.s32.totalorder %s106, %s120
      %p122 = scmp.eq.s32.totalorder %s28, 0
      %p123 = por %p121, %p122
      %s125 = sadd.s32 %s124, 1
      %p128 = scmp.eq.s32.totalorder %s22, 1
      %p129 = scmp.ne.s32.totalorder %s124, %s126
      %p130 = scmp.eq.s32.totalorder %s22, 0
      %p131 = por %p129, %p130
      %p132 = scmp.ne.s32.totalorder %s124, %s126
      %p133 = scmp.eq.s32.totalorder %s27, 1
      %p134 = por %p132, %p133
      %p135 = scmp.ne.s32.totalorder %s126, %s127
      %p136 = scmp.eq.s32.totalorder %s27, 0
      %p137 = por %p135, %p136
      %p138 = scmp.ne.s32.totalorder %s126, %s127
      %p139 = scmp.eq.s32.totalorder %s28, 1
      %p140 = por %p138, %p139
      %p142 = scmp.ne.s32.totalorder %s127, %s141
      %p143 = scmp.eq.s32.totalorder %s28, 0
      %p144 = por %p142, %p143
      %s146 = sadd.s32 %s145, 1
      %p149 = scmp.eq.s32.totalorder %s22, 1
      %p150 = scmp.ne.s32.totalorder %s145, %s147
      %p151 = scmp.eq.s32.totalorder %s22, 0
      %p152 = por %p150, %p151
      %p153 = scmp.ne.s32.totalorder %s145, %s147
      %p154 = scmp.eq.s32.totalorder %s27, 1
      %p155 = por %p153, %p154
      %p156 = scmp.ne.s32.totalorder %s147, %s148
      %p157 = scmp.eq.s32.totalorder %s27, 0
      %p158 = por %p156, %p157
      %p159 = scmp.ne.s32.totalorder %s147, %s148
      %p160 = scmp.eq.s32.totalorder %s28, 1
      %p161 = por %p159, %p160
      %p163 = scmp.ne.s32.totalorder %s148, %s162
      %p164 = scmp.eq.s32.totalorder %s28, 0
      %p165 = por %p163, %p164
      %s167 = sadd.s32 %s166, 1
      %p170 = scmp.eq.s32.totalorder %s22, 1
      %p171 = scmp.ne.s32.totalorder %s166, %s168
      %p172 = scmp.eq.s32.totalorder %s22, 0
      %p173 = por %p171, %p172
      %p174 = scmp.ne.s32.totalorder %s166, %s168
      %p175 = scmp.eq.s32.totalorder %s27, 1
      %p176 = por %p174, %p175
      %p177 = scmp.ne.s32.totalorder %s168, %s169
      %p178 = scmp.eq.s32.totalorder %s27, 0
      %p179 = por %p177, %p178
      %p180 = scmp.ne.s32.totalorder %s168, %s169
      %p181 = scmp.eq.s32.totalorder %s28, 1
      %p182 = por %p180, %p181
      %p184 = scmp.ne.s32.totalorder %s169, %s183
      %p185 = scmp.eq.s32.totalorder %s28, 0
      %p186 = por %p184, %p185
      %s188 = sadd.s32 %s187, 1
      %p191 = scmp.eq.s32.totalorder %s22, 1
      %p192 = scmp.ne.s32.totalorder %s187, %s189
      %p193 = scmp.eq.s32.totalorder %s22, 0
      %p194 = por %p192, %p193
      %p195 = scmp.ne.s32.totalorder %s187, %s189
      %p196 = scmp.eq.s32.totalorder %s27, 1
      %p197 = por %p195, %p196
      %p198 = scmp.ne.s32.totalorder %s189, %s190
      %p199 = scmp.eq.s32.totalorder %s27, 0
      %p200 = por %p198, %p199
      %p201 = scmp.ne.s32.totalorder %s189, %s190
      %p202 = scmp.eq.s32.totalorder %s28, 1
      %p203 = por %p201, %p202
      %p205 = scmp.ne.s32.totalorder %s190, %s204
      %p206 = scmp.eq.s32.totalorder %s28, 0
      %p207 = por %p205, %p206
      %s208 = ssub.s32 %s22, %s29
      %p209 = scmp.eq.s32.totalorder %s208, 0
      %s211 = sadd.s32 %s210, 1
      %s212 = scalar_select %p209, %s210, %s211
      %p215 = pneg %p209
      %p216 = scmp.eq.s32.totalorder %s22, 1
      %p217 = por %p215, %p216
      %p218 = scmp.ne.s32.totalorder %s210, %s213
      %p219 = scmp.eq.s32.totalorder %s22, 0
      %p220 = por %p218, %p219
      %p221 = scmp.ne.s32.totalorder %s210, %s213
      %p222 = scmp.eq.s32.totalorder %s27, 1
      %p223 = por %p221, %p222
      %p224 = scmp.ne.s32.totalorder %s213, %s214
      %p225 = scmp.eq.s32.totalorder %s27, 0
      %p226 = por %p224, %p225
      %p227 = scmp.ne.s32.totalorder %s213, %s214
      %p228 = scmp.eq.s32.totalorder %s28, 1
      %p229 = por %p227, %p228
      %p231 = scmp.ne.s32.totalorder %s214, %s230
      %p232 = scmp.eq.s32.totalorder %s28, 0
      %p233 = por %p231, %p232
      %p234 = scmp.le.s32.totalorder 1, %s22
      %p235 = scmp.lt.s32.totalorder %s22, 3
      %p236 = pnand %p234, %p235
      %p237 = pneg %p236
      // Predicated region
      $region9: #{tpu_custom_call.1} parent=5 // pred_check
        _
      $region10: #{tpu_custom_call.1} parent=5 // pred_check_branch
        %239 = sbr.rel (%p236) target = $region12
      $region11: #{tpu_custom_call.1} parent=5 // pred_region
        %s240 = ssub.s32 %s22, 1
        // Predicated region
        $region13: #{tpu_custom_call.1} parent=11 // pred_check
          %p241 = pneg %p95
        $region14: #{tpu_custom_call.1} parent=11 // pred_check_branch
          %243 = sbr.rel (%p241) target = $region16
        $region15: #{tpu_custom_call.1} parent=11 // pred_region
          %s245 = ssub.s32 128, 128
          %246 = vsyncadd [#allocation6], %s245
          %s248 = sshll.u32 [#allocation5], 4
          %s249 = int_to_ptr.vmem [resolvable:$true] %s248
          %251 = dma.hbm_to_vmem [thread:$0]  %s2, 128, %s249, [#allocation6]
        $region16: #{tpu_custom_call.1} parent=11 // pred_fallthru
          _
        // Predicated region
        $region17: #{tpu_custom_call.1} parent=11 // pred_check
          %p252 = pneg %p116
        $region18: #{tpu_custom_call.1} parent=11 // pred_check_branch
          %254 = sbr.rel (%p252) target = $region20
        $region19: #{tpu_custom_call.1} parent=11 // pred_region
          _
        $region20: #{tpu_custom_call.1} parent=11 // pred_fallthru
          _
        // Predicated region
        $region21: #{tpu_custom_call.1} parent=11 // pred_check
          %p255 = pneg %p137
        $region22: #{tpu_custom_call.1} parent=11 // pred_check_branch
          %257 = sbr.rel (%p255) target = $region24
        $region23: #{tpu_custom_call.1} parent=11 // pred_region
          _
        $region24: #{tpu_custom_call.1} parent=11 // pred_fallthru
          _
        // Predicated region
        $region25: #{tpu_custom_call.1} parent=11 // pred_check
          %p258 = pneg %p158
        $region26: #{tpu_custom_call.1} parent=11 // pred_check_branch
          %260 = sbr.rel (%p258) target = $region28
        $region27: #{tpu_custom_call.1} parent=11 // pred_region
          %s262 = ssub.s32 1024, 1024
          %263 = vsyncadd [#allocation6], %s262
          %s264 = sshll.u32 [#allocation7], 4
          %s265 = int_to_ptr.vmem [resolvable:$true] %s264
          %270 = dma.hbm_to_vmem [thread:$0]  %s5, 1024, %s265, [#allocation6], 64, 64, 4
        $region28: #{tpu_custom_call.1} parent=11 // pred_fallthru
          _
        // Predicated region
        $region29: #{tpu_custom_call.1} parent=11 // pred_check
          %p271 = pneg %p179
        $region30: #{tpu_custom_call.1} parent=11 // pred_check_branch
          %273 = sbr.rel (%p271) target = $region32
        $region31: #{tpu_custom_call.1} parent=11 // pred_region
          _
        $region32: #{tpu_custom_call.1} parent=11 // pred_fallthru
          _
        // Predicated region
        $region33: #{tpu_custom_call.1} parent=11 // pred_check
          %p274 = pneg %p200
        $region34: #{tpu_custom_call.1} parent=11 // pred_check_branch
          %276 = sbr.rel (%p274) target = $region36
        $region35: #{tpu_custom_call.1} parent=11 // pred_region
          %s278 = ssub.s32 512, 512
          %279 = vsyncadd [#allocation9], %s278
          %s280 = sshll.u32 [#allocation8], 4
          %s281 = int_to_ptr.vmem [resolvable:$true] %s280
          %286 = dma.hbm_to_vmem [thread:$0]  %s7, 512, %s281, [#allocation9], 256, 256, 16
        $region36: #{tpu_custom_call.1} parent=11 // pred_fallthru
          _
      $region12: #{tpu_custom_call.1} parent=5 // pred_fallthru
        _
      %p287 = scmp.lt.s32.totalorder %s22, 2
      // Predicated region
      $region37: #{tpu_custom_call.1} parent=5 // pred_check
        %p288 = pneg %p287
      $region38: #{tpu_custom_call.1} parent=5 // pred_check_branch
        %290 = sbr.rel (%p288) target = $region40
      $region39: #{tpu_custom_call.1} parent=5 // pred_region
        // Predicated region
        $region41: #{tpu_custom_call.1} parent=39 // pred_check
          %p291 = pneg %p42
        $region42: #{tpu_custom_call.1} parent=39 // pred_check_branch
          %293 = sbr.rel (%p291) target = $region44
        $region43: #{tpu_custom_call.1} parent=39 // pred_region
          %s294 = sand.u32 %s32, 1
          %s295 = scalar_lea.sflag [#allocation3], %s294
          %s296 = sand.u32 %s32, 1
          %s297 = smul.addr %s296, 8
          %s298 = scalar_lea.vmem [#allocation2], %s297
          %s300 = ssub.s32 128, 128
          %301 = vsyncadd %s295, %s300
          %s302 = smul.addr %s22, 128
          %s303 = scalar_lea.hbm %s0, %s302
          %s305 = sshll.u32 %s298, 4
          %s306 = int_to_ptr.vmem [resolvable:$true] %s305
          %308 = dma.hbm_to_vmem [thread:$0]  %s303, 128, %s306, %s295
        $region44: #{tpu_custom_call.1} parent=39 // pred_fallthru
          _
        // Predicated region
        $region45: #{tpu_custom_call.1} parent=39 // pred_check
          %p309 = pneg %p68
        $region46: #{tpu_custom_call.1} parent=39 // pred_check_branch
          %311 = sbr.rel (%p309) target = $region48
        $region47: #{tpu_custom_call.1} parent=39 // pred_region
          %p312 = scmp.lt.s32.totalorder %s22, 1
          %s313 = scalar_select %p312, %s22, 1
          %s314 = scalar_lea.vmem %s1, %s313
        $region48: #{tpu_custom_call.1} parent=39 // pred_fallthru
          _
      $region40: #{tpu_custom_call.1} parent=5 // pred_fallthru
        _
      %p315 = scmp.le.s32.totalorder 1, %s22
      %p316 = scmp.lt.s32.totalorder %s22, 3
      %p317 = pnand %p315, %p316
      %p318 = pneg %p317
      // Predicated region
      $region49: #{tpu_custom_call.1} parent=5 // pred_check
        _
      $region50: #{tpu_custom_call.1} parent=5 // pred_check_branch
        %320 = sbr.rel (%p317) target = $region52
      $region51: #{tpu_custom_call.1} parent=5 // pred_region
        %s321 = ssub.s32 %s22, 1
        %s322 = sand.u32 %s35, 1
        %s323 = scalar_lea.sflag [#allocation3], %s322
        %s324 = sand.u32 %s35, 1
        %s325 = smul.addr %s324, 8
        %s326 = scalar_lea.vmem [#allocation2], %s325
        // Predicated region
        $region53: #{tpu_custom_call.1} parent=51 // pred_check
          %p327 = pneg %p48
        $region54: #{tpu_custom_call.1} parent=51 // pred_check_branch
          %329 = sbr.rel (%p327) target = $region56
        $region55: #{tpu_custom_call.1} parent=51 // pred_region
          %330 = dma.done %s323, 128
        $region56: #{tpu_custom_call.1} parent=51 // pred_fallthru
          _
        // Predicated region
        $region57: #{tpu_custom_call.1} parent=51 // pred_check
          %p331 = pneg %p95
        $region58: #{tpu_custom_call.1} parent=51 // pred_check_branch
          %333 = sbr.rel (%p331) target = $region60
        $region59: #{tpu_custom_call.1} parent=51 // pred_region
          %334 = dma.done [#allocation6], 128
        $region60: #{tpu_custom_call.1} parent=51 // pred_fallthru
          _
        // Predicated region
        $region61: #{tpu_custom_call.1} parent=51 // pred_check
          %p335 = pneg %p158
        $region62: #{tpu_custom_call.1} parent=51 // pred_check_branch
          %337 = sbr.rel (%p335) target = $region64
        $region63: #{tpu_custom_call.1} parent=51 // pred_region
          %338 = dma.done [#allocation6], 1024
        $region64: #{tpu_custom_call.1} parent=51 // pred_fallthru
          _
        // Predicated region
        $region65: #{tpu_custom_call.1} parent=51 // pred_check
          %p339 = pneg %p200
        $region66: #{tpu_custom_call.1} parent=51 // pred_check_branch
          %341 = sbr.rel (%p339) target = $region68
        $region67: #{tpu_custom_call.1} parent=51 // pred_region
          %342 = dma.done [#allocation9], 512
        $region68: #{tpu_custom_call.1} parent=51 // pred_fallthru
          _
        %s343 = sand.u32 %s35, 1
        %s344 = scalar_lea.sflag [#allocation3], %s343
        %s345 = sand.u32 %s35, 1
        %s346 = smul.addr %s345, 8
        %s347 = scalar_lea.vmem [#allocation2], %s346
        %p348 = pneg %p48
        %p349 = pneg %p45
        %p350 = scmp.lt.s32.totalorder %s27, 1
        %s351 = scalar_select %p350, %s27, 1
        %s352 = scalar_lea.vmem %s1, %s351
        %p353 = pneg %p74
        %p354 = pneg %p71
        %p355 = pneg %p95
        %p356 = pneg %p92
        %p357 = pneg %p116
        %p358 = pneg %p113
        %p359 = pneg %p137
        %p360 = pneg %p134
        %p361 = pneg %p158
        %p362 = pneg %p155
        %p363 = pneg %p179
        %p364 = pneg %p176
        %p365 = pneg %p200
        %p366 = pneg %p197
        %p367 = pneg %p226
        %p368 = pneg %p223
        %s369 = sand.u32 %s213, 1
        %s370 = scalar_lea.sflag [#allocation4], %s369
        %s371 = sand.u32 %s213, 1
        %s372 = smul.addr %s371, 8
        %s373 = scalar_lea.vmem [#allocation10], %s372
        %p374 = scmp.lt.s32.totalorder %s27, 1
        %s375 = scalar_select %p374, %s27, 1
        %s376 = scalar_lea.vmem %s1, %s375
        %v378 = vld [vmem:[%s376] sm:$0x1]
        %v379 = vld [vmem:[%s326] sm:$0xff]
        %v380 = vld [vmem:[#allocation5] sm:$0x1]
        %v381 = vld [vmem:[#allocation5 + $0x1] sm:$0x1]
        %vm382 = vcmask 523264
        %v383 = vsel %vm382, %v379, 0.0
        %384 = vadd.xlane.f32.xlu0 %v383
        %v385 = vpop.xlane.xlu0 %384
        %v386 = vrcp.pop 64.0
        %v387 = vmul.f32 %v385, %v386
        %v388 = vsub.f32 %v379, %v387
        %v389 = vmul.f32 %v388, %v388
        %v390 = vsel %vm382, %v389, 0.0
        %391 = vadd.xlane.f32.xlu0 %v390
        %v392 = vpop.xlane.xlu0 %391
        %v393 = vmul.f32 %v392, %v386
        %v394 = vadd.f32 %v393, 1e-12
        %v395 = vrsqrt.pop %v394
        %v396 = vmul.f32 %v388, %v395
        %v397 = vlaneseq
        %v398 = vshrl.u32 %v397, 7
        %v399 = vsub.s32 0, %v398
        %v400 = vrot.slane %v380, %v399
        %v401 = vmul.f32 %v396, %v400
        %v402 = vlaneseq
        %v403 = vshrl.u32 %v402, 7
        %v404 = vsub.s32 0, %v403
        %v405 = vrot.slane %v381, %v404
        %v406 = vadd.f32 %v401, %v405
        %v407 = vld [vmem:[#allocation8] sm:$0xff]
        %v408 = vld [vmem:[#allocation8 + $0x8] sm:$0xff]
        %v409 = vpack.c.bf16 %v406, %v406
        %v410 = vld [vmem:[%s3] sm:$0xff]
        %v411 = vld [vmem:[%s3 + $0x8] sm:$0xff]
        %v412 = vld [vmem:[%s3 + $0x10] sm:$0xff]
        %v413 = vld [vmem:[%s3 + $0x18] sm:$0xff]
        %v414 = vld [vmem:[%s3 + $0x20] sm:$0xff]
        %v415 = vld [vmem:[%s3 + $0x28] sm:$0xff]
        %v416 = vld [vmem:[%s3 + $0x30] sm:$0xff]
        %v417 = vld [vmem:[%s3 + $0x38] sm:$0xff]
        %v418 = vlaneseq
        %v419 = vshrl.u32 %v418, 7
        %v420 = vsub.s32 0, %v419
        %v421 = vrot.slane %v407, %v420
        %v422 = vlaneseq
        %v423 = vshrl.u32 %v422, 7
        %v424 = vsub.s32 0, %v423
        %v425 = vrot.slane %v408, %v424
        %v434 = vunpack.c.l.b16 %v410
        %v435 = vunpack.c.h.b16 %v410
        %v436 = vunpack.c.l.b16 %v411
        %v437 = vunpack.c.h.b16 %v411
        %v438 = vunpack.c.l.b16 %v412
        %v439 = vunpack.c.h.b16 %v412
        %v440 = vunpack.c.l.b16 %v413
        %v441 = vunpack.c.h.b16 %v413
        %v442 = vunpack.c.l.b16 %v414
        %v443 = vunpack.c.h.b16 %v414
        %v444 = vunpack.c.l.b16 %v415
        %v445 = vunpack.c.h.b16 %v415
        %v446 = vunpack.c.l.b16 %v416
        %v447 = vunpack.c.h.b16 %v416
        %v448 = vunpack.c.l.b16 %v417
        %v449 = vunpack.c.h.b16 %v417
        %v450 = vpack.c.b16 %v436, %v434
        %v451 = vpack.c.b16 %v437, %v435
        %v452 = vpack.c.b16 %v440, %v438
        %v453 = vpack.c.b16 %v441, %v439
        %v454 = vpack.c.b16 %v444, %v442
        %v455 = vpack.c.b16 %v445, %v443
        %v456 = vpack.c.b16 %v448, %v446
        %v457 = vpack.c.b16 %v449, %v447
        %v467 = vsel %vm382, %v409, 0
        %469 = vmatprep.subr.bf16.mxu0 0
        %470 = vmatpush1.bf16.msra.mxu0 0
        %471 = vmatprep.subr.bf16.mxu0 0
        %472 = vmatpush1.bf16.msra.mxu0 0
        %473 = vmatprep.subr.bf16.mxu0 0
        %474 = vmatpush1.bf16.msra.mxu0 0
        %475 = vmatprep.subr.bf16.mxu0 0
        %476 = vmatpush1.bf16.msra.mxu0 0
        %477 = vmatprep.subr.bf16.mxu0 %v457
        %478 = vmatpush1.bf16.msra.mxu0 %v456
        %479 = vmatprep.subr.bf16.mxu0 %v455
        %480 = vmatpush1.bf16.msra.mxu0 %v454
        %481 = vmatprep.subr.bf16.mxu0 %v453
        %482 = vmatpush1.bf16.msra.mxu0 %v452
        %483 = vmatprep.subr.bf16.mxu0 %v451
        %484 = vmatpush1.bf16.msra.mxu0 %v450
        %485 = vmatprep.subr.bf16.mxu0 0
        %486 = vmatpush2.bf16.msra.mxu0 0
        %487 = vmatprep.subr.bf16.mxu0 0
        %488 = vmatpush2.bf16.msra.mxu0 0
        %489 = vmatprep.subr.bf16.mxu0 0
        %490 = vmatpush2.bf16.msra.mxu0 0
        %491 = vmatprep.subr.bf16.mxu0 0
        %492 = vmatpush2.bf16.msra.mxu0 0
        %493 = vmatprep.subr.bf16.mxu0 0
        %494 = vmatpush2.bf16.msra.mxu0 0
        %495 = vmatprep.subr.bf16.mxu0 0
        %496 = vmatpush2.bf16.msra.mxu0 0
        %497 = vmatprep.subr.bf16.mxu0 0
        %498 = vmatpush2.bf16.msra.mxu0 0
        %499 = vmatprep.subr.bf16.mxu0 0
        %500 = vmatpush2.bf16.msra.mxu0 0
        %501 = vmatprep.mubr.bf16.mxu0 0
        %502 = vmatmul.mubr.bf16.gmra.mxu0 %v467
        %v503 = vpop.f32.mrf.mxu0
        %v504 = vadd.f32 %v421, %v503
        %v505 = vpop.f32.mrf.mxu0
        %v506 = vadd.f32 %v425, %v505
        %v507 = vpop.f32.mrf.mxu0
        %v508 = vpop.f32.mrf.mxu0
        %509 = vdwg.mxu0
        %v510 = vpack.c.bf16 %v504, %v504
        %v511 = vpack.c.bf16 %v506, %v506
        %v513 = vlaneseq
        %v514 = vshrl.u32 %v513, 7
        %v515 = vsub.s32 0, %v514
        %v516 = vrot.slane %v378, %v515
        %519 = vrot.lane.b32.xlu0 %v510, 64
        %v520 = vpop.permute.xlu0 %519
        %vm521 = vcmask 130048
        %v523 = vsel %vm521, %v510, 0
        %v526 = vsel %vm521, %v520, 0
        %528 = vmatprep.subr.bf16.mxu0 0
        %529 = vmatpush1.bf16.xpose.msra.mxu0 0
        %530 = vmatprep.subr.bf16.mxu0 0
        %531 = vmatpush1.bf16.xpose.msra.mxu0 0
        %532 = vmatprep.subr.bf16.mxu0 0
        %533 = vmatpush1.bf16.xpose.msra.mxu0 0
        %534 = vmatprep.subr.bf16.mxu0 0
        %535 = vmatpush1.bf16.xpose.msra.mxu0 0
        %536 = vmatprep.subr.bf16.mxu0 0
        %537 = vmatpush1.bf16.xpose.msra.mxu0 0
        %538 = vmatprep.subr.bf16.mxu0 0
        %539 = vmatpush1.bf16.xpose.msra.mxu0 0
        %540 = vmatprep.subr.bf16.mxu0 0
        %541 = vmatpush1.bf16.xpose.msra.mxu0 0
        %542 = vmatprep.subr.bf16.mxu0 0
        %543 = vmatpush1.bf16.xpose.msra.mxu0 %v526
        %544 = vmatprep.subr.bf16.mxu0 0
        %545 = vmatpush2.bf16.xpose.msra.mxu0 0
        %546 = vmatprep.subr.bf16.mxu0 0
        %547 = vmatpush2.bf16.xpose.msra.mxu0 0
        %548 = vmatprep.subr.bf16.mxu0 0
        %549 = vmatpush2.bf16.xpose.msra.mxu0 0
        %550 = vmatprep.subr.bf16.mxu0 0
        %551 = vmatpush2.bf16.xpose.msra.mxu0 0
        %552 = vmatprep.subr.bf16.mxu0 0
        %553 = vmatpush2.bf16.xpose.msra.mxu0 0
        %554 = vmatprep.subr.bf16.mxu0 0
        %555 = vmatpush2.bf16.xpose.msra.mxu0 0
        %556 = vmatprep.subr.bf16.mxu0 0
        %557 = vmatpush2.bf16.xpose.msra.mxu0 0
        %558 = vmatprep.subr.bf16.mxu0 0
        %559 = vmatpush2.bf16.xpose.msra.mxu0 0
        %560 = vmatprep.mubr.bf16.mxu0 0
        %561 = vmatmul.mubr.bf16.gmra.mxu0 %v523
        %v562 = vpop.f32.mrf.mxu0
        %v563 = vadd.f32 %v516, %v562
        %v564 = vpop.f32.mrf.mxu0
        %v565 = vpop.f32.mrf.mxu0
        %v566 = vpop.f32.mrf.mxu0
        %567 = vdwg.mxu0
        %vm568 = vcmask 64512
        %v569 = vsel %vm568, %v563, -inf
        %570 = vmax.xlane.f32.xlu0 %v569
        %v571 = vpop.xlane.xlu0 %570
        %v572 = vsub.f32 %v563, %v571
        %v573 = vmul.f32 %v572, 1.442695
        %v574 = vpow.pop %v573
        %v575 = vsel %vm568, %v574, 0.0
        %576 = vadd.xlane.f32.xlu0 %v575
        %v577 = vpop.xlane.xlu0 %576
        %v578 = vrcp.pop %v577
        %v579 = vmul.f32 %v574, %v578
        %v580 = vpack.c.bf16 %v579, %v579
        %v582 = vsel %vm568, %v580, 0
        %vm584 = vcmask 1043456
        %v586 = vsel %vm584, %v511, 0
        %588 = vmatprep.subr.bf16.mxu0 0
        %589 = vmatpush1.bf16.msra.mxu0 0
        %590 = vmatprep.subr.bf16.mxu0 0
        %591 = vmatpush1.bf16.msra.mxu0 0
        %592 = vmatprep.subr.bf16.mxu0 0
        %593 = vmatpush1.bf16.msra.mxu0 0
        %594 = vmatprep.subr.bf16.mxu0 0
        %595 = vmatpush1.bf16.msra.mxu0 0
        %596 = vmatprep.subr.bf16.mxu0 0
        %597 = vmatpush1.bf16.msra.mxu0 0
        %598 = vmatprep.subr.bf16.mxu0 0
        %599 = vmatpush1.bf16.msra.mxu0 0
        %600 = vmatprep.subr.bf16.mxu0 0
        %601 = vmatpush1.bf16.msra.mxu0 0
        %602 = vmatprep.subr.bf16.mxu0 0
        %603 = vmatpush1.bf16.msra.mxu0 %v586
        %604 = vmatprep.subr.bf16.mxu0 0
        %605 = vmatpush2.bf16.msra.mxu0 0
        %606 = vmatprep.subr.bf16.mxu0 0
        %607 = vmatpush2.bf16.msra.mxu0 0
        %608 = vmatprep.subr.bf16.mxu0 0
        %609 = vmatpush2.bf16.msra.mxu0 0
        %610 = vmatprep.subr.bf16.mxu0 0
        %611 = vmatpush2.bf16.msra.mxu0 0
        %612 = vmatprep.subr.bf16.mxu0 0
        %613 = vmatpush2.bf16.msra.mxu0 0
        %614 = vmatprep.subr.bf16.mxu0 0
        %615 = vmatpush2.bf16.msra.mxu0 0
        %616 = vmatprep.subr.bf16.mxu0 0
        %617 = vmatpush2.bf16.msra.mxu0 0
        %618 = vmatprep.subr.bf16.mxu0 0
        %619 = vmatpush2.bf16.msra.mxu0 0
        %620 = vmatprep.mubr.bf16.mxu0 0
        %621 = vmatmul.mubr.bf16.gmra.mxu0 %v582
        %v622 = vpop.f32.mrf.mxu0
        %v623 = vadd.f32 0.0, %v622
        %v624 = vpop.f32.mrf.mxu0
        %v625 = vpop.f32.mrf.mxu0
        %v626 = vpop.f32.mrf.mxu0
        %627 = vdwg.mxu0
        %v628 = vpack.c.bf16 %v623, %v623
        %v629 = vld [vmem:[%s4] sm:$0xf]
        %v630 = vld [vmem:[%s4 + $0x4] sm:$0xf]
        %631 = vrot.lane.b32.xlu0 %v510, 112
        %v632 = vpop.permute.xlu0 %631
        %633 = vrot.lane.b32.xlu0 %v510, 48
        %v634 = vpop.permute.xlu0 %633
        %v636 = vsel %vm521, %v632, 0
        %v639 = vsel %vm521, %v634, 0
        %641 = vmatprep.subr.bf16.mxu0 0
        %642 = vmatpush1.bf16.xpose.msra.mxu0 0
        %643 = vmatprep.subr.bf16.mxu0 0
        %644 = vmatpush1.bf16.xpose.msra.mxu0 0
        %645 = vmatprep.subr.bf16.mxu0 0
        %646 = vmatpush1.bf16.xpose.msra.mxu0 0
        %647 = vmatprep.subr.bf16.mxu0 0
        %648 = vmatpush1.bf16.xpose.msra.mxu0 0
        %649 = vmatprep.subr.bf16.mxu0 0
        %650 = vmatpush1.bf16.xpose.msra.mxu0 0
        %651 = vmatprep.subr.bf16.mxu0 0
        %652 = vmatpush1.bf16.xpose.msra.mxu0 0
        %653 = vmatprep.subr.bf16.mxu0 0
        %654 = vmatpush1.bf16.xpose.msra.mxu0 0
        %655 = vmatprep.subr.bf16.mxu0 0
        %656 = vmatpush1.bf16.xpose.msra.mxu0 %v639
        %657 = vmatprep.subr.bf16.mxu0 0
        %658 = vmatpush2.bf16.xpose.msra.mxu0 0
        %659 = vmatprep.subr.bf16.mxu0 0
        %660 = vmatpush2.bf16.xpose.msra.mxu0 0
        %661 = vmatprep.subr.bf16.mxu0 0
        %662 = vmatpush2.bf16.xpose.msra.mxu0 0
        %663 = vmatprep.subr.bf16.mxu0 0
        %664 = vmatpush2.bf16.xpose.msra.mxu0 0
        %665 = vmatprep.subr.bf16.mxu0 0
        %666 = vmatpush2.bf16.xpose.msra.mxu0 0
        %667 = vmatprep.subr.bf16.mxu0 0
        %668 = vmatpush2.bf16.xpose.msra.mxu0 0
        %669 = vmatprep.subr.bf16.mxu0 0
        %670 = vmatpush2.bf16.xpose.msra.mxu0 0
        %671 = vmatprep.subr.bf16.mxu0 0
        %672 = vmatpush2.bf16.xpose.msra.mxu0 0
        %673 = vmatprep.mubr.bf16.mxu0 0
        %674 = vmatmul.mubr.bf16.gmra.mxu0 %v636
        %v675 = vpop.f32.mrf.mxu0
        %v676 = vadd.f32 %v516, %v675
        %v677 = vpop.f32.mrf.mxu0
        %v678 = vpop.f32.mrf.mxu0
        %v679 = vpop.f32.mrf.mxu0
        %680 = vdwg.mxu0
        %v681 = vsel %vm568, %v676, -inf
        %682 = vmax.xlane.f32.xlu0 %v681
        %v683 = vpop.xlane.xlu0 %682
        %v684 = vsub.f32 %v676, %v683
        %v685 = vmul.f32 %v684, 1.442695
        %v686 = vpow.pop %v685
        %v687 = vsel %vm568, %v686, 0.0
        %688 = vadd.xlane.f32.xlu0 %v687
        %v689 = vpop.xlane.xlu0 %688
        %v690 = vrcp.pop %v689
        %v691 = vmul.f32 %v686, %v690
        %v692 = vpack.c.bf16 %v691, %v691
        %694 = vrot.lane.b32.xlu0 %v511, 112
        %v695 = vpop.permute.xlu0 %694
        %v697 = vsel %vm568, %v692, 0
        %v700 = vsel %vm584, %v695, 0
        %702 = vmatprep.subr.bf16.mxu0 0
        %703 = vmatpush1.bf16.msra.mxu0 0
        %704 = vmatprep.subr.bf16.mxu0 0
        %705 = vmatpush1.bf16.msra.mxu0 0
        %706 = vmatprep.subr.bf16.mxu0 0
        %707 = vmatpush1.bf16.msra.mxu0 0
        %708 = vmatprep.subr.bf16.mxu0 0
        %709 = vmatpush1.bf16.msra.mxu0 0
        %710 = vmatprep.subr.bf16.mxu0 0
        %711 = vmatpush1.bf16.msra.mxu0 0
        %712 = vmatprep.subr.bf16.mxu0 0
        %713 = vmatpush1.bf16.msra.mxu0 0
        %714 = vmatprep.subr.bf16.mxu0 0
        %715 = vmatpush1.bf16.msra.mxu0 0
        %716 = vmatprep.subr.bf16.mxu0 0
        %717 = vmatpush1.bf16.msra.mxu0 %v700
        %718 = vmatprep.subr.bf16.mxu0 0
        %719 = vmatpush2.bf16.msra.mxu0 0
        %720 = vmatprep.subr.bf16.mxu0 0
        %721 = vmatpush2.bf16.msra.mxu0 0
        %722 = vmatprep.subr.bf16.mxu0 0
        %723 = vmatpush2.bf16.msra.mxu0 0
        %724 = vmatprep.subr.bf16.mxu0 0
        %725 = vmatpush2.bf16.msra.mxu0 0
        %726 = vmatprep.subr.bf16.mxu0 0
        %727 = vmatpush2.bf16.msra.mxu0 0
        %728 = vmatprep.subr.bf16.mxu0 0
        %729 = vmatpush2.bf16.msra.mxu0 0
        %730 = vmatprep.subr.bf16.mxu0 0
        %731 = vmatpush2.bf16.msra.mxu0 0
        %732 = vmatprep.subr.bf16.mxu0 0
        %733 = vmatpush2.bf16.msra.mxu0 0
        %734 = vmatprep.mubr.bf16.mxu0 0
        %735 = vmatmul.mubr.bf16.gmra.mxu0 %v697
        %v736 = vpop.f32.mrf.mxu0
        %v737 = vadd.f32 0.0, %v736
        %v738 = vpop.f32.mrf.mxu0
        %v739 = vpop.f32.mrf.mxu0
        %v740 = vpop.f32.mrf.mxu0
        %741 = vdwg.mxu0
        %v742 = vpack.c.bf16 %v737, %v737
        %v743 = vld [vmem:[%s4 + $0x8] sm:$0xf]
        %v744 = vld [vmem:[%s4 + $0xc] sm:$0xf]
        %v747 = vunpack.c.l.b16 %v743
        %v748 = vunpack.c.l.b16 %v744
        %v749 = vpack.c.b16 %v748, %v747
        %v752 = vsel %vm521, %v742, 0
        %754 = vmatprep.subr.bf16.mxu0 0
        %755 = vmatpush1.bf16.msra.mxu0 0
        %756 = vmatprep.subr.bf16.mxu0 0
        %757 = vmatpush1.bf16.msra.mxu0 0
        %758 = vmatprep.subr.bf16.mxu0 0
        %759 = vmatpush1.bf16.msra.mxu0 0
        %760 = vmatprep.subr.bf16.mxu0 0
        %761 = vmatpush1.bf16.msra.mxu0 0
        %762 = vmatprep.subr.bf16.mxu0 0
        %763 = vmatpush1.bf16.msra.mxu0 0
        %764 = vmatprep.subr.bf16.mxu0 0
        %765 = vmatpush1.bf16.msra.mxu0 0
        %766 = vmatprep.subr.bf16.mxu0 0
        %767 = vmatpush1.bf16.msra.mxu0 0
        %768 = vmatprep.subr.bf16.mxu0 0
        %769 = vmatpush1.bf16.msra.mxu0 %v749
        %770 = vmatprep.subr.bf16.mxu0 0
        %771 = vmatpush2.bf16.msra.mxu0 0
        %772 = vmatprep.subr.bf16.mxu0 0
        %773 = vmatpush2.bf16.msra.mxu0 0
        %774 = vmatprep.subr.bf16.mxu0 0
        %775 = vmatpush2.bf16.msra.mxu0 0
        %776 = vmatprep.subr.bf16.mxu0 0
        %777 = vmatpush2.bf16.msra.mxu0 0
        %778 = vmatprep.subr.bf16.mxu0 0
        %779 = vmatpush2.bf16.msra.mxu0 0
        %780 = vmatprep.subr.bf16.mxu0 0
        %781 = vmatpush2.bf16.msra.mxu0 0
        %782 = vmatprep.subr.bf16.mxu0 0
        %783 = vmatpush2.bf16.msra.mxu0 0
        %784 = vmatprep.subr.bf16.mxu0 0
        %785 = vmatpush2.bf16.msra.mxu0 0
        %786 = vmatprep.mubr.bf16.mxu0 0
        %787 = vmatmul.mubr.bf16.gmra.mxu0 %v752
        %v788 = vpop.f32.mrf.mxu0
        %v789 = vadd.f32 0.0, %v788
        %v790 = vpop.f32.mrf.mxu0
        %v791 = vpop.f32.mrf.mxu0
        %v792 = vpop.f32.mrf.mxu0
        %793 = vdwg.mxu0
        %v796 = vunpack.c.l.b16 %v629
        %v797 = vunpack.c.l.b16 %v630
        %v798 = vpack.c.b16 %v797, %v796
        %v801 = vsel %vm521, %v628, 0
        %803 = vmatprep.subr.bf16.mxu0 0
        %804 = vmatpush1.bf16.msra.mxu0 0
        %805 = vmatprep.subr.bf16.mxu0 0
        %806 = vmatpush1.bf16.msra.mxu0 0
        %807 = vmatprep.subr.bf16.mxu0 0
        %808 = vmatpush1.bf16.msra.mxu0 0
        %809 = vmatprep.subr.bf16.mxu0 0
        %810 = vmatpush1.bf16.msra.mxu0 0
        %811 = vmatprep.subr.bf16.mxu0 0
        %812 = vmatpush1.bf16.msra.mxu0 0
        %813 = vmatprep.subr.bf16.mxu0 0
        %814 = vmatpush1.bf16.msra.mxu0 0
        %815 = vmatprep.subr.bf16.mxu0 0
        %816 = vmatpush1.bf16.msra.mxu0 0
        %817 = vmatprep.subr.bf16.mxu0 0
        %818 = vmatpush1.bf16.msra.mxu0 %v798
        %819 = vmatprep.subr.bf16.mxu0 0
        %820 = vmatpush2.bf16.msra.mxu0 0
        %821 = vmatprep.subr.bf16.mxu0 0
        %822 = vmatpush2.bf16.msra.mxu0 0
        %823 = vmatprep.subr.bf16.mxu0 0
        %824 = vmatpush2.bf16.msra.mxu0 0
        %825 = vmatprep.subr.bf16.mxu0 0
        %826 = vmatpush2.bf16.msra.mxu0 0
        %827 = vmatprep.subr.bf16.mxu0 0
        %828 = vmatpush2.bf16.msra.mxu0 0
        %829 = vmatprep.subr.bf16.mxu0 0
        %830 = vmatpush2.bf16.msra.mxu0 0
        %831 = vmatprep.subr.bf16.mxu0 0
        %832 = vmatpush2.bf16.msra.mxu0 0
        %833 = vmatprep.subr.bf16.mxu0 0
        %834 = vmatpush2.bf16.msra.mxu0 0
        %835 = vmatprep.mubr.bf16.mxu0 0
        %836 = vmatmul.mubr.bf16.gmra.mxu0 %v801
        %v837 = vpop.f32.mrf.mxu0
        %v838 = vadd.f32 %v789, %v837
        %v839 = vpop.f32.mrf.mxu0
        %v840 = vpop.f32.mrf.mxu0
        %v841 = vpop.f32.mrf.mxu0
        %842 = vdwg.mxu0
        %843 = vrot.lane.b32.xlu0 %v510, 96
        %v844 = vpop.permute.xlu0 %843
        %845 = vrot.lane.b32.xlu0 %v510, 32
        %v846 = vpop.permute.xlu0 %845
        %v848 = vsel %vm521, %v844, 0
        %v851 = vsel %vm521, %v846, 0
        %853 = vmatprep.subr.bf16.mxu0 0
        %854 = vmatpush1.bf16.xpose.msra.mxu0 0
        %855 = vmatprep.subr.bf16.mxu0 0
        %856 = vmatpush1.bf16.xpose.msra.mxu0 0
        %857 = vmatprep.subr.bf16.mxu0 0
        %858 = vmatpush1.bf16.xpose.msra.mxu0 0
        %859 = vmatprep.subr.bf16.mxu0 0
        %860 = vmatpush1.bf16.xpose.msra.mxu0 0
        %861 = vmatprep.subr.bf16.mxu0 0
        %862 = vmatpush1.bf16.xpose.msra.mxu0 0
        %863 = vmatprep.subr.bf16.mxu0 0
        %864 = vmatpush1.bf16.xpose.msra.mxu0 0
        %865 = vmatprep.subr.bf16.mxu0 0
        %866 = vmatpush1.bf16.xpose.msra.mxu0 0
        %867 = vmatprep.subr.bf16.mxu0 0
        %868 = vmatpush1.bf16.xpose.msra.mxu0 %v851
        %869 = vmatprep.subr.bf16.mxu0 0
        %870 = vmatpush2.bf16.xpose.msra.mxu0 0
        %871 = vmatprep.subr.bf16.mxu0 0
        %872 = vmatpush2.bf16.xpose.msra.mxu0 0
        %873 = vmatprep.subr.bf16.mxu0 0
        %874 = vmatpush2.bf16.xpose.msra.mxu0 0
        %875 = vmatprep.subr.bf16.mxu0 0
        %876 = vmatpush2.bf16.xpose.msra.mxu0 0
        %877 = vmatprep.subr.bf16.mxu0 0
        %878 = vmatpush2.bf16.xpose.msra.mxu0 0
        %879 = vmatprep.subr.bf16.mxu0 0
        %880 = vmatpush2.bf16.xpose.msra.mxu0 0
        %881 = vmatprep.subr.bf16.mxu0 0
        %882 = vmatpush2.bf16.xpose.msra.mxu0 0
        %883 = vmatprep.subr.bf16.mxu0 0
        %884 = vmatpush2.bf16.xpose.msra.mxu0 0
        %885 = vmatprep.mubr.bf16.mxu0 0
        %886 = vmatmul.mubr.bf16.gmra.mxu0 %v848
        %v887 = vpop.f32.mrf.mxu0
        %v888 = vadd.f32 %v516, %v887
        %v889 = vpop.f32.mrf.mxu0
        %v890 = vpop.f32.mrf.mxu0
        %v891 = vpop.f32.mrf.mxu0
        %892 = vdwg.mxu0
        %v893 = vsel %vm568, %v888, -inf
        %894 = vmax.xlane.f32.xlu0 %v893
        %v895 = vpop.xlane.xlu0 %894
        %v896 = vsub.f32 %v888, %v895
        %v897 = vmul.f32 %v896, 1.442695
        %v898 = vpow.pop %v897
        %v899 = vsel %vm568, %v898, 0.0
        %900 = vadd.xlane.f32.xlu0 %v899
        %v901 = vpop.xlane.xlu0 %900
        %v902 = vrcp.pop %v901
        %v903 = vmul.f32 %v898, %v902
        %v904 = vpack.c.bf16 %v903, %v903
        %905 = vrot.lane.b32.xlu0 %v511, 96
        %v906 = vpop.permute.xlu0 %905
        %v908 = vsel %vm568, %v904, 0
        %v911 = vsel %vm584, %v906, 0
        %913 = vmatprep.subr.bf16.mxu0 0
        %914 = vmatpush1.bf16.msra.mxu0 0
        %915 = vmatprep.subr.bf16.mxu0 0
        %916 = vmatpush1.bf16.msra.mxu0 0
        %917 = vmatprep.subr.bf16.mxu0 0
        %918 = vmatpush1.bf16.msra.mxu0 0
        %919 = vmatprep.subr.bf16.mxu0 0
        %920 = vmatpush1.bf16.msra.mxu0 0
        %921 = vmatprep.subr.bf16.mxu0 0
        %922 = vmatpush1.bf16.msra.mxu0 0
        %923 = vmatprep.subr.bf16.mxu0 0
        %924 = vmatpush1.bf16.msra.mxu0 0
        %925 = vmatprep.subr.bf16.mxu0 0
        %926 = vmatpush1.bf16.msra.mxu0 0
        %927 = vmatprep.subr.bf16.mxu0 0
        %928 = vmatpush1.bf16.msra.mxu0 %v911
        %929 = vmatprep.subr.bf16.mxu0 0
        %930 = vmatpush2.bf16.msra.mxu0 0
        %931 = vmatprep.subr.bf16.mxu0 0
        %932 = vmatpush2.bf16.msra.mxu0 0
        %933 = vmatprep.subr.bf16.mxu0 0
        %934 = vmatpush2.bf16.msra.mxu0 0
        %935 = vmatprep.subr.bf16.mxu0 0
        %936 = vmatpush2.bf16.msra.mxu0 0
        %937 = vmatprep.subr.bf16.mxu0 0
        %938 = vmatpush2.bf16.msra.mxu0 0
        %939 = vmatprep.subr.bf16.mxu0 0
        %940 = vmatpush2.bf16.msra.mxu0 0
        %941 = vmatprep.subr.bf16.mxu0 0
        %942 = vmatpush2.bf16.msra.mxu0 0
        %943 = vmatprep.subr.bf16.mxu0 0
        %944 = vmatpush2.bf16.msra.mxu0 0
        %945 = vmatprep.mubr.bf16.mxu0 0
        %946 = vmatmul.mubr.bf16.gmra.mxu0 %v908
        %v947 = vpop.f32.mrf.mxu0
        %v948 = vadd.f32 0.0, %v947
        %v949 = vpop.f32.mrf.mxu0
        %v950 = vpop.f32.mrf.mxu0
        %v951 = vpop.f32.mrf.mxu0
        %952 = vdwg.mxu0
        %v953 = vpack.c.bf16 %v948, %v948
        %v954 = vld [vmem:[%s4 + $0x10] sm:$0xf]
        %v955 = vld [vmem:[%s4 + $0x14] sm:$0xf]
        %v958 = vunpack.c.l.b16 %v954
        %v959 = vunpack.c.l.b16 %v955
        %v960 = vpack.c.b16 %v959, %v958
        %v963 = vsel %vm521, %v953, 0
        %965 = vmatprep.subr.bf16.mxu0 0
        %966 = vmatpush1.bf16.msra.mxu0 0
        %967 = vmatprep.subr.bf16.mxu0 0
        %968 = vmatpush1.bf16.msra.mxu0 0
        %969 = vmatprep.subr.bf16.mxu0 0
        %970 = vmatpush1.bf16.msra.mxu0 0
        %971 = vmatprep.subr.bf16.mxu0 0
        %972 = vmatpush1.bf16.msra.mxu0 0
        %973 = vmatprep.subr.bf16.mxu0 0
        %974 = vmatpush1.bf16.msra.mxu0 0
        %975 = vmatprep.subr.bf16.mxu0 0
        %976 = vmatpush1.bf16.msra.mxu0 0
        %977 = vmatprep.subr.bf16.mxu0 0
        %978 = vmatpush1.bf16.msra.mxu0 0
        %979 = vmatprep.subr.bf16.mxu0 0
        %980 = vmatpush1.bf16.msra.mxu0 %v960
        %981 = vmatprep.subr.bf16.mxu0 0
        %982 = vmatpush2.bf16.msra.mxu0 0
        %983 = vmatprep.subr.bf16.mxu0 0
        %984 = vmatpush2.bf16.msra.mxu0 0
        %985 = vmatprep.subr.bf16.mxu0 0
        %986 = vmatpush2.bf16.msra.mxu0 0
        %987 = vmatprep.subr.bf16.mxu0 0
        %988 = vmatpush2.bf16.msra.mxu0 0
        %989 = vmatprep.subr.bf16.mxu0 0
        %990 = vmatpush2.bf16.msra.mxu0 0
        %991 = vmatprep.subr.bf16.mxu0 0
        %992 = vmatpush2.bf16.msra.mxu0 0
        %993 = vmatprep.subr.bf16.mxu0 0
        %994 = vmatpush2.bf16.msra.mxu0 0
        %995 = vmatprep.subr.bf16.mxu0 0
        %996 = vmatpush2.bf16.msra.mxu0 0
        %997 = vmatprep.mubr.bf16.mxu0 0
        %998 = vmatmul.mubr.bf16.gmra.mxu0 %v963
        %v999 = vpop.f32.mrf.mxu0
        %v1000 = vadd.f32 0.0, %v999
        %v1001 = vpop.f32.mrf.mxu0
        %v1002 = vpop.f32.mrf.mxu0
        %v1003 = vpop.f32.mrf.mxu0
        %1004 = vdwg.mxu0
        %v1005 = vadd.f32 %v838, %v1000
        %1006 = vrot.lane.b32.xlu0 %v510, 80
        %v1007 = vpop.permute.xlu0 %1006
        %1008 = vrot.lane.b32.xlu0 %v510, 16
        %v1009 = vpop.permute.xlu0 %1008
        %v1011 = vsel %vm521, %v1007, 0
        %v1014 = vsel %vm521, %v1009, 0
        %1016 = vmatprep.subr.bf16.mxu0 0
        %1017 = vmatpush1.bf16.xpose.msra.mxu0 0
        %1018 = vmatprep.subr.bf16.mxu0 0
        %1019 = vmatpush1.bf16.xpose.msra.mxu0 0
        %1020 = vmatprep.subr.bf16.mxu0 0
        %1021 = vmatpush1.bf16.xpose.msra.mxu0 0
        %1022 = vmatprep.subr.bf16.mxu0 0
        %1023 = vmatpush1.bf16.xpose.msra.mxu0 0
        %1024 = vmatprep.subr.bf16.mxu0 0
        %1025 = vmatpush1.bf16.xpose.msra.mxu0 0
        %1026 = vmatprep.subr.bf16.mxu0 0
        %1027 = vmatpush1.bf16.xpose.msra.mxu0 0
        %1028 = vmatprep.subr.bf16.mxu0 0
        %1029 = vmatpush1.bf16.xpose.msra.mxu0 0
        %1030 = vmatprep.subr.bf16.mxu0 0
        %1031 = vmatpush1.bf16.xpose.msra.mxu0 %v1014
        %1032 = vmatprep.subr.bf16.mxu0 0
        %1033 = vmatpush2.bf16.xpose.msra.mxu0 0
        %1034 = vmatprep.subr.bf16.mxu0 0
        %1035 = vmatpush2.bf16.xpose.msra.mxu0 0
        %1036 = vmatprep.subr.bf16.mxu0 0
        %1037 = vmatpush2.bf16.xpose.msra.mxu0 0
        %1038 = vmatprep.subr.bf16.mxu0 0
        %1039 = vmatpush2.bf16.xpose.msra.mxu0 0
        %1040 = vmatprep.subr.bf16.mxu0 0
        %1041 = vmatpush2.bf16.xpose.msra.mxu0 0
        %1042 = vmatprep.subr.bf16.mxu0 0
        %1043 = vmatpush2.bf16.xpose.msra.mxu0 0
        %1044 = vmatprep.subr.bf16.mxu0 0
        %1045 = vmatpush2.bf16.xpose.msra.mxu0 0
        %1046 = vmatprep.subr.bf16.mxu0 0
        %1047 = vmatpush2.bf16.xpose.msra.mxu0 0
        %1048 = vmatprep.mubr.bf16.mxu0 0
        %1049 = vmatmul.mubr.bf16.gmra.mxu0 %v1011
        %v1050 = vpop.f32.mrf.mxu0
        %v1051 = vadd.f32 %v516, %v1050
        %v1052 = vpop.f32.mrf.mxu0
        %v1053 = vpop.f32.mrf.mxu0
        %v1054 = vpop.f32.mrf.mxu0
        %1055 = vdwg.mxu0
        %v1056 = vsel %vm568, %v1051, -inf
        %1057 = vmax.xlane.f32.xlu0 %v1056
        %v1058 = vpop.xlane.xlu0 %1057
        %v1059 = vsub.f32 %v1051, %v1058
        %v1060 = vmul.f32 %v1059, 1.442695
        %v1061 = vpow.pop %v1060
        %v1062 = vsel %vm568, %v1061, 0.0
        %1063 = vadd.xlane.f32.xlu0 %v1062
        %v1064 = vpop.xlane.xlu0 %1063
        %v1065 = vrcp.pop %v1064
        %v1066 = vmul.f32 %v1061, %v1065
        %v1067 = vpack.c.bf16 %v1066, %v1066
        %1068 = vrot.lane.b32.xlu0 %v511, 80
        %v1069 = vpop.permute.xlu0 %1068
        %v1071 = vsel %vm568, %v1067, 0
        %v1074 = vsel %vm584, %v1069, 0
        %1076 = vmatprep.subr.bf16.mxu0 0
        %1077 = vmatpush1.bf16.msra.mxu0 0
        %1078 = vmatprep.subr.bf16.mxu0 0
        %1079 = vmatpush1.bf16.msra.mxu0 0
        %1080 = vmatprep.subr.bf16.mxu0 0
        %1081 = vmatpush1.bf16.msra.mxu0 0
        %1082 = vmatprep.subr.bf16.mxu0 0
        %1083 = vmatpush1.bf16.msra.mxu0 0
        %1084 = vmatprep.subr.bf16.mxu0 0
        %1085 = vmatpush1.bf16.msra.mxu0 0
        %1086 = vmatprep.subr.bf16.mxu0 0
        %1087 = vmatpush1.bf16.msra.mxu0 0
        %1088 = vmatprep.subr.bf16.mxu0 0
        %1089 = vmatpush1.bf16.msra.mxu0 0
        %1090 = vmatprep.subr.bf16.mxu0 0
        %1091 = vmatpush1.bf16.msra.mxu0 %v1074
        %1092 = vmatprep.subr.bf16.mxu0 0
        %1093 = vmatpush2.bf16.msra.mxu0 0
        %1094 = vmatprep.subr.bf16.mxu0 0
        %1095 = vmatpush2.bf16.msra.mxu0 0
        %1096 = vmatprep.subr.bf16.mxu0 0
        %1097 = vmatpush2.bf16.msra.mxu0 0
        %1098 = vmatprep.subr.bf16.mxu0 0
        %1099 = vmatpush2.bf16.msra.mxu0 0
        %1100 = vmatprep.subr.bf16.mxu0 0
        %1101 = vmatpush2.bf16.msra.mxu0 0
        %1102 = vmatprep.subr.bf16.mxu0 0
        %1103 = vmatpush2.bf16.msra.mxu0 0
        %1104 = vmatprep.subr.bf16.mxu0 0
        %1105 = vmatpush2.bf16.msra.mxu0 0
        %1106 = vmatprep.subr.bf16.mxu0 0
        %1107 = vmatpush2.bf16.msra.mxu0 0
        %1108 = vmatprep.mubr.bf16.mxu0 0
        %1109 = vmatmul.mubr.bf16.gmra.mxu0 %v1071
        %v1110 = vpop.f32.mrf.mxu0
        %v1111 = vadd.f32 0.0, %v1110
        %v1112 = vpop.f32.mrf.mxu0
        %v1113 = vpop.f32.mrf.mxu0
        %v1114 = vpop.f32.mrf.mxu0
        %1115 = vdwg.mxu0
        %v1116 = vpack.c.bf16 %v1111, %v1111
        %v1117 = vld [vmem:[%s4 + $0x18] sm:$0xf]
        %v1118 = vld [vmem:[%s4 + $0x1c] sm:$0xf]
        %v1121 = vunpack.c.l.b16 %v1117
        %v1122 = vunpack.c.l.b16 %v1118
        %v1123 = vpack.c.b16 %v1122, %v1121
        %v1126 = vsel %vm521, %v1116, 0
        %1128 = vmatprep.subr.bf16.mxu0 0
        %1129 = vmatpush1.bf16.msra.mxu0 0
        %1130 = vmatprep.subr.bf16.mxu0 0
        %1131 = vmatpush1.bf16.msra.mxu0 0
        %1132 = vmatprep.subr.bf16.mxu0 0
        %1133 = vmatpush1.bf16.msra.mxu0 0
        %1134 = vmatprep.subr.bf16.mxu0 0
        %1135 = vmatpush1.bf16.msra.mxu0 0
        %1136 = vmatprep.subr.bf16.mxu0 0
        %1137 = vmatpush1.bf16.msra.mxu0 0
        %1138 = vmatprep.subr.bf16.mxu0 0
        %1139 = vmatpush1.bf16.msra.mxu0 0
        %1140 = vmatprep.subr.bf16.mxu0 0
        %1141 = vmatpush1.bf16.msra.mxu0 0
        %1142 = vmatprep.subr.bf16.mxu0 0
        %1143 = vmatpush1.bf16.msra.mxu0 %v1123
        %1144 = vmatprep.subr.bf16.mxu0 0
        %1145 = vmatpush2.bf16.msra.mxu0 0
        %1146 = vmatprep.subr.bf16.mxu0 0
        %1147 = vmatpush2.bf16.msra.mxu0 0
        %1148 = vmatprep.subr.bf16.mxu0 0
        %1149 = vmatpush2.bf16.msra.mxu0 0
        %1150 = vmatprep.subr.bf16.mxu0 0
        %1151 = vmatpush2.bf16.msra.mxu0 0
        %1152 = vmatprep.subr.bf16.mxu0 0
        %1153 = vmatpush2.bf16.msra.mxu0 0
        %1154 = vmatprep.subr.bf16.mxu0 0
        %1155 = vmatpush2.bf16.msra.mxu0 0
        %1156 = vmatprep.subr.bf16.mxu0 0
        %1157 = vmatpush2.bf16.msra.mxu0 0
        %1158 = vmatprep.subr.bf16.mxu0 0
        %1159 = vmatpush2.bf16.msra.mxu0 0
        %1160 = vmatprep.mubr.bf16.mxu0 0
        %1161 = vmatmul.mubr.bf16.gmra.mxu0 %v1126
        %v1162 = vpop.f32.mrf.mxu0
        %v1163 = vadd.f32 0.0, %v1162
        %v1164 = vpop.f32.mrf.mxu0
        %v1165 = vpop.f32.mrf.mxu0
        %v1166 = vpop.f32.mrf.mxu0
        %1167 = vdwg.mxu0
        %v1168 = vadd.f32 %v1005, %v1163
        %v1169 = vadd.f32 %v406, %v1168
        %v1170 = vlaneseq
        %v1171 = vshrl.u32 %v1170, 7
        %v1172 = vsub.s32 1, %v1171
        %v1173 = vrot.slane %v407, %v1172
        %v1174 = vadd.f32 %v1169, %v1173
        %v1175 = vsel %vm382, %v1174, 0.0
        %1176 = vadd.xlane.f32.xlu0 %v1175
        %v1177 = vpop.xlane.xlu0 %1176
        %v1178 = vmul.f32 %v1177, %v386
        %v1179 = vsub.f32 %v1174, %v1178
        %v1180 = vmul.f32 %v1179, %v1179
        %v1181 = vsel %vm382, %v1180, 0.0
        %1182 = vadd.xlane.f32.xlu0 %v1181
        %v1183 = vpop.xlane.xlu0 %1182
        %v1184 = vmul.f32 %v1183, %v386
        %v1185 = vadd.f32 %v1184, 1e-12
        %v1186 = vrsqrt.pop %v1185
        %v1187 = vmul.f32 %v1179, %v1186
        %v1188 = vlaneseq
        %v1189 = vshrl.u32 %v1188, 7
        %v1190 = vsub.s32 2, %v1189
        %v1191 = vrot.slane %v407, %v1190
        %v1192 = vmul.f32 %v1187, %v1191
        %v1193 = vlaneseq
        %v1194 = vshrl.u32 %v1193, 7
        %v1195 = vsub.s32 3, %v1194
        %v1196 = vrot.slane %v407, %v1195
        %v1197 = vadd.f32 %v1192, %v1196
        %v1198 = vpack.c.bf16 %v1197, %v1197
        %v1199 = vld [vmem:[#allocation7] sm:$0xf]
        %v1200 = vld [vmem:[#allocation7 + $0x4] sm:$0xf]
        %v1201 = vld [vmem:[#allocation7 + $0x8] sm:$0xf]
        %v1202 = vld [vmem:[#allocation7 + $0xc] sm:$0xf]
        %v1203 = vld [vmem:[#allocation7 + $0x10] sm:$0xf]
        %v1204 = vld [vmem:[#allocation7 + $0x14] sm:$0xf]
        %v1205 = vld [vmem:[#allocation7 + $0x18] sm:$0xf]
        %v1206 = vld [vmem:[#allocation7 + $0x1c] sm:$0xf]
        %v1207 = vlaneseq
        %v1208 = vshrl.u32 %v1207, 7
        %v1209 = vsub.s32 4, %v1208
        %v1210 = vrot.slane %v407, %v1209
        %v1219 = vunpack.c.l.b16 %v1199
        %v1220 = vunpack.c.l.b16 %v1200
        %v1221 = vunpack.c.l.b16 %v1201
        %v1222 = vunpack.c.l.b16 %v1202
        %v1223 = vunpack.c.l.b16 %v1203
        %v1224 = vunpack.c.l.b16 %v1204
        %v1225 = vunpack.c.l.b16 %v1205
        %v1226 = vunpack.c.l.b16 %v1206
        %v1227 = vpack.c.b16 %v1220, %v1219
        %v1228 = vpack.c.b16 %v1222, %v1221
        %v1229 = vpack.c.b16 %v1224, %v1223
        %v1230 = vpack.c.b16 %v1226, %v1225
        %v1236 = vsel %vm382, %v1198, 0
        %1238 = vmatprep.subr.bf16.mxu0 0
        %1239 = vmatpush1.bf16.msra.mxu0 0
        %1240 = vmatprep.subr.bf16.mxu0 0
        %1241 = vmatpush1.bf16.msra.mxu0 0
        %1242 = vmatprep.subr.bf16.mxu0 0
        %1243 = vmatpush1.bf16.msra.mxu0 0
        %1244 = vmatprep.subr.bf16.mxu0 0
        %1245 = vmatpush1.bf16.msra.mxu0 0
        %1246 = vmatprep.subr.bf16.mxu0 0
        %1247 = vmatpush1.bf16.msra.mxu0 %v1230
        %1248 = vmatprep.subr.bf16.mxu0 0
        %1249 = vmatpush1.bf16.msra.mxu0 %v1229
        %1250 = vmatprep.subr.bf16.mxu0 0
        %1251 = vmatpush1.bf16.msra.mxu0 %v1228
        %1252 = vmatprep.subr.bf16.mxu0 0
        %1253 = vmatpush1.bf16.msra.mxu0 %v1227
        %1254 = vmatprep.subr.bf16.mxu0 0
        %1255 = vmatpush2.bf16.msra.mxu0 0
        %1256 = vmatprep.subr.bf16.mxu0 0
        %1257 = vmatpush2.bf16.msra.mxu0 0
        %1258 = vmatprep.subr.bf16.mxu0 0
        %1259 = vmatpush2.bf16.msra.mxu0 0
        %1260 = vmatprep.subr.bf16.mxu0 0
        %1261 = vmatpush2.bf16.msra.mxu0 0
        %1262 = vmatprep.subr.bf16.mxu0 0
        %1263 = vmatpush2.bf16.msra.mxu0 0
        %1264 = vmatprep.subr.bf16.mxu0 0
        %1265 = vmatpush2.bf16.msra.mxu0 0
        %1266 = vmatprep.subr.bf16.mxu0 0
        %1267 = vmatpush2.bf16.msra.mxu0 0
        %1268 = vmatprep.subr.bf16.mxu0 0
        %1269 = vmatpush2.bf16.msra.mxu0 0
        %1270 = vmatprep.mubr.bf16.mxu0 0
        %1271 = vmatmul.mubr.bf16.gmra.mxu0 %v1236
        %v1272 = vpop.f32.mrf.mxu0
        %v1273 = vadd.f32 %v1210, %v1272
        %v1274 = vpop.f32.mrf.mxu0
        %v1275 = vpop.f32.mrf.mxu0
        %v1276 = vpop.f32.mrf.mxu0
        %1277 = vdwg.mxu0
        %v1278 = vmul.f32 %v1273, 0.5
        %v1279 = vmul.f32 %v1273, 0.044715
        %v1280 = vmul.f32 %v1279, %v1273
        %v1281 = vmul.f32 %v1280, %v1273
        %v1282 = vadd.f32 %v1273, %v1281
        %v1283 = vmul.f32 %v1282, 0.7978846
        %v1284 = vtanh.pop %v1283
        %v1285 = vadd.f32 %v1284, 1.0
        %v1286 = vmul.f32 %v1278, %v1285
        %v1287 = vpack.c.bf16 %v1286, %v1286
        %v1288 = vld [vmem:[%s6] sm:$0xf]
        %v1289 = vld [vmem:[%s6 + $0x4] sm:$0xf]
        %v1290 = vld [vmem:[%s6 + $0x8] sm:$0xf]
        %v1291 = vld [vmem:[%s6 + $0xc] sm:$0xf]
        %v1292 = vld [vmem:[%s6 + $0x10] sm:$0xf]
        %v1293 = vld [vmem:[%s6 + $0x14] sm:$0xf]
        %v1294 = vld [vmem:[%s6 + $0x18] sm:$0xf]
        %v1295 = vld [vmem:[%s6 + $0x1c] sm:$0xf]
        %v1296 = vld [vmem:[%s6 + $0x20] sm:$0xf]
        %v1297 = vld [vmem:[%s6 + $0x24] sm:$0xf]
        %v1298 = vld [vmem:[%s6 + $0x28] sm:$0xf]
        %v1299 = vld [vmem:[%s6 + $0x2c] sm:$0xf]
        %v1300 = vld [vmem:[%s6 + $0x30] sm:$0xf]
        %v1301 = vld [vmem:[%s6 + $0x34] sm:$0xf]
        %v1302 = vld [vmem:[%s6 + $0x38] sm:$0xf]
        %v1303 = vld [vmem:[%s6 + $0x3c] sm:$0xf]
        %v1304 = vlaneseq
        %v1305 = vshrl.u32 %v1304, 7
        %v1306 = vsub.s32 5, %v1305
        %v1307 = vrot.slane %v407, %v1306
        %v1324 = vunpack.c.l.b16 %v1288
        %v1325 = vunpack.c.l.b16 %v1289
        %v1326 = vunpack.c.l.b16 %v1290
        %v1327 = vunpack.c.l.b16 %v1291
        %v1328 = vunpack.c.l.b16 %v1292
        %v1329 = vunpack.c.l.b16 %v1293
        %v1330 = vunpack.c.l.b16 %v1294
        %v1331 = vunpack.c.l.b16 %v1295
        %v1332 = vunpack.c.l.b16 %v1296
        %v1333 = vunpack.c.l.b16 %v1297
        %v1334 = vunpack.c.l.b16 %v1298
        %v1335 = vunpack.c.l.b16 %v1299
        %v1336 = vunpack.c.l.b16 %v1300
        %v1337 = vunpack.c.l.b16 %v1301
        %v1338 = vunpack.c.l.b16 %v1302
        %v1339 = vunpack.c.l.b16 %v1303
        %v1340 = vpack.c.b16 %v1325, %v1324
        %v1341 = vpack.c.b16 %v1327, %v1326
        %v1342 = vpack.c.b16 %v1329, %v1328
        %v1343 = vpack.c.b16 %v1331, %v1330
        %v1344 = vpack.c.b16 %v1333, %v1332
        %v1345 = vpack.c.b16 %v1335, %v1334
        %v1346 = vpack.c.b16 %v1337, %v1336
        %v1347 = vpack.c.b16 %v1339, %v1338
        %1356 = vmatprep.subr.bf16.mxu0 0
        %1357 = vmatpush1.bf16.msra.mxu0 %v1347
        %1358 = vmatprep.subr.bf16.mxu0 0
        %1359 = vmatpush1.bf16.msra.mxu0 %v1346
        %1360 = vmatprep.subr.bf16.mxu0 0
        %1361 = vmatpush1.bf16.msra.mxu0 %v1345
        %1362 = vmatprep.subr.bf16.mxu0 0
        %1363 = vmatpush1.bf16.msra.mxu0 %v1344
        %1364 = vmatprep.subr.bf16.mxu0 0
        %1365 = vmatpush1.bf16.msra.mxu0 %v1343
        %1366 = vmatprep.subr.bf16.mxu0 0
        %1367 = vmatpush1.bf16.msra.mxu0 %v1342
        %1368 = vmatprep.subr.bf16.mxu0 0
        %1369 = vmatpush1.bf16.msra.mxu0 %v1341
        %1370 = vmatprep.subr.bf16.mxu0 0
        %1371 = vmatpush1.bf16.msra.mxu0 %v1340
        %1372 = vmatprep.subr.bf16.mxu0 0
        %1373 = vmatpush2.bf16.msra.mxu0 0
        %1374 = vmatprep.subr.bf16.mxu0 0
        %1375 = vmatpush2.bf16.msra.mxu0 0
        %1376 = vmatprep.subr.bf16.mxu0 0
        %1377 = vmatpush2.bf16.msra.mxu0 0
        %1378 = vmatprep.subr.bf16.mxu0 0
        %1379 = vmatpush2.bf16.msra.mxu0 0
        %1380 = vmatprep.subr.bf16.mxu0 0
        %1381 = vmatpush2.bf16.msra.mxu0 0
        %1382 = vmatprep.subr.bf16.mxu0 0
        %1383 = vmatpush2.bf16.msra.mxu0 0
        %1384 = vmatprep.subr.bf16.mxu0 0
        %1385 = vmatpush2.bf16.msra.mxu0 0
        %1386 = vmatprep.subr.bf16.mxu0 0
        %1387 = vmatpush2.bf16.msra.mxu0 0
        %1388 = vmatprep.mubr.bf16.mxu0 0
        %1389 = vmatmul.mubr.bf16.gmra.mxu0 %v1287
        %v1390 = vpop.f32.mrf.mxu0
        %v1391 = vadd.f32 %v1307, %v1390
        %v1392 = vpop.f32.mrf.mxu0
        %v1393 = vpop.f32.mrf.mxu0
        %v1394 = vpop.f32.mrf.mxu0
        %1395 = vdwg.mxu0
        %v1396 = vadd.f32 %v1197, %v1391
        %v1397 = vsel %vm382, %v1396, 0.0
        %1398 = vadd.xlane.f32.xlu0 %v1397
        %v1399 = vpop.xlane.xlu0 %1398
        %v1400 = vmul.f32 %v1399, %v386
        %v1401 = vsub.f32 %v1396, %v1400
        %v1402 = vmul.f32 %v1401, %v1401
        %v1403 = vsel %vm382, %v1402, 0.0
        %1404 = vadd.xlane.f32.xlu0 %v1403
        %v1405 = vpop.xlane.xlu0 %1404
        %v1406 = vmul.f32 %v1405, %v386
        %v1407 = vadd.f32 %v1406, 1e-12
        %v1408 = vrsqrt.pop %v1407
        %v1409 = vmul.f32 %v1401, %v1408
        %v1410 = vlaneseq
        %v1411 = vshrl.u32 %v1410, 7
        %v1412 = vsub.s32 6, %v1411
        %v1413 = vrot.slane %v407, %v1412
        %v1414 = vmul.f32 %v1409, %v1413
        %v1415 = vlaneseq
        %v1416 = vshrl.u32 %v1415, 7
        %v1417 = vsub.s32 7, %v1416
        %v1418 = vrot.slane %v407, %v1417
        %v1419 = vadd.f32 %v1414, %v1418
        %s1420 = scalar_lea.vmem [#allocation8], 16
        %v1421 = vld [vmem:[%s1420] sm:$0xff]
        %v1422 = vld [vmem:[%s1420 + $0x8] sm:$0xff]
        %v1423 = vpack.c.bf16 %v1419, %v1419
        %s1424 = scalar_lea.vmem %s3, 64
        %v1425 = vld [vmem:[%s1424] sm:$0xff]
        %v1426 = vld [vmem:[%s1424 + $0x8] sm:$0xff]
        %v1427 = vld [vmem:[%s1424 + $0x10] sm:$0xff]
        %v1428 = vld [vmem:[%s1424 + $0x18] sm:$0xff]
        %v1429 = vld [vmem:[%s1424 + $0x20] sm:$0xff]
        %v1430 = vld [vmem:[%s1424 + $0x28] sm:$0xff]
        %v1431 = vld [vmem:[%s1424 + $0x30] sm:$0xff]
        %v1432 = vld [vmem:[%s1424 + $0x38] sm:$0xff]
        %v1433 = vlaneseq
        %v1434 = vshrl.u32 %v1433, 7
        %v1435 = vsub.s32 0, %v1434
        %v1436 = vrot.slane %v1421, %v1435
        %v1437 = vlaneseq
        %v1438 = vshrl.u32 %v1437, 7
        %v1439 = vsub.s32 0, %v1438
        %v1440 = vrot.slane %v1422, %v1439
        %v1449 = vunpack.c.l.b16 %v1425
        %v1450 = vunpack.c.h.b16 %v1425
        %v1451 = vunpack.c.l.b16 %v1426
        %v1452 = vunpack.c.h.b16 %v1426
        %v1453 = vunpack.c.l.b16 %v1427
        %v1454 = vunpack.c.h.b16 %v1427
        %v1455 = vunpack.c.l.b16 %v1428
        %v1456 = vunpack.c.h.b16 %v1428
        %v1457 = vunpack.c.l.b16 %v1429
        %v1458 = vunpack.c.h.b16 %v1429
        %v1459 = vunpack.c.l.b16 %v1430
        %v1460 = vunpack.c.h.b16 %v1430
        %v1461 = vunpack.c.l.b16 %v1431
        %v1462 = vunpack.c.h.b16 %v1431
        %v1463 = vunpack.c.l.b16 %v1432
        %v1464 = vunpack.c.h.b16 %v1432
        %v1465 = vpack.c.b16 %v1451, %v1449
        %v1466 = vpack.c.b16 %v1452, %v1450
        %v1467 = vpack.c.b16 %v1455, %v1453
        %v1468 = vpack.c.b16 %v1456, %v1454
        %v1469 = vpack.c.b16 %v1459, %v1457
        %v1470 = vpack.c.b16 %v1460, %v1458
        %v1471 = vpack.c.b16 %v1463, %v1461
        %v1472 = vpack.c.b16 %v1464, %v1462
        %v1482 = vsel %vm382, %v1423, 0
        %1484 = vmatprep.subr.bf16.mxu0 0
        %1485 = vmatpush1.bf16.msra.mxu0 0
        %1486 = vmatprep.subr.bf16.mxu0 0
        %1487 = vmatpush1.bf16.msra.mxu0 0
        %1488 = vmatprep.subr.bf16.mxu0 0
        %1489 = vmatpush1.bf16.msra.mxu0 0
        %1490 = vmatprep.subr.bf16.mxu0 0
        %1491 = vmatpush1.bf16.msra.mxu0 0
        %1492 = vmatprep.subr.bf16.mxu0 %v1472
        %1493 = vmatpush1.bf16.msra.mxu0 %v1471
        %1494 = vmatprep.subr.bf16.mxu0 %v1470
        %1495 = vmatpush1.bf16.msra.mxu0 %v1469
        %1496 = vmatprep.subr.bf16.mxu0 %v1468
        %1497 = vmatpush1.bf16.msra.mxu0 %v1467
        %1498 = vmatprep.subr.bf16.mxu0 %v1466
        %1499 = vmatpush1.bf16.msra.mxu0 %v1465
        %1500 = vmatprep.subr.bf16.mxu0 0
        %1501 = vmatpush2.bf16.msra.mxu0 0
        %1502 = vmatprep.subr.bf16.mxu0 0
        %1503 = vmatpush2.bf16.msra.mxu0 0
        %1504 = vmatprep.subr.bf16.mxu0 0
        %1505 = vmatpush2.bf16.msra.mxu0 0
        %1506 = vmatprep.subr.bf16.mxu0 0
        %1507 = vmatpush2.bf16.msra.mxu0 0
        %1508 = vmatprep.subr.bf16.mxu0 0
        %1509 = vmatpush2.bf16.msra.mxu0 0
        %1510 = vmatprep.subr.bf16.mxu0 0
        %1511 = vmatpush2.bf16.msra.mxu0 0
        %1512 = vmatprep.subr.bf16.mxu0 0
        %1513 = vmatpush2.bf16.msra.mxu0 0
        %1514 = vmatprep.subr.bf16.mxu0 0
        %1515 = vmatpush2.bf16.msra.mxu0 0
        %1516 = vmatprep.mubr.bf16.mxu0 0
        %1517 = vmatmul.mubr.bf16.gmra.mxu0 %v1482
        %v1518 = vpop.f32.mrf.mxu0
        %v1519 = vadd.f32 %v1436, %v1518
        %v1520 = vpop.f32.mrf.mxu0
        %v1521 = vadd.f32 %v1440, %v1520
        %v1522 = vpop.f32.mrf.mxu0
        %v1523 = vpop.f32.mrf.mxu0
        %1524 = vdwg.mxu0
        %v1525 = vpack.c.bf16 %v1519, %v1519
        %v1526 = vpack.c.bf16 %v1521, %v1521
        %1528 = vrot.lane.b32.xlu0 %v1525, 64
        %v1529 = vpop.permute.xlu0 %1528
        %v1531 = vsel %vm521, %v1525, 0
        %v1534 = vsel %vm521, %v1529, 0
        %1536 = vmatprep.subr.bf16.mxu0 0
        %1537 = vmatpush1.bf16.xpose.msra.mxu0 0
        %1538 = vmatprep.subr.bf16.mxu0 0
        %1539 = vmatpush1.bf16.xpose.msra.mxu0 0
        %1540 = vmatprep.subr.bf16.mxu0 0
        %1541 = vmatpush1.bf16.xpose.msra.mxu0 0
        %1542 = vmatprep.subr.bf16.mxu0 0
        %1543 = vmatpush1.bf16.xpose.msra.mxu0 0
        %1544 = vmatprep.subr.bf16.mxu0 0
        %1545 = vmatpush1.bf16.xpose.msra.mxu0 0
        %1546 = vmatprep.subr.bf16.mxu0 0
        %1547 = vmatpush1.bf16.xpose.msra.mxu0 0
        %1548 = vmatprep.subr.bf16.mxu0 0
        %1549 = vmatpush1.bf16.xpose.msra.mxu0 0
        %1550 = vmatprep.subr.bf16.mxu0 0
        %1551 = vmatpush1.bf16.xpose.msra.mxu0 %v1534
        %1552 = vmatprep.subr.bf16.mxu0 0
        %1553 = vmatpush2.bf16.xpose.msra.mxu0 0
        %1554 = vmatprep.subr.bf16.mxu0 0
        %1555 = vmatpush2.bf16.xpose.msra.mxu0 0
        %1556 = vmatprep.subr.bf16.mxu0 0
        %1557 = vmatpush2.bf16.xpose.msra.mxu0 0
        %1558 = vmatprep.subr.bf16.mxu0 0
        %1559 = vmatpush2.bf16.xpose.msra.mxu0 0
        %1560 = vmatprep.subr.bf16.mxu0 0
        %1561 = vmatpush2.bf16.xpose.msra.mxu0 0
        %1562 = vmatprep.subr.bf16.mxu0 0
        %1563 = vmatpush2.bf16.xpose.msra.mxu0 0
        %1564 = vmatprep.subr.bf16.mxu0 0
        %1565 = vmatpush2.bf16.xpose.msra.mxu0 0
        %1566 = vmatprep.subr.bf16.mxu0 0
        %1567 = vmatpush2.bf16.xpose.msra.mxu0 0
        %1568 = vmatprep.mubr.bf16.mxu0 0
        %1569 = vmatmul.mubr.bf16.gmra.mxu0 %v1531
        %v1570 = vpop.f32.mrf.mxu0
        %v1571 = vadd.f32 %v516, %v1570
        %v1572 = vpop.f32.mrf.mxu0
        %v1573 = vpop.f32.mrf.mxu0
        %v1574 = vpop.f32.mrf.mxu0
        %1575 = vdwg.mxu0
        %v1576 = vsel %vm568, %v1571, -inf
        %1577 = vmax.xlane.f32.xlu0 %v1576
        %v1578 = vpop.xlane.xlu0 %1577
        %v1579 = vsub.f32 %v1571, %v1578
        %v1580 = vmul.f32 %v1579, 1.442695
        %v1581 = vpow.pop %v1580
        %v1582 = vsel %vm568, %v1581, 0.0
        %1583 = vadd.xlane.f32.xlu0 %v1582
        %v1584 = vpop.xlane.xlu0 %1583
        %v1585 = vrcp.pop %v1584
        %v1586 = vmul.f32 %v1581, %v1585
        %v1587 = vpack.c.bf16 %v1586, %v1586
        %v1589 = vsel %vm568, %v1587, 0
        %v1592 = vsel %vm584, %v1526, 0
        %1594 = vmatprep.subr.bf16.mxu0 0
        %1595 = vmatpush1.bf16.msra.mxu0 0
        %1596 = vmatprep.subr.bf16.mxu0 0
        %1597 = vmatpush1.bf16.msra.mxu0 0
        %1598 = vmatprep.subr.bf16.mxu0 0
        %1599 = vmatpush1.bf16.msra.mxu0 0
        %1600 = vmatprep.subr.bf16.mxu0 0
        %1601 = vmatpush1.bf16.msra.mxu0 0
        %1602 = vmatprep.subr.bf16.mxu0 0
        %1603 = vmatpush1.bf16.msra.mxu0 0
        %1604 = vmatprep.subr.bf16.mxu0 0
        %1605 = vmatpush1.bf16.msra.mxu0 0
        %1606 = vmatprep.subr.bf16.mxu0 0
        %1607 = vmatpush1.bf16.msra.mxu0 0
        %1608 = vmatprep.subr.bf16.mxu0 0
        %1609 = vmatpush1.bf16.msra.mxu0 %v1592
        %1610 = vmatprep.subr.bf16.mxu0 0
        %1611 = vmatpush2.bf16.msra.mxu0 0
        %1612 = vmatprep.subr.bf16.mxu0 0
        %1613 = vmatpush2.bf16.msra.mxu0 0
        %1614 = vmatprep.subr.bf16.mxu0 0
        %1615 = vmatpush2.bf16.msra.mxu0 0
        %1616 = vmatprep.subr.bf16.mxu0 0
        %1617 = vmatpush2.bf16.msra.mxu0 0
        %1618 = vmatprep.subr.bf16.mxu0 0
        %1619 = vmatpush2.bf16.msra.mxu0 0
        %1620 = vmatprep.subr.bf16.mxu0 0
        %1621 = vmatpush2.bf16.msra.mxu0 0
        %1622 = vmatprep.subr.bf16.mxu0 0
        %1623 = vmatpush2.bf16.msra.mxu0 0
        %1624 = vmatprep.subr.bf16.mxu0 0
        %1625 = vmatpush2.bf16.msra.mxu0 0
        %1626 = vmatprep.mubr.bf16.mxu0 0
        %1627 = vmatmul.mubr.bf16.gmra.mxu0 %v1589
        %v1628 = vpop.f32.mrf.mxu0
        %v1629 = vadd.f32 0.0, %v1628
        %v1630 = vpop.f32.mrf.mxu0
        %v1631 = vpop.f32.mrf.mxu0
        %v1632 = vpop.f32.mrf.mxu0
        %1633 = vdwg.mxu0
        %v1634 = vpack.c.bf16 %v1629, %v1629
        %s1635 = scalar_lea.vmem %s4, 32
        %v1636 = vld [vmem:[%s1635] sm:$0xf]
        %v1637 = vld [vmem:[%s1635 + $0x4] sm:$0xf]
        %1638 = vrot.lane.b32.xlu0 %v1525, 112
        %v1639 = vpop.permute.xlu0 %1638
        %1640 = vrot.lane.b32.xlu0 %v1525, 48
        %v1641 = vpop.permute.xlu0 %1640
        %v1643 = vsel %vm521, %v1639, 0
        %v1646 = vsel %vm521, %v1641, 0
        %1648 = vmatprep.subr.bf16.mxu0 0
        %1649 = vmatpush1.bf16.xpose.msra.mxu0 0
        %1650 = vmatprep.subr.bf16.mxu0 0
        %1651 = vmatpush1.bf16.xpose.msra.mxu0 0
        %1652 = vmatprep.subr.bf16.mxu0 0
        %1653 = vmatpush1.bf16.xpose.msra.mxu0 0
        %1654 = vmatprep.subr.bf16.mxu0 0
        %1655 = vmatpush1.bf16.xpose.msra.mxu0 0
        %1656 = vmatprep.subr.bf16.mxu0 0
        %1657 = vmatpush1.bf16.xpose.msra.mxu0 0
        %1658 = vmatprep.subr.bf16.mxu0 0
        %1659 = vmatpush1.bf16.xpose.msra.mxu0 0
        %1660 = vmatprep.subr.bf16.mxu0 0
        %1661 = vmatpush1.bf16.xpose.msra.mxu0 0
        %1662 = vmatprep.subr.bf16.mxu0 0
        %1663 = vmatpush1.bf16.xpose.msra.mxu0 %v1646
        %1664 = vmatprep.subr.bf16.mxu0 0
        %1665 = vmatpush2.bf16.xpose.msra.mxu0 0
        %1666 = vmatprep.subr.bf16.mxu0 0
        %1667 = vmatpush2.bf16.xpose.msra.mxu0 0
        %1668 = vmatprep.subr.bf16.mxu0 0
        %1669 = vmatpush2.bf16.xpose.msra.mxu0 0
        %1670 = vmatprep.subr.bf16.mxu0 0
        %1671 = vmatpush2.bf16.xpose.msra.mxu0 0
        %1672 = vmatprep.subr.bf16.mxu0 0
        %1673 = vmatpush2.bf16.xpose.msra.mxu0 0
        %1674 = vmatprep.subr.bf16.mxu0 0
        %1675 = vmatpush2.bf16.xpose.msra.mxu0 0
        %1676 = vmatprep.subr.bf16.mxu0 0
        %1677 = vmatpush2.bf16.xpose.msra.mxu0 0
        %1678 = vmatprep.subr.bf16.mxu0 0
        %1679 = vmatpush2.bf16.xpose.msra.mxu0 0
        %1680 = vmatprep.mubr.bf16.mxu0 0
        %1681 = vmatmul.mubr.bf16.gmra.mxu0 %v1643
        %v1682 = vpop.f32.mrf.mxu0
        %v1683 = vadd.f32 %v516, %v1682
        %v1684 = vpop.f32.mrf.mxu0
        %v1685 = vpop.f32.mrf.mxu0
        %v1686 = vpop.f32.mrf.mxu0
        %1687 = vdwg.mxu0
        %v1688 = vsel %vm568, %v1683, -inf
        %1689 = vmax.xlane.f32.xlu0 %v1688
        %v1690 = vpop.xlane.xlu0 %1689
        %v1691 = vsub.f32 %v1683, %v1690
        %v1692 = vmul.f32 %v1691, 1.442695
        %v1693 = vpow.pop %v1692
        %v1694 = vsel %vm568, %v1693, 0.0
        %1695 = vadd.xlane.f32.xlu0 %v1694
        %v1696 = vpop.xlane.xlu0 %1695
        %v1697 = vrcp.pop %v1696
        %v1698 = vmul.f32 %v1693, %v1697
        %v1699 = vpack.c.bf16 %v1698, %v1698
        %1701 = vrot.lane.b32.xlu0 %v1526, 112
        %v1702 = vpop.permute.xlu0 %1701
        %v1704 = vsel %vm568, %v1699, 0
        %v1707 = vsel %vm584, %v1702, 0
        %1709 = vmatprep.subr.bf16.mxu0 0
        %1710 = vmatpush1.bf16.msra.mxu0 0
        %1711 = vmatprep.subr.bf16.mxu0 0
        %1712 = vmatpush1.bf16.msra.mxu0 0
        %1713 = vmatprep.subr.bf16.mxu0 0
        %1714 = vmatpush1.bf16.msra.mxu0 0
        %1715 = vmatprep.subr.bf16.mxu0 0
        %1716 = vmatpush1.bf16.msra.mxu0 0
        %1717 = vmatprep.subr.bf16.mxu0 0
        %1718 = vmatpush1.bf16.msra.mxu0 0
        %1719 = vmatprep.subr.bf16.mxu0 0
        %1720 = vmatpush1.bf16.msra.mxu0 0
        %1721 = vmatprep.subr.bf16.mxu0 0
        %1722 = vmatpush1.bf16.msra.mxu0 0
        %1723 = vmatprep.subr.bf16.mxu0 0
        %1724 = vmatpush1.bf16.msra.mxu0 %v1707
        %1725 = vmatprep.subr.bf16.mxu0 0
        %1726 = vmatpush2.bf16.msra.mxu0 0
        %1727 = vmatprep.subr.bf16.mxu0 0
        %1728 = vmatpush2.bf16.msra.mxu0 0
        %1729 = vmatprep.subr.bf16.mxu0 0
        %1730 = vmatpush2.bf16.msra.mxu0 0
        %1731 = vmatprep.subr.bf16.mxu0 0
        %1732 = vmatpush2.bf16.msra.mxu0 0
        %1733 = vmatprep.subr.bf16.mxu0 0
        %1734 = vmatpush2.bf16.msra.mxu0 0
        %1735 = vmatprep.subr.bf16.mxu0 0
        %1736 = vmatpush2.bf16.msra.mxu0 0
        %1737 = vmatprep.subr.bf16.mxu0 0
        %1738 = vmatpush2.bf16.msra.mxu0 0
        %1739 = vmatprep.subr.bf16.mxu0 0
        %1740 = vmatpush2.bf16.msra.mxu0 0
        %1741 = vmatprep.mubr.bf16.mxu0 0
        %1742 = vmatmul.mubr.bf16.gmra.mxu0 %v1704
        %v1743 = vpop.f32.mrf.mxu0
        %v1744 = vadd.f32 0.0, %v1743
        %v1745 = vpop.f32.mrf.mxu0
        %v1746 = vpop.f32.mrf.mxu0
        %v1747 = vpop.f32.mrf.mxu0
        %1748 = vdwg.mxu0
        %v1749 = vpack.c.bf16 %v1744, %v1744
        %v1750 = vld [vmem:[%s1635 + $0x8] sm:$0xf]
        %v1751 = vld [vmem:[%s1635 + $0xc] sm:$0xf]
        %v1754 = vunpack.c.l.b16 %v1750
        %v1755 = vunpack.c.l.b16 %v1751
        %v1756 = vpack.c.b16 %v1755, %v1754
        %v1759 = vsel %vm521, %v1749, 0
        %1761 = vmatprep.subr.bf16.mxu0 0
        %1762 = vmatpush1.bf16.msra.mxu0 0
        %1763 = vmatprep.subr.bf16.mxu0 0
        %1764 = vmatpush1.bf16.msra.mxu0 0
        %1765 = vmatprep.subr.bf16.mxu0 0
        %1766 = vmatpush1.bf16.msra.mxu0 0
        %1767 = vmatprep.subr.bf16.mxu0 0
        %1768 = vmatpush1.bf16.msra.mxu0 0
        %1769 = vmatprep.subr.bf16.mxu0 0
        %1770 = vmatpush1.bf16.msra.mxu0 0
        %1771 = vmatprep.subr.bf16.mxu0 0
        %1772 = vmatpush1.bf16.msra.mxu0 0
        %1773 = vmatprep.subr.bf16.mxu0 0
        %1774 = vmatpush1.bf16.msra.mxu0 0
        %1775 = vmatprep.subr.bf16.mxu0 0
        %1776 = vmatpush1.bf16.msra.mxu0 %v1756
        %1777 = vmatprep.subr.bf16.mxu0 0
        %1778 = vmatpush2.bf16.msra.mxu0 0
        %1779 = vmatprep.subr.bf16.mxu0 0
        %1780 = vmatpush2.bf16.msra.mxu0 0
        %1781 = vmatprep.subr.bf16.mxu0 0
        %1782 = vmatpush2.bf16.msra.mxu0 0
        %1783 = vmatprep.subr.bf16.mxu0 0
        %1784 = vmatpush2.bf16.msra.mxu0 0
        %1785 = vmatprep.subr.bf16.mxu0 0
        %1786 = vmatpush2.bf16.msra.mxu0 0
        %1787 = vmatprep.subr.bf16.mxu0 0
        %1788 = vmatpush2.bf16.msra.mxu0 0
        %1789 = vmatprep.subr.bf16.mxu0 0
        %1790 = vmatpush2.bf16.msra.mxu0 0
        %1791 = vmatprep.subr.bf16.mxu0 0
        %1792 = vmatpush2.bf16.msra.mxu0 0
        %1793 = vmatprep.mubr.bf16.mxu0 0
        %1794 = vmatmul.mubr.bf16.gmra.mxu0 %v1759
        %v1795 = vpop.f32.mrf.mxu0
        %v1796 = vadd.f32 0.0, %v1795
        %v1797 = vpop.f32.mrf.mxu0
        %v1798 = vpop.f32.mrf.mxu0
        %v1799 = vpop.f32.mrf.mxu0
        %1800 = vdwg.mxu0
        %v1803 = vunpack.c.l.b16 %v1636
        %v1804 = vunpack.c.l.b16 %v1637
        %v1805 = vpack.c.b16 %v1804, %v1803
        %v1808 = vsel %vm521, %v1634, 0
        %1810 = vmatprep.subr.bf16.mxu0 0
        %1811 = vmatpush1.bf16.msra.mxu0 0
        %1812 = vmatprep.subr.bf16.mxu0 0
        %1813 = vmatpush1.bf16.msra.mxu0 0
        %1814 = vmatprep.subr.bf16.mxu0 0
        %1815 = vmatpush1.bf16.msra.mxu0 0
        %1816 = vmatprep.subr.bf16.mxu0 0
        %1817 = vmatpush1.bf16.msra.mxu0 0
        %1818 = vmatprep.subr.bf16.mxu0 0
        %1819 = vmatpush1.bf16.msra.mxu0 0
        %1820 = vmatprep.subr.bf16.mxu0 0
        %1821 = vmatpush1.bf16.msra.mxu0 0
        %1822 = vmatprep.subr.bf16.mxu0 0
        %1823 = vmatpush1.bf16.msra.mxu0 0
        %1824 = vmatprep.subr.bf16.mxu0 0
        %1825 = vmatpush1.bf16.msra.mxu0 %v1805
        %1826 = vmatprep.subr.bf16.mxu0 0
        %1827 = vmatpush2.bf16.msra.mxu0 0
        %1828 = vmatprep.subr.bf16.mxu0 0
        %1829 = vmatpush2.bf16.msra.mxu0 0
        %1830 = vmatprep.subr.bf16.mxu0 0
        %1831 = vmatpush2.bf16.msra.mxu0 0
        %1832 = vmatprep.subr.bf16.mxu0 0
        %1833 = vmatpush2.bf16.msra.mxu0 0
        %1834 = vmatprep.subr.bf16.mxu0 0
        %1835 = vmatpush2.bf16.msra.mxu0 0
        %1836 = vmatprep.subr.bf16.mxu0 0
        %1837 = vmatpush2.bf16.msra.mxu0 0
        %1838 = vmatprep.subr.bf16.mxu0 0
        %1839 = vmatpush2.bf16.msra.mxu0 0
        %1840 = vmatprep.subr.bf16.mxu0 0
        %1841 = vmatpush2.bf16.msra.mxu0 0
        %1842 = vmatprep.mubr.bf16.mxu0 0
        %1843 = vmatmul.mubr.bf16.gmra.mxu0 %v1808
        %v1844 = vpop.f32.mrf.mxu0
        %v1845 = vadd.f32 %v1796, %v1844
        %v1846 = vpop.f32.mrf.mxu0
        %v1847 = vpop.f32.mrf.mxu0
        %v1848 = vpop.f32.mrf.mxu0
        %1849 = vdwg.mxu0
        %1850 = vrot.lane.b32.xlu0 %v1525, 96
        %v1851 = vpop.permute.xlu0 %1850
        %1852 = vrot.lane.b32.xlu0 %v1525, 32
        %v1853 = vpop.permute.xlu0 %1852
        %v1855 = vsel %vm521, %v1851, 0
        %v1858 = vsel %vm521, %v1853, 0
        %1860 = vmatprep.subr.bf16.mxu0 0
        %1861 = vmatpush1.bf16.xpose.msra.mxu0 0
        %1862 = vmatprep.subr.bf16.mxu0 0
        %1863 = vmatpush1.bf16.xpose.msra.mxu0 0
        %1864 = vmatprep.subr.bf16.mxu0 0
        %1865 = vmatpush1.bf16.xpose.msra.mxu0 0
        %1866 = vmatprep.subr.bf16.mxu0 0
        %1867 = vmatpush1.bf16.xpose.msra.mxu0 0
        %1868 = vmatprep.subr.bf16.mxu0 0
        %1869 = vmatpush1.bf16.xpose.msra.mxu0 0
        %1870 = vmatprep.subr.bf16.mxu0 0
        %1871 = vmatpush1.bf16.xpose.msra.mxu0 0
        %1872 = vmatprep.subr.bf16.mxu0 0
        %1873 = vmatpush1.bf16.xpose.msra.mxu0 0
        %1874 = vmatprep.subr.bf16.mxu0 0
        %1875 = vmatpush1.bf16.xpose.msra.mxu0 %v1858
        %1876 = vmatprep.subr.bf16.mxu0 0
        %1877 = vmatpush2.bf16.xpose.msra.mxu0 0
        %1878 = vmatprep.subr.bf16.mxu0 0
        %1879 = vmatpush2.bf16.xpose.msra.mxu0 0
        %1880 = vmatprep.subr.bf16.mxu0 0
        %1881 = vmatpush2.bf16.xpose.msra.mxu0 0
        %1882 = vmatprep.subr.bf16.mxu0 0
        %1883 = vmatpush2.bf16.xpose.msra.mxu0 0
        %1884 = vmatprep.subr.bf16.mxu0 0
        %1885 = vmatpush2.bf16.xpose.msra.mxu0 0
        %1886 = vmatprep.subr.bf16.mxu0 0
        %1887 = vmatpush2.bf16.xpose.msra.mxu0 0
        %1888 = vmatprep.subr.bf16.mxu0 0
        %1889 = vmatpush2.bf16.xpose.msra.mxu0 0
        %1890 = vmatprep.subr.bf16.mxu0 0
        %1891 = vmatpush2.bf16.xpose.msra.mxu0 0
        %1892 = vmatprep.mubr.bf16.mxu0 0
        %1893 = vmatmul.mubr.bf16.gmra.mxu0 %v1855
        %v1894 = vpop.f32.mrf.mxu0
        %v1895 = vadd.f32 %v516, %v1894
        %v1896 = vpop.f32.mrf.mxu0
        %v1897 = vpop.f32.mrf.mxu0
        %v1898 = vpop.f32.mrf.mxu0
        %1899 = vdwg.mxu0
        %v1900 = vsel %vm568, %v1895, -inf
        %1901 = vmax.xlane.f32.xlu0 %v1900
        %v1902 = vpop.xlane.xlu0 %1901
        %v1903 = vsub.f32 %v1895, %v1902
        %v1904 = vmul.f32 %v1903, 1.442695
        %v1905 = vpow.pop %v1904
        %v1906 = vsel %vm568, %v1905, 0.0
        %1907 = vadd.xlane.f32.xlu0 %v1906
        %v1908 = vpop.xlane.xlu0 %1907
        %v1909 = vrcp.pop %v1908
        %v1910 = vmul.f32 %v1905, %v1909
        %v1911 = vpack.c.bf16 %v1910, %v1910
        %1912 = vrot.lane.b32.xlu0 %v1526, 96
        %v1913 = vpop.permute.xlu0 %1912
        %v1915 = vsel %vm568, %v1911, 0
        %v1918 = vsel %vm584, %v1913, 0
        %1920 = vmatprep.subr.bf16.mxu0 0
        %1921 = vmatpush1.bf16.msra.mxu0 0
        %1922 = vmatprep.subr.bf16.mxu0 0
        %1923 = vmatpush1.bf16.msra.mxu0 0
        %1924 = vmatprep.subr.bf16.mxu0 0
        %1925 = vmatpush1.bf16.msra.mxu0 0
        %1926 = vmatprep.subr.bf16.mxu0 0
        %1927 = vmatpush1.bf16.msra.mxu0 0
        %1928 = vmatprep.subr.bf16.mxu0 0
        %1929 = vmatpush1.bf16.msra.mxu0 0
        %1930 = vmatprep.subr.bf16.mxu0 0
        %1931 = vmatpush1.bf16.msra.mxu0 0
        %1932 = vmatprep.subr.bf16.mxu0 0
        %1933 = vmatpush1.bf16.msra.mxu0 0
        %1934 = vmatprep.subr.bf16.mxu0 0
        %1935 = vmatpush1.bf16.msra.mxu0 %v1918
        %1936 = vmatprep.subr.bf16.mxu0 0
        %1937 = vmatpush2.bf16.msra.mxu0 0
        %1938 = vmatprep.subr.bf16.mxu0 0
        %1939 = vmatpush2.bf16.msra.mxu0 0
        %1940 = vmatprep.subr.bf16.mxu0 0
        %1941 = vmatpush2.bf16.msra.mxu0 0
        %1942 = vmatprep.subr.bf16.mxu0 0
        %1943 = vmatpush2.bf16.msra.mxu0 0
        %1944 = vmatprep.subr.bf16.mxu0 0
        %1945 = vmatpush2.bf16.msra.mxu0 0
        %1946 = vmatprep.subr.bf16.mxu0 0
        %1947 = vmatpush2.bf16.msra.mxu0 0
        %1948 = vmatprep.subr.bf16.mxu0 0
        %1949 = vmatpush2.bf16.msra.mxu0 0
        %1950 = vmatprep.subr.bf16.mxu0 0
        %1951 = vmatpush2.bf16.msra.mxu0 0
        %1952 = vmatprep.mubr.bf16.mxu0 0
        %1953 = vmatmul.mubr.bf16.gmra.mxu0 %v1915
        %v1954 = vpop.f32.mrf.mxu0
        %v1955 = vadd.f32 0.0, %v1954
        %v1956 = vpop.f32.mrf.mxu0
        %v1957 = vpop.f32.mrf.mxu0
        %v1958 = vpop.f32.mrf.mxu0
        %1959 = vdwg.mxu0
        %v1960 = vpack.c.bf16 %v1955, %v1955
        %v1961 = vld [vmem:[%s1635 + $0x10] sm:$0xf]
        %v1962 = vld [vmem:[%s1635 + $0x14] sm:$0xf]
        %v1965 = vunpack.c.l.b16 %v1961
        %v1966 = vunpack.c.l.b16 %v1962
        %v1967 = vpack.c.b16 %v1966, %v1965
        %v1970 = vsel %vm521, %v1960, 0
        %1972 = vmatprep.subr.bf16.mxu0 0
        %1973 = vmatpush1.bf16.msra.mxu0 0
        %1974 = vmatprep.subr.bf16.mxu0 0
        %1975 = vmatpush1.bf16.msra.mxu0 0
        %1976 = vmatprep.subr.bf16.mxu0 0
        %1977 = vmatpush1.bf16.msra.mxu0 0
        %1978 = vmatprep.subr.bf16.mxu0 0
        %1979 = vmatpush1.bf16.msra.mxu0 0
        %1980 = vmatprep.subr.bf16.mxu0 0
        %1981 = vmatpush1.bf16.msra.mxu0 0
        %1982 = vmatprep.subr.bf16.mxu0 0
        %1983 = vmatpush1.bf16.msra.mxu0 0
        %1984 = vmatprep.subr.bf16.mxu0 0
        %1985 = vmatpush1.bf16.msra.mxu0 0
        %1986 = vmatprep.subr.bf16.mxu0 0
        %1987 = vmatpush1.bf16.msra.mxu0 %v1967
        %1988 = vmatprep.subr.bf16.mxu0 0
        %1989 = vmatpush2.bf16.msra.mxu0 0
        %1990 = vmatprep.subr.bf16.mxu0 0
        %1991 = vmatpush2.bf16.msra.mxu0 0
        %1992 = vmatprep.subr.bf16.mxu0 0
        %1993 = vmatpush2.bf16.msra.mxu0 0
        %1994 = vmatprep.subr.bf16.mxu0 0
        %1995 = vmatpush2.bf16.msra.mxu0 0
        %1996 = vmatprep.subr.bf16.mxu0 0
        %1997 = vmatpush2.bf16.msra.mxu0 0
        %1998 = vmatprep.subr.bf16.mxu0 0
        %1999 = vmatpush2.bf16.msra.mxu0 0
        %2000 = vmatprep.subr.bf16.mxu0 0
        %2001 = vmatpush2.bf16.msra.mxu0 0
        %2002 = vmatprep.subr.bf16.mxu0 0
        %2003 = vmatpush2.bf16.msra.mxu0 0
        %2004 = vmatprep.mubr.bf16.mxu0 0
        %2005 = vmatmul.mubr.bf16.gmra.mxu0 %v1970
        %v2006 = vpop.f32.mrf.mxu0
        %v2007 = vadd.f32 0.0, %v2006
        %v2008 = vpop.f32.mrf.mxu0
        %v2009 = vpop.f32.mrf.mxu0
        %v2010 = vpop.f32.mrf.mxu0
        %2011 = vdwg.mxu0
        %v2012 = vadd.f32 %v1845, %v2007
        %2013 = vrot.lane.b32.xlu0 %v1525, 80
        %v2014 = vpop.permute.xlu0 %2013
        %2015 = vrot.lane.b32.xlu0 %v1525, 16
        %v2016 = vpop.permute.xlu0 %2015
        %v2018 = vsel %vm521, %v2014, 0
        %v2021 = vsel %vm521, %v2016, 0
        %2023 = vmatprep.subr.bf16.mxu0 0
        %2024 = vmatpush1.bf16.xpose.msra.mxu0 0
        %2025 = vmatprep.subr.bf16.mxu0 0
        %2026 = vmatpush1.bf16.xpose.msra.mxu0 0
        %2027 = vmatprep.subr.bf16.mxu0 0
        %2028 = vmatpush1.bf16.xpose.msra.mxu0 0
        %2029 = vmatprep.subr.bf16.mxu0 0
        %2030 = vmatpush1.bf16.xpose.msra.mxu0 0
        %2031 = vmatprep.subr.bf16.mxu0 0
        %2032 = vmatpush1.bf16.xpose.msra.mxu0 0
        %2033 = vmatprep.subr.bf16.mxu0 0
        %2034 = vmatpush1.bf16.xpose.msra.mxu0 0
        %2035 = vmatprep.subr.bf16.mxu0 0
        %2036 = vmatpush1.bf16.xpose.msra.mxu0 0
        %2037 = vmatprep.subr.bf16.mxu0 0
        %2038 = vmatpush1.bf16.xpose.msra.mxu0 %v2021
        %2039 = vmatprep.subr.bf16.mxu0 0
        %2040 = vmatpush2.bf16.xpose.msra.mxu0 0
        %2041 = vmatprep.subr.bf16.mxu0 0
        %2042 = vmatpush2.bf16.xpose.msra.mxu0 0
        %2043 = vmatprep.subr.bf16.mxu0 0
        %2044 = vmatpush2.bf16.xpose.msra.mxu0 0
        %2045 = vmatprep.subr.bf16.mxu0 0
        %2046 = vmatpush2.bf16.xpose.msra.mxu0 0
        %2047 = vmatprep.subr.bf16.mxu0 0
        %2048 = vmatpush2.bf16.xpose.msra.mxu0 0
        %2049 = vmatprep.subr.bf16.mxu0 0
        %2050 = vmatpush2.bf16.xpose.msra.mxu0 0
        %2051 = vmatprep.subr.bf16.mxu0 0
        %2052 = vmatpush2.bf16.xpose.msra.mxu0 0
        %2053 = vmatprep.subr.bf16.mxu0 0
        %2054 = vmatpush2.bf16.xpose.msra.mxu0 0
        %2055 = vmatprep.mubr.bf16.mxu0 0
        %2056 = vmatmul.mubr.bf16.gmra.mxu0 %v2018
        %v2057 = vpop.f32.mrf.mxu0
        %v2058 = vadd.f32 %v516, %v2057
        %v2059 = vpop.f32.mrf.mxu0
        %v2060 = vpop.f32.mrf.mxu0
        %v2061 = vpop.f32.mrf.mxu0
        %2062 = vdwg.mxu0
        %v2063 = vsel %vm568, %v2058, -inf
        %2064 = vmax.xlane.f32.xlu0 %v2063
        %v2065 = vpop.xlane.xlu0 %2064
        %v2066 = vsub.f32 %v2058, %v2065
        %v2067 = vmul.f32 %v2066, 1.442695
        %v2068 = vpow.pop %v2067
        %v2069 = vsel %vm568, %v2068, 0.0
        %2070 = vadd.xlane.f32.xlu0 %v2069
        %v2071 = vpop.xlane.xlu0 %2070
        %v2072 = vrcp.pop %v2071
        %v2073 = vmul.f32 %v2068, %v2072
        %v2074 = vpack.c.bf16 %v2073, %v2073
        %2075 = vrot.lane.b32.xlu0 %v1526, 80
        %v2076 = vpop.permute.xlu0 %2075
        %v2078 = vsel %vm568, %v2074, 0
        %v2081 = vsel %vm584, %v2076, 0
        %2083 = vmatprep.subr.bf16.mxu0 0
        %2084 = vmatpush1.bf16.msra.mxu0 0
        %2085 = vmatprep.subr.bf16.mxu0 0
        %2086 = vmatpush1.bf16.msra.mxu0 0
        %2087 = vmatprep.subr.bf16.mxu0 0
        %2088 = vmatpush1.bf16.msra.mxu0 0
        %2089 = vmatprep.subr.bf16.mxu0 0
        %2090 = vmatpush1.bf16.msra.mxu0 0
        %2091 = vmatprep.subr.bf16.mxu0 0
        %2092 = vmatpush1.bf16.msra.mxu0 0
        %2093 = vmatprep.subr.bf16.mxu0 0
        %2094 = vmatpush1.bf16.msra.mxu0 0
        %2095 = vmatprep.subr.bf16.mxu0 0
        %2096 = vmatpush1.bf16.msra.mxu0 0
        %2097 = vmatprep.subr.bf16.mxu0 0
        %2098 = vmatpush1.bf16.msra.mxu0 %v2081
        %2099 = vmatprep.subr.bf16.mxu0 0
        %2100 = vmatpush2.bf16.msra.mxu0 0
        %2101 = vmatprep.subr.bf16.mxu0 0
        %2102 = vmatpush2.bf16.msra.mxu0 0
        %2103 = vmatprep.subr.bf16.mxu0 0
        %2104 = vmatpush2.bf16.msra.mxu0 0
        %2105 = vmatprep.subr.bf16.mxu0 0
        %2106 = vmatpush2.bf16.msra.mxu0 0
        %2107 = vmatprep.subr.bf16.mxu0 0
        %2108 = vmatpush2.bf16.msra.mxu0 0
        %2109 = vmatprep.subr.bf16.mxu0 0
        %2110 = vmatpush2.bf16.msra.mxu0 0
        %2111 = vmatprep.subr.bf16.mxu0 0
        %2112 = vmatpush2.bf16.msra.mxu0 0
        %2113 = vmatprep.subr.bf16.mxu0 0
        %2114 = vmatpush2.bf16.msra.mxu0 0
        %2115 = vmatprep.mubr.bf16.mxu0 0
        %2116 = vmatmul.mubr.bf16.gmra.mxu0 %v2078
        %v2117 = vpop.f32.mrf.mxu0
        %v2118 = vadd.f32 0.0, %v2117
        %v2119 = vpop.f32.mrf.mxu0
        %v2120 = vpop.f32.mrf.mxu0
        %v2121 = vpop.f32.mrf.mxu0
        %2122 = vdwg.mxu0
        %v2123 = vpack.c.bf16 %v2118, %v2118
        %v2124 = vld [vmem:[%s1635 + $0x18] sm:$0xf]
        %v2125 = vld [vmem:[%s1635 + $0x1c] sm:$0xf]
        %v2128 = vunpack.c.l.b16 %v2124
        %v2129 = vunpack.c.l.b16 %v2125
        %v2130 = vpack.c.b16 %v2129, %v2128
        %v2133 = vsel %vm521, %v2123, 0
        %2135 = vmatprep.subr.bf16.mxu0 0
        %2136 = vmatpush1.bf16.msra.mxu0 0
        %2137 = vmatprep.subr.bf16.mxu0 0
        %2138 = vmatpush1.bf16.msra.mxu0 0
        %2139 = vmatprep.subr.bf16.mxu0 0
        %2140 = vmatpush1.bf16.msra.mxu0 0
        %2141 = vmatprep.subr.bf16.mxu0 0
        %2142 = vmatpush1.bf16.msra.mxu0 0
        %2143 = vmatprep.subr.bf16.mxu0 0
        %2144 = vmatpush1.bf16.msra.mxu0 0
        %2145 = vmatprep.subr.bf16.mxu0 0
        %2146 = vmatpush1.bf16.msra.mxu0 0
        %2147 = vmatprep.subr.bf16.mxu0 0
        %2148 = vmatpush1.bf16.msra.mxu0 0
        %2149 = vmatprep.subr.bf16.mxu0 0
        %2150 = vmatpush1.bf16.msra.mxu0 %v2130
        %2151 = vmatprep.subr.bf16.mxu0 0
        %2152 = vmatpush2.bf16.msra.mxu0 0
        %2153 = vmatprep.subr.bf16.mxu0 0
        %2154 = vmatpush2.bf16.msra.mxu0 0
        %2155 = vmatprep.subr.bf16.mxu0 0
        %2156 = vmatpush2.bf16.msra.mxu0 0
        %2157 = vmatprep.subr.bf16.mxu0 0
        %2158 = vmatpush2.bf16.msra.mxu0 0
        %2159 = vmatprep.subr.bf16.mxu0 0
        %2160 = vmatpush2.bf16.msra.mxu0 0
        %2161 = vmatprep.subr.bf16.mxu0 0
        %2162 = vmatpush2.bf16.msra.mxu0 0
        %2163 = vmatprep.subr.bf16.mxu0 0
        %2164 = vmatpush2.bf16.msra.mxu0 0
        %2165 = vmatprep.subr.bf16.mxu0 0
        %2166 = vmatpush2.bf16.msra.mxu0 0
        %2167 = vmatprep.mubr.bf16.mxu0 0
        %2168 = vmatmul.mubr.bf16.gmra.mxu0 %v2133
        %v2169 = vpop.f32.mrf.mxu0
        %v2170 = vadd.f32 0.0, %v2169
        %v2171 = vpop.f32.mrf.mxu0
        %v2172 = vpop.f32.mrf.mxu0
        %v2173 = vpop.f32.mrf.mxu0
        %2174 = vdwg.mxu0
        %v2175 = vadd.f32 %v2012, %v2170
        %v2176 = vadd.f32 %v1419, %v2175
        %v2177 = vlaneseq
        %v2178 = vshrl.u32 %v2177, 7
        %v2179 = vsub.s32 1, %v2178
        %v2180 = vrot.slane %v1421, %v2179
        %v2181 = vadd.f32 %v2176, %v2180
        %v2182 = vsel %vm382, %v2181, 0.0
        %2183 = vadd.xlane.f32.xlu0 %v2182
        %v2184 = vpop.xlane.xlu0 %2183
        %v2185 = vmul.f32 %v2184, %v386
        %v2186 = vsub.f32 %v2181, %v2185
        %v2187 = vmul.f32 %v2186, %v2186
        %v2188 = vsel %vm382, %v2187, 0.0
        %2189 = vadd.xlane.f32.xlu0 %v2188
        %v2190 = vpop.xlane.xlu0 %2189
        %v2191 = vmul.f32 %v2190, %v386
        %v2192 = vadd.f32 %v2191, 1e-12
        %v2193 = vrsqrt.pop %v2192
        %v2194 = vmul.f32 %v2186, %v2193
        %v2195 = vlaneseq
        %v2196 = vshrl.u32 %v2195, 7
        %v2197 = vsub.s32 2, %v2196
        %v2198 = vrot.slane %v1421, %v2197
        %v2199 = vmul.f32 %v2194, %v2198
        %v2200 = vlaneseq
        %v2201 = vshrl.u32 %v2200, 7
        %v2202 = vsub.s32 3, %v2201
        %v2203 = vrot.slane %v1421, %v2202
        %v2204 = vadd.f32 %v2199, %v2203
        %v2205 = vpack.c.bf16 %v2204, %v2204
        %s2206 = scalar_lea.vmem [#allocation7], 32
        %v2207 = vld [vmem:[%s2206] sm:$0xf]
        %v2208 = vld [vmem:[%s2206 + $0x4] sm:$0xf]
        %v2209 = vld [vmem:[%s2206 + $0x8] sm:$0xf]
        %v2210 = vld [vmem:[%s2206 + $0xc] sm:$0xf]
        %v2211 = vld [vmem:[%s2206 + $0x10] sm:$0xf]
        %v2212 = vld [vmem:[%s2206 + $0x14] sm:$0xf]
        %v2213 = vld [vmem:[%s2206 + $0x18] sm:$0xf]
        %v2214 = vld [vmem:[%s2206 + $0x1c] sm:$0xf]
        %v2215 = vlaneseq
        %v2216 = vshrl.u32 %v2215, 7
        %v2217 = vsub.s32 4, %v2216
        %v2218 = vrot.slane %v1421, %v2217
        %v2227 = vunpack.c.l.b16 %v2207
        %v2228 = vunpack.c.l.b16 %v2208
        %v2229 = vunpack.c.l.b16 %v2209
        %v2230 = vunpack.c.l.b16 %v2210
        %v2231 = vunpack.c.l.b16 %v2211
        %v2232 = vunpack.c.l.b16 %v2212
        %v2233 = vunpack.c.l.b16 %v2213
        %v2234 = vunpack.c.l.b16 %v2214
        %v2235 = vpack.c.b16 %v2228, %v2227
        %v2236 = vpack.c.b16 %v2230, %v2229
        %v2237 = vpack.c.b16 %v2232, %v2231
        %v2238 = vpack.c.b16 %v2234, %v2233
        %v2244 = vsel %vm382, %v2205, 0
        %2246 = vmatprep.subr.bf16.mxu0 0
        %2247 = vmatpush1.bf16.msra.mxu0 0
        %2248 = vmatprep.subr.bf16.mxu0 0
        %2249 = vmatpush1.bf16.msra.mxu0 0
        %2250 = vmatprep.subr.bf16.mxu0 0
        %2251 = vmatpush1.bf16.msra.mxu0 0
        %2252 = vmatprep.subr.bf16.mxu0 0
        %2253 = vmatpush1.bf16.msra.mxu0 0
        %2254 = vmatprep.subr.bf16.mxu0 0
        %2255 = vmatpush1.bf16.msra.mxu0 %v2238
        %2256 = vmatprep.subr.bf16.mxu0 0
        %2257 = vmatpush1.bf16.msra.mxu0 %v2237
        %2258 = vmatprep.subr.bf16.mxu0 0
        %2259 = vmatpush1.bf16.msra.mxu0 %v2236
        %2260 = vmatprep.subr.bf16.mxu0 0
        %2261 = vmatpush1.bf16.msra.mxu0 %v2235
        %2262 = vmatprep.subr.bf16.mxu0 0
        %2263 = vmatpush2.bf16.msra.mxu0 0
        %2264 = vmatprep.subr.bf16.mxu0 0
        %2265 = vmatpush2.bf16.msra.mxu0 0
        %2266 = vmatprep.subr.bf16.mxu0 0
        %2267 = vmatpush2.bf16.msra.mxu0 0
        %2268 = vmatprep.subr.bf16.mxu0 0
        %2269 = vmatpush2.bf16.msra.mxu0 0
        %2270 = vmatprep.subr.bf16.mxu0 0
        %2271 = vmatpush2.bf16.msra.mxu0 0
        %2272 = vmatprep.subr.bf16.mxu0 0
        %2273 = vmatpush2.bf16.msra.mxu0 0
        %2274 = vmatprep.subr.bf16.mxu0 0
        %2275 = vmatpush2.bf16.msra.mxu0 0
        %2276 = vmatprep.subr.bf16.mxu0 0
        %2277 = vmatpush2.bf16.msra.mxu0 0
        %2278 = vmatprep.mubr.bf16.mxu0 0
        %2279 = vmatmul.mubr.bf16.gmra.mxu0 %v2244
        %v2280 = vpop.f32.mrf.mxu0
        %v2281 = vadd.f32 %v2218, %v2280
        %v2282 = vpop.f32.mrf.mxu0
        %v2283 = vpop.f32.mrf.mxu0
        %v2284 = vpop.f32.mrf.mxu0
        %2285 = vdwg.mxu0
        %v2286 = vmul.f32 %v2281, 0.5
        %v2287 = vmul.f32 %v2281, 0.044715
        %v2288 = vmul.f32 %v2287, %v2281
        %v2289 = vmul.f32 %v2288, %v2281
        %v2290 = vadd.f32 %v2281, %v2289
        %v2291 = vmul.f32 %v2290, 0.7978846
        %v2292 = vtanh.pop %v2291
        %v2293 = vadd.f32 %v2292, 1.0
        %v2294 = vmul.f32 %v2286, %v2293
        %v2295 = vpack.c.bf16 %v2294, %v2294
        %s2296 = scalar_lea.vmem %s6, 64
        %v2297 = vld [vmem:[%s2296] sm:$0xf]
        %v2298 = vld [vmem:[%s2296 + $0x4] sm:$0xf]
        %v2299 = vld [vmem:[%s2296 + $0x8] sm:$0xf]
        %v2300 = vld [vmem:[%s2296 + $0xc] sm:$0xf]
        %v2301 = vld [vmem:[%s2296 + $0x10] sm:$0xf]
        %v2302 = vld [vmem:[%s2296 + $0x14] sm:$0xf]
        %v2303 = vld [vmem:[%s2296 + $0x18] sm:$0xf]
        %v2304 = vld [vmem:[%s2296 + $0x1c] sm:$0xf]
        %v2305 = vld [vmem:[%s2296 + $0x20] sm:$0xf]
        %v2306 = vld [vmem:[%s2296 + $0x24] sm:$0xf]
        %v2307 = vld [vmem:[%s2296 + $0x28] sm:$0xf]
        %v2308 = vld [vmem:[%s2296 + $0x2c] sm:$0xf]
        %v2309 = vld [vmem:[%s2296 + $0x30] sm:$0xf]
        %v2310 = vld [vmem:[%s2296 + $0x34] sm:$0xf]
        %v2311 = vld [vmem:[%s2296 + $0x38] sm:$0xf]
        %v2312 = vld [vmem:[%s2296 + $0x3c] sm:$0xf]
        %v2313 = vlaneseq
        %v2314 = vshrl.u32 %v2313, 7
        %v2315 = vsub.s32 5, %v2314
        %v2316 = vrot.slane %v1421, %v2315
        %v2333 = vunpack.c.l.b16 %v2297
        %v2334 = vunpack.c.l.b16 %v2298
        %v2335 = vunpack.c.l.b16 %v2299
        %v2336 = vunpack.c.l.b16 %v2300
        %v2337 = vunpack.c.l.b16 %v2301
        %v2338 = vunpack.c.l.b16 %v2302
        %v2339 = vunpack.c.l.b16 %v2303
        %v2340 = vunpack.c.l.b16 %v2304
        %v2341 = vunpack.c.l.b16 %v2305
        %v2342 = vunpack.c.l.b16 %v2306
        %v2343 = vunpack.c.l.b16 %v2307
        %v2344 = vunpack.c.l.b16 %v2308
        %v2345 = vunpack.c.l.b16 %v2309
        %v2346 = vunpack.c.l.b16 %v2310
        %v2347 = vunpack.c.l.b16 %v2311
        %v2348 = vunpack.c.l.b16 %v2312
        %v2349 = vpack.c.b16 %v2334, %v2333
        %v2350 = vpack.c.b16 %v2336, %v2335
        %v2351 = vpack.c.b16 %v2338, %v2337
        %v2352 = vpack.c.b16 %v2340, %v2339
        %v2353 = vpack.c.b16 %v2342, %v2341
        %v2354 = vpack.c.b16 %v2344, %v2343
        %v2355 = vpack.c.b16 %v2346, %v2345
        %v2356 = vpack.c.b16 %v2348, %v2347
        %2365 = vmatprep.subr.bf16.mxu0 0
        %2366 = vmatpush1.bf16.msra.mxu0 %v2356
        %2367 = vmatprep.subr.bf16.mxu0 0
        %2368 = vmatpush1.bf16.msra.mxu0 %v2355
        %2369 = vmatprep.subr.bf16.mxu0 0
        %2370 = vmatpush1.bf16.msra.mxu0 %v2354
        %2371 = vmatprep.subr.bf16.mxu0 0
        %2372 = vmatpush1.bf16.msra.mxu0 %v2353
        %2373 = vmatprep.subr.bf16.mxu0 0
        %2374 = vmatpush1.bf16.msra.mxu0 %v2352
        %2375 = vmatprep.subr.bf16.mxu0 0
        %2376 = vmatpush1.bf16.msra.mxu0 %v2351
        %2377 = vmatprep.subr.bf16.mxu0 0
        %2378 = vmatpush1.bf16.msra.mxu0 %v2350
        %2379 = vmatprep.subr.bf16.mxu0 0
        %2380 = vmatpush1.bf16.msra.mxu0 %v2349
        %2381 = vmatprep.subr.bf16.mxu0 0
        %2382 = vmatpush2.bf16.msra.mxu0 0
        %2383 = vmatprep.subr.bf16.mxu0 0
        %2384 = vmatpush2.bf16.msra.mxu0 0
        %2385 = vmatprep.subr.bf16.mxu0 0
        %2386 = vmatpush2.bf16.msra.mxu0 0
        %2387 = vmatprep.subr.bf16.mxu0 0
        %2388 = vmatpush2.bf16.msra.mxu0 0
        %2389 = vmatprep.subr.bf16.mxu0 0
        %2390 = vmatpush2.bf16.msra.mxu0 0
        %2391 = vmatprep.subr.bf16.mxu0 0
        %2392 = vmatpush2.bf16.msra.mxu0 0
        %2393 = vmatprep.subr.bf16.mxu0 0
        %2394 = vmatpush2.bf16.msra.mxu0 0
        %2395 = vmatprep.subr.bf16.mxu0 0
        %2396 = vmatpush2.bf16.msra.mxu0 0
        %2397 = vmatprep.mubr.bf16.mxu0 0
        %2398 = vmatmul.mubr.bf16.gmra.mxu0 %v2295
        %v2399 = vpop.f32.mrf.mxu0
        %v2400 = vadd.f32 %v2316, %v2399
        %v2401 = vpop.f32.mrf.mxu0
        %v2402 = vpop.f32.mrf.mxu0
        %v2403 = vpop.f32.mrf.mxu0
        %2404 = vdwg.mxu0
        %v2405 = vadd.f32 %v2204, %v2400
        %v2406 = vsel %vm382, %v2405, 0.0
        %2407 = vadd.xlane.f32.xlu0 %v2406
        %v2408 = vpop.xlane.xlu0 %2407
        %v2409 = vmul.f32 %v2408, %v386
        %v2410 = vsub.f32 %v2405, %v2409
        %v2411 = vmul.f32 %v2410, %v2410
        %v2412 = vsel %vm382, %v2411, 0.0
        %2413 = vadd.xlane.f32.xlu0 %v2412
        %v2414 = vpop.xlane.xlu0 %2413
        %v2415 = vmul.f32 %v2414, %v386
        %v2416 = vadd.f32 %v2415, 1e-12
        %v2417 = vrsqrt.pop %v2416
        %v2418 = vmul.f32 %v2410, %v2417
        %v2419 = vlaneseq
        %v2420 = vshrl.u32 %v2419, 7
        %v2421 = vsub.s32 6, %v2420
        %v2422 = vrot.slane %v1421, %v2421
        %v2423 = vmul.f32 %v2418, %v2422
        %v2424 = vlaneseq
        %v2425 = vshrl.u32 %v2424, 7
        %v2426 = vsub.s32 7, %v2425
        %v2427 = vrot.slane %v1421, %v2426
        %v2428 = vadd.f32 %v2423, %v2427
        %2429 = vst.msk [vmem:[%s373] sm:$0xff] %vm382, %v2428
        %s2430 = sand.u32 %s213, 1
        %s2431 = scalar_lea.sflag [#allocation4], %s2430
        %s2432 = sand.u32 %s213, 1
        %s2433 = smul.addr %s2432, 8
        %s2434 = scalar_lea.vmem [#allocation10], %s2433
        // Predicated region
        $region69: #{tpu_custom_call.1} parent=51 // pred_check
          %p2435 = pneg %p223
        $region70: #{tpu_custom_call.1} parent=51 // pred_check_branch
          %2437 = sbr.rel (%p2435) target = $region72
        $region71: #{tpu_custom_call.1} parent=51 // pred_region
          %s2439 = ssub.s32 128, 128
          %2440 = vsyncadd %s2431, %s2439
          %s2441 = smul.addr %s27, 128
          %s2442 = scalar_lea.hbm %s8, %s2441
          %s2444 = sshll.u32 %s2434, 4
          %s2445 = int_to_ptr.vmem [resolvable:$true] %s2444
          %2447 = dma.vmem_to_hbm [thread:$0]  %s2445, 128, %s2442, %s2431
        $region72: #{tpu_custom_call.1} parent=51 // pred_fallthru
          _
      $region52: #{tpu_custom_call.1} parent=5 // pred_fallthru
        _
      %p2448 = scmp.le.s32.totalorder 2, %s22
      // Predicated region
      $region73: #{tpu_custom_call.1} parent=5 // pred_check
        %p2449 = pneg %p2448
      $region74: #{tpu_custom_call.1} parent=5 // pred_check_branch
        %2451 = sbr.rel (%p2449) target = $region76
      $region75: #{tpu_custom_call.1} parent=5 // pred_region
        %s2452 = ssub.s32 %s22, 2
        // Predicated region
        $region77: #{tpu_custom_call.1} parent=75 // pred_check
          %p2453 = pneg %p229
        $region78: #{tpu_custom_call.1} parent=75 // pred_check_branch
          %2455 = sbr.rel (%p2453) target = $region80
        $region79: #{tpu_custom_call.1} parent=75 // pred_region
          %s2456 = sand.u32 %s214, 1
          %s2457 = scalar_lea.sflag [#allocation4], %s2456
          %s2458 = sand.u32 %s214, 1
          %s2459 = smul.addr %s2458, 8
          %s2460 = scalar_lea.vmem [#allocation10], %s2459
          %2461 = dma.done %s2457, 128
        $region80: #{tpu_custom_call.1} parent=75 // pred_fallthru
          _
      $region76: #{tpu_custom_call.1} parent=5 // pred_fallthru
        _
    $region6: #{tpu_custom_call.1} parent=1 // loop_footer
      %s26 = sadd.s32 1, %s22
    $region7: #{tpu_custom_call.1} parent=1 // loop_footer_branch
      %21 = sbr.rel target = $region3
    $region8: #{tpu_custom_call.1} parent=1 // loop_exit
      _
    %2462 = vsyncpa [#allocation3], 1
    %s2463 = scalar_lea.sflag [#allocation3], 1
    %2464 = vsyncpa %s2463, 1
    %2465 = vsyncpa [#allocation6], 1
    %2466 = vsyncpa [#allocation9], 1
    %2467 = vsyncpa [#allocation4], 1
    %s2468 = scalar_lea.sflag [#allocation4], 1
    %2469 = vsyncpa %s2468, 1

</llo_original>
